<compile_context>
chip_gen: v7x
topology: tpu7x:2x2x1
jax: 0.10.0
libtpu: 0.0.40
codegen_flags: <defaults>
</compile_context>

<pallas_src>
import functools

import jax
import jax.numpy as jnp
from jax import lax
from jax.experimental import pallas as pl
from jax.experimental.pallas import tpu as pltpu

# ----------------------------- vocab / constants -----------------------------
ATOM_NAMES_TO_INDEX = {"N": 0, "CA": 1, "C": 2, "O": 3, "CB": 4}
NUM_ATOM_NAMES = len(ATOM_NAMES_TO_INDEX)
RESIDUES_VOCAB = ["A", "R", "N", "D", "C", "Q", "E", "G", "H", "I",
                  "L", "K", "M", "F", "P", "S", "T", "W", "Y", "V", "X"]
VOCAB = len(RESIDUES_VOCAB)   # 21
VPAD = 128                    # lane-padded MLM head width (cols >= VOCAB are zero weights, masked in CE)

SMEM_FULL = pl.BlockSpec(memory_space=pltpu.MemorySpace.SMEM)


# --------------------------------- fused kernel -------------------------------
def _fused_forward_kernel(emb_ref, extra_ref, coords_ref, adj_ref, tgt_ref, qm_ref,
                          featw_ref, featb_ref,
                          wqkv_ref, bqkv_ref, wo_ref, bo_ref,
                          ln1_ref, ln2_ref, w1_ref, b1_ref, w2_ref, b2_ref,
                          lnf_ref, headw_ref, headb_ref, hbias_ref,
                          logits_ref, cesum_ref, *, heads):
    depth, dim, _ = wqkv_ref.shape
    hd = dim // heads
    bt, n = emb_ref.shape[0], emb_ref.shape[1]
    m = bt * n                                 # rows presented to the MXU per grid step
    vpad = headw_ref.shape[1]

    def layer_norm(v, gb):                     # gb: (2, dim) = [gamma; beta], f32 math
        mu = jnp.mean(v, axis=-1, keepdims=True)
        vc = v - mu
        var = jnp.mean(vc * vc, axis=-1, keepdims=True)
        return vc * lax.rsqrt(var + 1e-5) * gb[0:1, :] + gb[1:2, :]

    # embedding + integer-feature projection on all bt*n tokens at once
    x = emb_ref[...].astype(jnp.float32).reshape(m, dim)
    extra = extra_ref[...].reshape(m, extra_ref.shape[2])            # bf16 small-int features
    x = x + jnp.dot(extra, featw_ref[...],
                    preferred_element_type=jnp.float32) + featb_ref[...]

    # ---- layer/head-invariant attention biases, built once per grid step in VMEM ----
    adj = adj_ref[...].astype(jnp.float32)                           # (bt, n, n), exact 0/1
    c = coords_ref[...]                                              # (bt, n, 3) f32
    c2sum = jnp.sum(c * c, axis=-1, keepdims=True)                   # (bt, n, 1)
    ones = jnp.ones_like(c2sum)
    # |xi - xj|^2 via one batched matmul (no transposes): [c,|c|^2,1] @ [-2c,1,|c|^2]^T
    lhs = jnp.concatenate([c, c2sum, ones], axis=-1)                 # (bt, n, 5)
    rhs = jnp.concatenate([-2.0 * c, ones, c2sum], axis=-1)          # (bt, n, 5)
    d2 = jnp.einsum('bqd,bkd->bqk', lhs, rhs, preferred_element_type=jnp.float32)
    dist = jnp.sqrt(jnp.maximum(d2, 0.0))                            # (bt, n, n)

    for l in range(depth):                     # static unroll; all weights VMEM-resident (bf16)
        h = layer_norm(x, ln1_ref[l])
        # fused QKV projection: single (m, dim) @ (dim, 3*dim) bf16 MXU matmul
        qkv = jnp.dot(h.astype(jnp.bfloat16), wqkv_ref[l],
                      preferred_element_type=jnp.float32) + bqkv_ref[l]
        qkv3 = qkv.reshape(bt, n, 3 * dim)
        heads_out = []
        for hh in range(heads):
            # 1/sqrt(hd) scale is pre-folded into the Q columns of wqkv (build time)
            q = qkv3[:, :, hh * hd:(hh + 1) * hd].astype(jnp.bfloat16)
            k = qkv3[:, :, dim + hh * hd:dim + (hh + 1) * hd].astype(jnp.bfloat16)
            v = qkv3[:, :, 2 * dim + hh * hd:2 * dim + (hh + 1) * hd].astype(jnp.bfloat16)
            s = jnp.einsum('bqd,bkd->bqk', q, k, preferred_element_type=jnp.float32)
            w_adj = hbias_ref[(l * heads + hh) * 2]
            w_dist = hbias_ref[(l * heads + hh) * 2 + 1]
            s = s + adj * w_adj - dist * w_dist
            s = s - jnp.max(s, axis=-1, keepdims=True)
            p = jnp.exp(s)
            p = p * pl.reciprocal(jnp.sum(p, axis=-1, keepdims=True), approx=False)
            heads_out.append(jnp.einsum('bqk,bkd->bqd', p.astype(jnp.bfloat16), v,
                                        preferred_element_type=jnp.float32))
        # collapsed output projection: ONE (m, dim) @ (dim, dim) matmul after the head loop
        o_cat = jnp.concatenate(heads_out, axis=-1).reshape(m, dim)
        x = x + jnp.dot(o_cat.astype(jnp.bfloat16), wo_ref[l],
                        preferred_element_type=jnp.float32) + bo_ref[l]
        h2 = layer_norm(x, ln2_ref[l])
        # TODO(synk): PyTorch nn.GELU defaults to exact erf; tanh-approx GELU is used here.
        mlp = jax.nn.gelu(jnp.dot(h2.astype(jnp.bfloat16), w1_ref[l],
                                  preferred_element_type=jnp.float32) + b1_ref[l])
        x = x + jnp.dot(mlp.astype(jnp.bfloat16), w2_ref[l],
                        preferred_element_type=jnp.float32) + b2_ref[l]

    # final LN + lane-padded (128-wide) MLM head -> unmasked lane-dense store
    xf = layer_norm(x, lnf_ref[...])
    logits = jnp.dot(xf.astype(jnp.bfloat16), headw_ref[...],
                     preferred_element_type=jnp.float32) + headb_ref[...]     # (m, vpad) f32
    logits_ref[...] = logits.reshape(bt, n, vpad).astype(logits_ref.dtype)

    # masked per-token cross entropy, reduced to a single per-block partial sum (no (B,N,1) stream)
    col = lax.broadcasted_iota(jnp.int32, (m, vpad), 1)
    lg = jnp.where(col < VOCAB, logits, jnp.float32(-1e30))          # mask padded columns
    mx = jnp.max(lg, axis=-1, keepdims=True)
    lse = jnp.log(jnp.sum(jnp.exp(lg - mx), axis=-1, keepdims=True)) + mx
    onehot = (col == tgt_ref[...].reshape(m, 1)).astype(jnp.float32)
    tgt_logit = jnp.sum(logits * onehot, axis=-1, keepdims=True)
    ce = (lse - tgt_logit) * qm_ref[...].reshape(m, 1)               # (m, 1) masked CE terms
    cesum_ref[0] = jnp.sum(ce, axis=0, keepdims=True)                # (1, 1) partial sum


def fused_forward(params, x_emb, extra, coords, adj, tgt, qm, heads):
    B, N, _ = x_emb.shape

    # batch several samples per grid step so the MXU sees >=128 rows per matmul
    bt = max(1, min(B, (128 + N - 1) // N))
    while B % bt:
        bt -= 1
    G = B // bt

    def blk(a, bsz):
        nd = a.ndim
        return pl.BlockSpec((bsz,) + a.shape[1:], lambda g: (g,) + (0,) * (nd - 1))

    def full_vmem(a):
        nd = a.ndim
        return pl.BlockSpec(a.shape, lambda g: (0,) * nd)

    weight_keys = ["feat_w", "feat_b", "wqkv", "bqkv", "wo", "bo",
                   "ln1", "ln2", "w1", "b1", "w2", "b2",
                   "lnf", "head_w", "head_b"]

    # explicit scoped-VMEM budget from the actual block + weight footprint (double buffered)
    nbytes = lambda a: a.size * a.dtype.itemsize
    blk_bytes = sum(nbytes(a) // B * bt for a in (x_emb, extra, coords, adj, tgt, qm))
    blk_bytes += bt * N * VPAD * 4 + 4
    w_bytes = sum(nbytes(params[k]) for k in weight_keys)
    vmem_limit = int(min(64 << 20, max(32 << 20, 2 * (blk_bytes + w_bytes) + (8 << 20))))

    grid_spec = pltpu.PrefetchScalarGridSpec(
        num_scalar_prefetch=0,
        grid=(G,),
        in_specs=[blk(x_emb, bt), blk(extra, bt), blk(coords, bt), blk(adj, bt),
                  blk(tgt, bt), blk(qm, bt)]
                 + [full_vmem(params[k]) for k in weight_keys]
                 + [SMEM_FULL],                                  # per-layer/head bias scalars
        out_specs=[
            pl.BlockSpec((bt, N, VPAD), lambda g: (g, 0, 0)),    # lane-dense logits
            pl.BlockSpec((1, 1, 1), lambda g: (g, 0, 0)),        # CE partial sum per block
        ],
    )
    kernel = functools.partial(_fused_forward_kernel, heads=heads)
    return pl.pallas_call(
        kernel,
        grid_spec=grid_spec,
        out_shape=(jax.ShapeDtypeStruct((B, N, VPAD), jnp.float32),
                   jax.ShapeDtypeStruct((G, 1, 1), jnp.float32)),
        compiler_params=pltpu.CompilerParams(
            dimension_semantics=("parallel",),                   # batch axis -> megacore on v7x
            vmem_limit_bytes=vmem_limit),
    )(x_emb, extra, coords, adj, tgt, qm,
      *[params[k] for k in weight_keys],
      params["head_bias"])


# ------------------------------ params / forward ------------------------------
def init_params(key, dim=32, heads=4, depth=2, ff_mult=2, feat_extra=3):
    dff = dim * ff_mult
    hd = dim // heads
    bf = jnp.bfloat16

    def w(k, shape, scale=0.02):
        return jax.random.normal(k, shape, jnp.float32) * scale

    ks = jax.random.split(key, 8)
    ln_gb = jnp.stack([jnp.ones((dim,), jnp.float32), jnp.zeros((dim,), jnp.float32)])  # (2, dim)
    head_w = jnp.zeros((dim, VPAD), jnp.float32).at[:, :VOCAB].set(w(ks[0], (dim, VOCAB)))
    # fold the 1/sqrt(head_dim) attention scale into the Q columns of wqkv once at build time
    wqkv = w(ks[3], (depth, dim, 3 * dim))
    wqkv = wqkv.at[:, :, :dim].multiply(1.0 / float(hd) ** 0.5)
    return {
        "atom_embed": w(ks[1], (NUM_ATOM_NAMES, dim)),
        "feat_w": w(ks[2], (feat_extra, dim)).astype(bf),
        "feat_b": jnp.zeros((1, dim), jnp.float32),
        "wqkv": wqkv.astype(bf),                                 # fused Q|K|V weight (bf16)
        "bqkv": jnp.zeros((depth, 1, 3 * dim), jnp.float32),
        "wo": w(ks[4], (depth, dim, dim)).astype(bf),
        "bo": jnp.zeros((depth, 1, dim), jnp.float32),
        "ln1": jnp.tile(ln_gb[None], (depth, 1, 1)),
        "ln2": jnp.tile(ln_gb[None], (depth, 1, 1)),
        "w1": w(ks[5], (depth, dim, dff)).astype(bf),
        "b1": jnp.zeros((depth, 1, dff), jnp.float32),
        "w2": w(ks[6], (depth, dff, dim)).astype(bf),
        "b2": jnp.zeros((depth, 1, dim), jnp.float32),
        "lnf": ln_gb,
        "head_w": head_w.astype(bf),                             # lane-padded to 128 columns
        "head_b": jnp.zeros((1, VPAD), jnp.float32),
        "head_bias": w(ks[7], (depth * heads * 2,), 0.1),        # [adj_w, dist_w] per layer/head
    }


def atom_transformer_mlm_forward(params, feats, coords, adj_mat,
                                 target=None, mask=None, return_loss=False, heads=4):
    B, N, _ = feats.shape
    # integer gather for the atom-name embedding (JAX glue; all dense math runs in the kernel)
    x_emb = params["atom_embed"][feats[:, :, 0]]                          # (B, N, D) f32
    extra = feats[:, :, 1:].astype(jnp.bfloat16)                          # small ints, exact in bf16
    adj_bf = adj_mat.astype(jnp.bfloat16)                                 # 0/1 adjacency, half HBM/VMEM
    coords_f = coords.astype(jnp.float32)                                 # dist bias built in-kernel

    if target is None:
        target = jnp.zeros((B, N), jnp.int32)
    if mask is None:
        mask = jnp.zeros((B, N), bool)
    ca_mask = feats[:, :, 0] == ATOM_NAMES_TO_INDEX["CA"]
    query_mask = jnp.logical_and(ca_mask, jnp.logical_not(mask))
    qm = query_mask.astype(jnp.float32)[..., None]                        # (B, N, 1)
    tgt = target.astype(jnp.int32)[..., None]                             # (B, N, 1)

    logits_pad, ce_sums = fused_forward(params, x_emb, extra, coords_f, adj_bf, tgt, qm, heads)
    logits = logits_pad[..., :VOCAB]
    if not return_loss:
        return logits

    # mean CE over selected tokens, 0.0 if none (matches reference loss semantics)
    num = jnp.sum(ce_sums)
    den = jnp.sum(qm)
    loss = jnp.where(den > 0, num / jnp.maximum(den, 1.0), jnp.float32(0.0))
    return logits, loss


# ----------------------------------- main -------------------------------------
if __name__ == "__main__":
    B, N, F = 2, 8, 4
    DIM, HEADS, DEPTH = 32, 4, 2

    key = jax.random.PRNGKey(0)
    k1, k2, k3, k4, k5, k6, kp = jax.random.split(key, 7)

    atom_ids = jax.random.randint(k1, (B, N), 0, NUM_ATOM_NAMES)
    extra_feats = jax.random.randint(k2, (B, N, F - 1), 0, 5)
    feats = jnp.concatenate([atom_ids[..., None], extra_feats], axis=-1).astype(jnp.int32)

    coords = jax.random.normal(k3, (B, N, 3), jnp.float32) * 3.0
    adj = (jax.random.uniform(k4, (B, N, N)) < 0.3)
    adj = jnp.logical_or(adj, adj.transpose(0, 2, 1)).astype(jnp.float32)

    target = jax.random.randint(k5, (B, N), 0, VOCAB)
    mask = jax.random.uniform(k6, (B, N)) < 0.5

    params = init_params(kp, dim=DIM, heads=HEADS, depth=DEPTH, ff_mult=2, feat_extra=F - 1)

    fwd = jax.jit(functools.partial(atom_transformer_mlm_forward,
                                    return_loss=True, heads=HEADS))
    logits, loss = fwd(params, feats, coords, adj, target=target, mask=mask)

    jax.block_until_ready((logits, loss))
    assert logits.shape == (B, N, VOCAB)
    assert loss.shape == ()
    print("KERNEL_OK")
</pallas_src>

<mosaic_0001>
module attributes {stable_mosaic.version = 11 : i64} {
  func.func @_fused_forward_kernel(%arg0: i32, %arg1: memref<2x8x32xf32, #tpu.memory_space<vmem>>, %arg2: memref<2x8x3xbf16, #tpu.memory_space<vmem>>, %arg3: memref<2x8x3xf32, #tpu.memory_space<vmem>>, %arg4: memref<2x8x8xbf16, #tpu.memory_space<vmem>>, %arg5: memref<2x8x1xi32, #tpu.memory_space<vmem>>, %arg6: memref<2x8x1xf32, #tpu.memory_space<vmem>>, %arg7: memref<3x32xbf16, #tpu.memory_space<vmem>>, %arg8: memref<1x32xf32, #tpu.memory_space<vmem>>, %arg9: memref<2x32x96xbf16, #tpu.memory_space<vmem>>, %arg10: memref<2x1x96xf32, #tpu.memory_space<vmem>>, %arg11: memref<2x32x32xbf16, #tpu.memory_space<vmem>>, %arg12: memref<2x1x32xf32, #tpu.memory_space<vmem>>, %arg13: memref<2x2x32xf32, #tpu.memory_space<vmem>>, %arg14: memref<2x2x32xf32, #tpu.memory_space<vmem>>, %arg15: memref<2x32x64xbf16, #tpu.memory_space<vmem>>, %arg16: memref<2x1x64xf32, #tpu.memory_space<vmem>>, %arg17: memref<2x64x32xbf16, #tpu.memory_space<vmem>>, %arg18: memref<2x1x32xf32, #tpu.memory_space<vmem>>, %arg19: memref<2x32xf32, #tpu.memory_space<vmem>>, %arg20: memref<32x128xbf16, #tpu.memory_space<vmem>>, %arg21: memref<1x128xf32, #tpu.memory_space<vmem>>, %arg22: memref<16xf32, #tpu.memory_space<smem>>, %arg23: memref<2x8x128xf32, #tpu.memory_space<vmem>>, %arg24: memref<1x1x1xf32, #tpu.memory_space<vmem>>) attributes {dimension_semantics = [#tpu.dimension_semantics<parallel>], iteration_bounds = array<i64: 1>, scalar_prefetch = 0 : i64, scratch_operands = 0 : i64, tpu.core_type = #tpu.core_type<tc>, window_params = [{transform_indices = @transform_0, window_bounds = array<i64: 2, 8, 32>}, {transform_indices = @transform_1, window_bounds = array<i64: 2, 8, 3>}, {transform_indices = @transform_2, window_bounds = array<i64: 2, 8, 3>}, {transform_indices = @transform_3, window_bounds = array<i64: 2, 8, 8>}, {transform_indices = @transform_4, window_bounds = array<i64: 2, 8, 1>}, {transform_indices = @transform_5, window_bounds = array<i64: 2, 8, 1>}, {pipeline_mode = #tpu.pipeline_mode<synchronous>, transform_indices = @transform_6, window_bounds = array<i64: 3, 32>}, {pipeline_mode = #tpu.pipeline_mode<synchronous>, transform_indices = @transform_7, window_bounds = array<i64: 1, 32>}, {pipeline_mode = #tpu.pipeline_mode<synchronous>, transform_indices = @transform_8, window_bounds = array<i64: 2, 32, 96>}, {pipeline_mode = #tpu.pipeline_mode<synchronous>, transform_indices = @transform_9, window_bounds = array<i64: 2, 1, 96>}, {pipeline_mode = #tpu.pipeline_mode<synchronous>, transform_indices = @transform_10, window_bounds = array<i64: 2, 32, 32>}, {pipeline_mode = #tpu.pipeline_mode<synchronous>, transform_indices = @transform_11, window_bounds = array<i64: 2, 1, 32>}, {pipeline_mode = #tpu.pipeline_mode<synchronous>, transform_indices = @transform_12, window_bounds = array<i64: 2, 2, 32>}, {pipeline_mode = #tpu.pipeline_mode<synchronous>, transform_indices = @transform_13, window_bounds = array<i64: 2, 2, 32>}, {pipeline_mode = #tpu.pipeline_mode<synchronous>, transform_indices = @transform_14, window_bounds = array<i64: 2, 32, 64>}, {pipeline_mode = #tpu.pipeline_mode<synchronous>, transform_indices = @transform_15, window_bounds = array<i64: 2, 1, 64>}, {pipeline_mode = #tpu.pipeline_mode<synchronous>, transform_indices = @transform_16, window_bounds = array<i64: 2, 64, 32>}, {pipeline_mode = #tpu.pipeline_mode<synchronous>, transform_indices = @transform_17, window_bounds = array<i64: 2, 1, 32>}, {pipeline_mode = #tpu.pipeline_mode<synchronous>, transform_indices = @transform_18, window_bounds = array<i64: 2, 32>}, {pipeline_mode = #tpu.pipeline_mode<synchronous>, transform_indices = @transform_19, window_bounds = array<i64: 32, 128>}, {pipeline_mode = #tpu.pipeline_mode<synchronous>, transform_indices = @transform_20, window_bounds = array<i64: 1, 128>}, {transform_indices = @transform_21, window_bounds = array<i64: 16>}, {transform_indices = @transform_22, window_bounds = array<i64: 2, 8, 128>}, {transform_indices = @transform_23, window_bounds = array<i64: 1, 1, 1>}]} {
    %c0 = arith.constant 0 : index
    %c0_0 = arith.constant 0 : index
    %c0_1 = arith.constant 0 : index
    %0 = vector.load %arg1[%c0, %c0_0, %c0_1] : memref<2x8x32xf32, #tpu.memory_space<vmem>>, vector<2x8x32xf32>
    %1 = vector.shape_cast %0 : vector<2x8x32xf32> to vector<16x32xf32>
    %c0_2 = arith.constant 0 : index
    %c0_3 = arith.constant 0 : index
    %c0_4 = arith.constant 0 : index
    %2 = vector.load %arg2[%c0_2, %c0_3, %c0_4] : memref<2x8x3xbf16, #tpu.memory_space<vmem>>, vector<2x8x3xbf16>
    %3 = vector.shape_cast %2 : vector<2x8x3xbf16> to vector<16x3xbf16>
    %c0_5 = arith.constant 0 : index
    %c0_6 = arith.constant 0 : index
    %4 = vector.load %arg7[%c0_5, %c0_6] : memref<3x32xbf16, #tpu.memory_space<vmem>>, vector<3x32xbf16>
    %cst = arith.constant dense<0.000000e+00> : vector<16x32xf32>
    %5 = tpu.matmul %3, %4, %cst {dimension_numbers = #tpu.dot_dimension_numbers<[1], [0], [0], [1], [0, 0, 1, 1], [], []>} : vector<16x3xbf16>, vector<3x32xbf16>, vector<16x32xf32> -> vector<16x32xf32>
    %6 = arith.addf %1, %5 : vector<16x32xf32>
    %c0_7 = arith.constant 0 : index
    %c0_8 = arith.constant 0 : index
    %7 = vector.load %arg8[%c0_7, %c0_8] : memref<1x32xf32, #tpu.memory_space<vmem>>, vector<1x32xf32>
    %8 = vector.broadcast %7 : vector<1x32xf32> to vector<16x32xf32>
    %9 = arith.addf %6, %8 : vector<16x32xf32>
    %c0_9 = arith.constant 0 : index
    %c0_10 = arith.constant 0 : index
    %c0_11 = arith.constant 0 : index
    %10 = vector.load %arg4[%c0_9, %c0_10, %c0_11] : memref<2x8x8xbf16, #tpu.memory_space<vmem>>, vector<2x8x8xbf16>
    %11 = arith.extf %10 : vector<2x8x8xbf16> to vector<2x8x8xf32>
    %c0_12 = arith.constant 0 : index
    %c0_13 = arith.constant 0 : index
    %c0_14 = arith.constant 0 : index
    %12 = vector.load %arg3[%c0_12, %c0_13, %c0_14] : memref<2x8x3xf32, #tpu.memory_space<vmem>>, vector<2x8x3xf32>
    %13 = arith.mulf %12, %12 : vector<2x8x3xf32>
    %cst_15 = arith.constant dense<0.000000e+00> : vector<2x8xf32>
    %14 = vector.multi_reduction <add>, %13, %cst_15 [2] : vector<2x8x3xf32> to vector<2x8xf32>
    %15 = vector.shape_cast %14 : vector<2x8xf32> to vector<2x8x1xf32>
    %cst_16 = arith.constant 1.000000e+00 : f32
    %16 = vector.broadcast %cst_16 : f32 to vector<2x8x1xf32>
    %17 = tpu.concatenate %12, %15, %16 in 2 : vector<2x8x3xf32>, vector<2x8x1xf32>, vector<2x8x1xf32> -> vector<2x8x5xf32>
    %cst_17 = arith.constant -2.000000e+00 : f32
    %18 = vector.broadcast %cst_17 : f32 to vector<2x8x3xf32>
    %19 = arith.mulf %18, %12 : vector<2x8x3xf32>
    %20 = tpu.concatenate %19, %16, %15 in 2 : vector<2x8x3xf32>, vector<2x8x1xf32>, vector<2x8x1xf32> -> vector<2x8x5xf32>
    "tpu.trace_start"() <{level = 10 : i32, message = "bqd,bkd->bqk"}> : () -> ()
    %cst_18 = arith.constant dense<0.000000e+00> : vector<2x8x8xf32>
    %21 = tpu.matmul %17, %20, %cst_18 {dimension_numbers = #tpu.dot_dimension_numbers<[2], [2], [1], [1], [0, 0, 0, 1, 1, 1], [0], [0]>} : vector<2x8x5xf32>, vector<2x8x5xf32>, vector<2x8x8xf32> -> vector<2x8x8xf32>
    "tpu.trace_stop"() : () -> ()
    %cst_19 = arith.constant 0.000000e+00 : f32
    %22 = vector.broadcast %cst_19 : f32 to vector<2x8x8xf32>
    %23 = arith.maximumf %21, %22 : vector<2x8x8xf32>
    %24 = math.sqrt %23 : vector<2x8x8xf32>
    %c0_20 = arith.constant 0 : index
    %c0_21 = arith.constant 0 : index
    %c0_22 = arith.constant 0 : index
    %25 = vector.load %arg13[%c0_20, %c0_21, %c0_22] : memref<2x2x32xf32, #tpu.memory_space<vmem>>, vector<1x2x32xf32>
    %26 = vector.shape_cast %25 : vector<1x2x32xf32> to vector<2x32xf32>
    %cst_23 = arith.constant dense<0.000000e+00> : vector<16xf32>
    %27 = vector.multi_reduction <add>, %9, %cst_23 [1] : vector<16x32xf32> to vector<16xf32>
    %28 = vector.shape_cast %27 : vector<16xf32> to vector<16x1xf32>
    %cst_24 = arith.constant 3.200000e+01 : f32
    %29 = vector.broadcast %cst_24 : f32 to vector<16x1xf32>
    %30 = arith.divf %28, %29 : vector<16x1xf32>
    %31 = vector.broadcast %30 : vector<16x1xf32> to vector<16x32xf32>
    %32 = arith.subf %9, %31 : vector<16x32xf32>
    %33 = arith.mulf %32, %32 : vector<16x32xf32>
    %cst_25 = arith.constant dense<0.000000e+00> : vector<16xf32>
    %34 = vector.multi_reduction <add>, %33, %cst_25 [1] : vector<16x32xf32> to vector<16xf32>
    %35 = vector.shape_cast %34 : vector<16xf32> to vector<16x1xf32>
    %cst_26 = arith.constant 3.200000e+01 : f32
    %36 = vector.broadcast %cst_26 : f32 to vector<16x1xf32>
    %37 = arith.divf %35, %36 : vector<16x1xf32>
    %cst_27 = arith.constant 9.99999974E-6 : f32
    %38 = vector.broadcast %cst_27 : f32 to vector<16x1xf32>
    %39 = arith.addf %37, %38 : vector<16x1xf32>
    %40 = math.rsqrt %39 : vector<16x1xf32>
    %41 = vector.broadcast %40 : vector<16x1xf32> to vector<16x32xf32>
    %42 = arith.mulf %32, %41 : vector<16x32xf32>
    %43 = vector.extract_strided_slice %26 {offsets = [0, 0], sizes = [1, 32], strides = [1, 1]} : vector<2x32xf32> to vector<1x32xf32>
    %44 = vector.broadcast %43 : vector<1x32xf32> to vector<16x32xf32>
    %45 = arith.mulf %42, %44 : vector<16x32xf32>
    %46 = vector.extract_strided_slice %26 {offsets = [1, 0], sizes = [1, 32], strides = [1, 1]} : vector<2x32xf32> to vector<1x32xf32>
    %47 = vector.broadcast %46 : vector<1x32xf32> to vector<16x32xf32>
    %48 = arith.addf %45, %47 : vector<16x32xf32>
    %49 = arith.truncf %48 : vector<16x32xf32> to vector<16x32xbf16>
    %c0_28 = arith.constant 0 : index
    %c0_29 = arith.constant 0 : index
    %c0_30 = arith.constant 0 : index
    %50 = vector.load %arg9[%c0_28, %c0_29, %c0_30] : memref<2x32x96xbf16, #tpu.memory_space<vmem>>, vector<1x32x96xbf16>
    %51 = vector.shape_cast %50 : vector<1x32x96xbf16> to vector<32x96xbf16>
    %cst_31 = arith.constant dense<0.000000e+00> : vector<16x96xf32>
    %52 = tpu.matmul %49, %51, %cst_31 {dimension_numbers = #tpu.dot_dimension_numbers<[1], [0], [0], [1], [0, 0, 1, 1], [], []>} : vector<16x32xbf16>, vector<32x96xbf16>, vector<16x96xf32> -> vector<16x96xf32>
    %c0_32 = arith.constant 0 : index
    %c0_33 = arith.constant 0 : index
    %c0_34 = arith.constant 0 : index
    %53 = vector.load %arg10[%c0_32, %c0_33, %c0_34] : memref<2x1x96xf32, #tpu.memory_space<vmem>>, vector<1x1x96xf32>
    %54 = vector.shape_cast %53 : vector<1x1x96xf32> to vector<1x96xf32>
    %55 = vector.broadcast %54 : vector<1x96xf32> to vector<16x96xf32>
    %56 = arith.addf %52, %55 : vector<16x96xf32>
    %57 = vector.shape_cast %56 : vector<16x96xf32> to vector<2x8x96xf32>
    %58 = vector.extract_strided_slice %57 {offsets = [0, 0, 0], sizes = [2, 8, 8], strides = [1, 1, 1]} : vector<2x8x96xf32> to vector<2x8x8xf32>
    %59 = arith.truncf %58 : vector<2x8x8xf32> to vector<2x8x8xbf16>
    %60 = vector.extract_strided_slice %57 {offsets = [0, 0, 32], sizes = [2, 8, 8], strides = [1, 1, 1]} : vector<2x8x96xf32> to vector<2x8x8xf32>
    %61 = arith.truncf %60 : vector<2x8x8xf32> to vector<2x8x8xbf16>
    %62 = vector.extract_strided_slice %57 {offsets = [0, 0, 64], sizes = [2, 8, 8], strides = [1, 1, 1]} : vector<2x8x96xf32> to vector<2x8x8xf32>
    %63 = arith.truncf %62 : vector<2x8x8xf32> to vector<2x8x8xbf16>
    "tpu.trace_start"() <{level = 10 : i32, message = "bqd,bkd->bqk"}> : () -> ()
    %cst_35 = arith.constant dense<0.000000e+00> : vector<2x8x8xf32>
    %64 = tpu.matmul %59, %61, %cst_35 {dimension_numbers = #tpu.dot_dimension_numbers<[2], [2], [1], [1], [0, 0, 0, 1, 1, 1], [0], [0]>} : vector<2x8x8xbf16>, vector<2x8x8xbf16>, vector<2x8x8xf32> -> vector<2x8x8xf32>
    "tpu.trace_stop"() : () -> ()
    %c0_36 = arith.constant 0 : index
    %65 = memref.load %arg22[%c0_36] : memref<16xf32, #tpu.memory_space<smem>>
    %c1 = arith.constant 1 : index
    %66 = memref.load %arg22[%c1] : memref<16xf32, #tpu.memory_space<smem>>
    %67 = vector.broadcast %65 : f32 to vector<2x8x8xf32>
    %68 = arith.mulf %11, %67 : vector<2x8x8xf32>
    %69 = arith.addf %64, %68 : vector<2x8x8xf32>
    %70 = vector.broadcast %66 : f32 to vector<2x8x8xf32>
    %71 = arith.mulf %24, %70 : vector<2x8x8xf32>
    %72 = arith.subf %69, %71 : vector<2x8x8xf32>
    %cst_37 = arith.constant dense<0xFF800000> : vector<2x8xf32>
    %73 = vector.multi_reduction <maximumf>, %72, %cst_37 [2] : vector<2x8x8xf32> to vector<2x8xf32>
    %74 = vector.shape_cast %73 : vector<2x8xf32> to vector<2x8x1xf32>
    %75 = vector.broadcast %74 : vector<2x8x1xf32> to vector<2x8x8xf32>
    %76 = arith.subf %72, %75 : vector<2x8x8xf32>
    %77 = math.exp %76 : vector<2x8x8xf32>
    %cst_38 = arith.constant dense<0.000000e+00> : vector<2x8xf32>
    %78 = vector.multi_reduction <add>, %77, %cst_38 [2] : vector<2x8x8xf32> to vector<2x8xf32>
    %79 = vector.shape_cast %78 : vector<2x8xf32> to vector<2x8x1xf32>
    %80 = tpu.reciprocal %79 : vector<2x8x1xf32> -> vector<2x8x1xf32>
    %81 = vector.broadcast %80 : vector<2x8x1xf32> to vector<2x8x8xf32>
    %82 = arith.mulf %77, %81 : vector<2x8x8xf32>
    %83 = arith.truncf %82 : vector<2x8x8xf32> to vector<2x8x8xbf16>
    "tpu.trace_start"() <{level = 10 : i32, message = "bqk,bkd->bqd"}> : () -> ()
    %cst_39 = arith.constant dense<0.000000e+00> : vector<2x8x8xf32>
    %84 = tpu.matmul %83, %63, %cst_39 {dimension_numbers = #tpu.dot_dimension_numbers<[2], [1], [1], [2], [0, 0, 0, 1, 1, 2], [0], [0]>} : vector<2x8x8xbf16>, vector<2x8x8xbf16>, vector<2x8x8xf32> -> vector<2x8x8xf32>
    "tpu.trace_stop"() : () -> ()
    %85 = vector.extract_strided_slice %57 {offsets = [0, 0, 8], sizes = [2, 8, 8], strides = [1, 1, 1]} : vector<2x8x96xf32> to vector<2x8x8xf32>
    %86 = arith.truncf %85 : vector<2x8x8xf32> to vector<2x8x8xbf16>
    %87 = vector.extract_strided_slice %57 {offsets = [0, 0, 40], sizes = [2, 8, 8], strides = [1, 1, 1]} : vector<2x8x96xf32> to vector<2x8x8xf32>
    %88 = arith.truncf %87 : vector<2x8x8xf32> to vector<2x8x8xbf16>
    %89 = vector.extract_strided_slice %57 {offsets = [0, 0, 72], sizes = [2, 8, 8], strides = [1, 1, 1]} : vector<2x8x96xf32> to vector<2x8x8xf32>
    %90 = arith.truncf %89 : vector<2x8x8xf32> to vector<2x8x8xbf16>
    "tpu.trace_start"() <{level = 10 : i32, message = "bqd,bkd->bqk"}> : () -> ()
    %cst_40 = arith.constant dense<0.000000e+00> : vector<2x8x8xf32>
    %91 = tpu.matmul %86, %88, %cst_40 {dimension_numbers = #tpu.dot_dimension_numbers<[2], [2], [1], [1], [0, 0, 0, 1, 1, 1], [0], [0]>} : vector<2x8x8xbf16>, vector<2x8x8xbf16>, vector<2x8x8xf32> -> vector<2x8x8xf32>
    "tpu.trace_stop"() : () -> ()
    %c2 = arith.constant 2 : index
    %92 = memref.load %arg22[%c2] : memref<16xf32, #tpu.memory_space<smem>>
    %c3 = arith.constant 3 : index
    %93 = memref.load %arg22[%c3] : memref<16xf32, #tpu.memory_space<smem>>
    %94 = vector.broadcast %92 : f32 to vector<2x8x8xf32>
    %95 = arith.mulf %11, %94 : vector<2x8x8xf32>
    %96 = arith.addf %91, %95 : vector<2x8x8xf32>
    %97 = vector.broadcast %93 : f32 to vector<2x8x8xf32>
    %98 = arith.mulf %24, %97 : vector<2x8x8xf32>
    %99 = arith.subf %96, %98 : vector<2x8x8xf32>
    %cst_41 = arith.constant dense<0xFF800000> : vector<2x8xf32>
    %100 = vector.multi_reduction <maximumf>, %99, %cst_41 [2] : vector<2x8x8xf32> to vector<2x8xf32>
    %101 = vector.shape_cast %100 : vector<2x8xf32> to vector<2x8x1xf32>
    %102 = vector.broadcast %101 : vector<2x8x1xf32> to vector<2x8x8xf32>
    %103 = arith.subf %99, %102 : vector<2x8x8xf32>
    %104 = math.exp %103 : vector<2x8x8xf32>
    %cst_42 = arith.constant dense<0.000000e+00> : vector<2x8xf32>
    %105 = vector.multi_reduction <add>, %104, %cst_42 [2] : vector<2x8x8xf32> to vector<2x8xf32>
    %106 = vector.shape_cast %105 : vector<2x8xf32> to vector<2x8x1xf32>
    %107 = tpu.reciprocal %106 : vector<2x8x1xf32> -> vector<2x8x1xf32>
    %108 = vector.broadcast %107 : vector<2x8x1xf32> to vector<2x8x8xf32>
    %109 = arith.mulf %104, %108 : vector<2x8x8xf32>
    %110 = arith.truncf %109 : vector<2x8x8xf32> to vector<2x8x8xbf16>
    "tpu.trace_start"() <{level = 10 : i32, message = "bqk,bkd->bqd"}> : () -> ()
    %cst_43 = arith.constant dense<0.000000e+00> : vector<2x8x8xf32>
    %111 = tpu.matmul %110, %90, %cst_43 {dimension_numbers = #tpu.dot_dimension_numbers<[2], [1], [1], [2], [0, 0, 0, 1, 1, 2], [0], [0]>} : vector<2x8x8xbf16>, vector<2x8x8xbf16>, vector<2x8x8xf32> -> vector<2x8x8xf32>
    "tpu.trace_stop"() : () -> ()
    %112 = vector.extract_strided_slice %57 {offsets = [0, 0, 16], sizes = [2, 8, 8], strides = [1, 1, 1]} : vector<2x8x96xf32> to vector<2x8x8xf32>
    %113 = arith.truncf %112 : vector<2x8x8xf32> to vector<2x8x8xbf16>
    %114 = vector.extract_strided_slice %57 {offsets = [0, 0, 48], sizes = [2, 8, 8], strides = [1, 1, 1]} : vector<2x8x96xf32> to vector<2x8x8xf32>
    %115 = arith.truncf %114 : vector<2x8x8xf32> to vector<2x8x8xbf16>
    %116 = vector.extract_strided_slice %57 {offsets = [0, 0, 80], sizes = [2, 8, 8], strides = [1, 1, 1]} : vector<2x8x96xf32> to vector<2x8x8xf32>
    %117 = arith.truncf %116 : vector<2x8x8xf32> to vector<2x8x8xbf16>
    "tpu.trace_start"() <{level = 10 : i32, message = "bqd,bkd->bqk"}> : () -> ()
    %cst_44 = arith.constant dense<0.000000e+00> : vector<2x8x8xf32>
    %118 = tpu.matmul %113, %115, %cst_44 {dimension_numbers = #tpu.dot_dimension_numbers<[2], [2], [1], [1], [0, 0, 0, 1, 1, 1], [0], [0]>} : vector<2x8x8xbf16>, vector<2x8x8xbf16>, vector<2x8x8xf32> -> vector<2x8x8xf32>
    "tpu.trace_stop"() : () -> ()
    %c4 = arith.constant 4 : index
    %119 = memref.load %arg22[%c4] : memref<16xf32, #tpu.memory_space<smem>>
    %c5 = arith.constant 5 : index
    %120 = memref.load %arg22[%c5] : memref<16xf32, #tpu.memory_space<smem>>
    %121 = vector.broadcast %119 : f32 to vector<2x8x8xf32>
    %122 = arith.mulf %11, %121 : vector<2x8x8xf32>
    %123 = arith.addf %118, %122 : vector<2x8x8xf32>
    %124 = vector.broadcast %120 : f32 to vector<2x8x8xf32>
    %125 = arith.mulf %24, %124 : vector<2x8x8xf32>
    %126 = arith.subf %123, %125 : vector<2x8x8xf32>
    %cst_45 = arith.constant dense<0xFF800000> : vector<2x8xf32>
    %127 = vector.multi_reduction <maximumf>, %126, %cst_45 [2] : vector<2x8x8xf32> to vector<2x8xf32>
    %128 = vector.shape_cast %127 : vector<2x8xf32> to vector<2x8x1xf32>
    %129 = vector.broadcast %128 : vector<2x8x1xf32> to vector<2x8x8xf32>
    %130 = arith.subf %126, %129 : vector<2x8x8xf32>
    %131 = math.exp %130 : vector<2x8x8xf32>
    %cst_46 = arith.constant dense<0.000000e+00> : vector<2x8xf32>
    %132 = vector.multi_reduction <add>, %131, %cst_46 [2] : vector<2x8x8xf32> to vector<2x8xf32>
    %133 = vector.shape_cast %132 : vector<2x8xf32> to vector<2x8x1xf32>
    %134 = tpu.reciprocal %133 : vector<2x8x1xf32> -> vector<2x8x1xf32>
    %135 = vector.broadcast %134 : vector<2x8x1xf32> to vector<2x8x8xf32>
    %136 = arith.mulf %131, %135 : vector<2x8x8xf32>
    %137 = arith.truncf %136 : vector<2x8x8xf32> to vector<2x8x8xbf16>
    "tpu.trace_start"() <{level = 10 : i32, message = "bqk,bkd->bqd"}> : () -> ()
    %cst_47 = arith.constant dense<0.000000e+00> : vector<2x8x8xf32>
    %138 = tpu.matmul %137, %117, %cst_47 {dimension_numbers = #tpu.dot_dimension_numbers<[2], [1], [1], [2], [0, 0, 0, 1, 1, 2], [0], [0]>} : vector<2x8x8xbf16>, vector<2x8x8xbf16>, vector<2x8x8xf32> -> vector<2x8x8xf32>
    "tpu.trace_stop"() : () -> ()
    %139 = vector.extract_strided_slice %57 {offsets = [0, 0, 24], sizes = [2, 8, 8], strides = [1, 1, 1]} : vector<2x8x96xf32> to vector<2x8x8xf32>
    %140 = arith.truncf %139 : vector<2x8x8xf32> to vector<2x8x8xbf16>
    %141 = vector.extract_strided_slice %57 {offsets = [0, 0, 56], sizes = [2, 8, 8], strides = [1, 1, 1]} : vector<2x8x96xf32> to vector<2x8x8xf32>
    %142 = arith.truncf %141 : vector<2x8x8xf32> to vector<2x8x8xbf16>
    %143 = vector.extract_strided_slice %57 {offsets = [0, 0, 88], sizes = [2, 8, 8], strides = [1, 1, 1]} : vector<2x8x96xf32> to vector<2x8x8xf32>
    %144 = arith.truncf %143 : vector<2x8x8xf32> to vector<2x8x8xbf16>
    "tpu.trace_start"() <{level = 10 : i32, message = "bqd,bkd->bqk"}> : () -> ()
    %cst_48 = arith.constant dense<0.000000e+00> : vector<2x8x8xf32>
    %145 = tpu.matmul %140, %142, %cst_48 {dimension_numbers = #tpu.dot_dimension_numbers<[2], [2], [1], [1], [0, 0, 0, 1, 1, 1], [0], [0]>} : vector<2x8x8xbf16>, vector<2x8x8xbf16>, vector<2x8x8xf32> -> vector<2x8x8xf32>
    "tpu.trace_stop"() : () -> ()
    %c6 = arith.constant 6 : index
    %146 = memref.load %arg22[%c6] : memref<16xf32, #tpu.memory_space<smem>>
    %c7 = arith.constant 7 : index
    %147 = memref.load %arg22[%c7] : memref<16xf32, #tpu.memory_space<smem>>
    %148 = vector.broadcast %146 : f32 to vector<2x8x8xf32>
    %149 = arith.mulf %11, %148 : vector<2x8x8xf32>
    %150 = arith.addf %145, %149 : vector<2x8x8xf32>
    %151 = vector.broadcast %147 : f32 to vector<2x8x8xf32>
    %152 = arith.mulf %24, %151 : vector<2x8x8xf32>
    %153 = arith.subf %150, %152 : vector<2x8x8xf32>
    %cst_49 = arith.constant dense<0xFF800000> : vector<2x8xf32>
    %154 = vector.multi_reduction <maximumf>, %153, %cst_49 [2] : vector<2x8x8xf32> to vector<2x8xf32>
    %155 = vector.shape_cast %154 : vector<2x8xf32> to vector<2x8x1xf32>
    %156 = vector.broadcast %155 : vector<2x8x1xf32> to vector<2x8x8xf32>
    %157 = arith.subf %153, %156 : vector<2x8x8xf32>
    %158 = math.exp %157 : vector<2x8x8xf32>
    %cst_50 = arith.constant dense<0.000000e+00> : vector<2x8xf32>
    %159 = vector.multi_reduction <add>, %158, %cst_50 [2] : vector<2x8x8xf32> to vector<2x8xf32>
    %160 = vector.shape_cast %159 : vector<2x8xf32> to vector<2x8x1xf32>
    %161 = tpu.reciprocal %160 : vector<2x8x1xf32> -> vector<2x8x1xf32>
    %162 = vector.broadcast %161 : vector<2x8x1xf32> to vector<2x8x8xf32>
    %163 = arith.mulf %158, %162 : vector<2x8x8xf32>
    %164 = arith.truncf %163 : vector<2x8x8xf32> to vector<2x8x8xbf16>
    "tpu.trace_start"() <{level = 10 : i32, message = "bqk,bkd->bqd"}> : () -> ()
    %cst_51 = arith.constant dense<0.000000e+00> : vector<2x8x8xf32>
    %165 = tpu.matmul %164, %144, %cst_51 {dimension_numbers = #tpu.dot_dimension_numbers<[2], [1], [1], [2], [0, 0, 0, 1, 1, 2], [0], [0]>} : vector<2x8x8xbf16>, vector<2x8x8xbf16>, vector<2x8x8xf32> -> vector<2x8x8xf32>
    "tpu.trace_stop"() : () -> ()
    %166 = tpu.concatenate %84, %111, %138, %165 in 2 : vector<2x8x8xf32>, vector<2x8x8xf32>, vector<2x8x8xf32>, vector<2x8x8xf32> -> vector<2x8x32xf32>
    %167 = vector.shape_cast %166 : vector<2x8x32xf32> to vector<16x32xf32>
    %168 = arith.truncf %167 : vector<16x32xf32> to vector<16x32xbf16>
    %c0_52 = arith.constant 0 : index
    %c0_53 = arith.constant 0 : index
    %c0_54 = arith.constant 0 : index
    %169 = vector.load %arg11[%c0_52, %c0_53, %c0_54] : memref<2x32x32xbf16, #tpu.memory_space<vmem>>, vector<1x32x32xbf16>
    %170 = vector.shape_cast %169 : vector<1x32x32xbf16> to vector<32x32xbf16>
    %cst_55 = arith.constant dense<0.000000e+00> : vector<16x32xf32>
    %171 = tpu.matmul %168, %170, %cst_55 {dimension_numbers = #tpu.dot_dimension_numbers<[1], [0], [0], [1], [0, 0, 1, 1], [], []>} : vector<16x32xbf16>, vector<32x32xbf16>, vector<16x32xf32> -> vector<16x32xf32>
    %172 = arith.addf %9, %171 : vector<16x32xf32>
    %c0_56 = arith.constant 0 : index
    %c0_57 = arith.constant 0 : index
    %c0_58 = arith.constant 0 : index
    %173 = vector.load %arg12[%c0_56, %c0_57, %c0_58] : memref<2x1x32xf32, #tpu.memory_space<vmem>>, vector<1x1x32xf32>
    %174 = vector.shape_cast %173 : vector<1x1x32xf32> to vector<1x32xf32>
    %175 = vector.broadcast %174 : vector<1x32xf32> to vector<16x32xf32>
    %176 = arith.addf %172, %175 : vector<16x32xf32>
    %c0_59 = arith.constant 0 : index
    %c0_60 = arith.constant 0 : index
    %c0_61 = arith.constant 0 : index
    %177 = vector.load %arg14[%c0_59, %c0_60, %c0_61] : memref<2x2x32xf32, #tpu.memory_space<vmem>>, vector<1x2x32xf32>
    %178 = vector.shape_cast %177 : vector<1x2x32xf32> to vector<2x32xf32>
    %cst_62 = arith.constant dense<0.000000e+00> : vector<16xf32>
    %179 = vector.multi_reduction <add>, %176, %cst_62 [1] : vector<16x32xf32> to vector<16xf32>
    %180 = vector.shape_cast %179 : vector<16xf32> to vector<16x1xf32>
    %cst_63 = arith.constant 3.200000e+01 : f32
    %181 = vector.broadcast %cst_63 : f32 to vector<16x1xf32>
    %182 = arith.divf %180, %181 : vector<16x1xf32>
    %183 = vector.broadcast %182 : vector<16x1xf32> to vector<16x32xf32>
    %184 = arith.subf %176, %183 : vector<16x32xf32>
    %185 = arith.mulf %184, %184 : vector<16x32xf32>
    %cst_64 = arith.constant dense<0.000000e+00> : vector<16xf32>
    %186 = vector.multi_reduction <add>, %185, %cst_64 [1] : vector<16x32xf32> to vector<16xf32>
    %187 = vector.shape_cast %186 : vector<16xf32> to vector<16x1xf32>
    %cst_65 = arith.constant 3.200000e+01 : f32
    %188 = vector.broadcast %cst_65 : f32 to vector<16x1xf32>
    %189 = arith.divf %187, %188 : vector<16x1xf32>
    %cst_66 = arith.constant 9.99999974E-6 : f32
    %190 = vector.broadcast %cst_66 : f32 to vector<16x1xf32>
    %191 = arith.addf %189, %190 : vector<16x1xf32>
    %192 = math.rsqrt %191 : vector<16x1xf32>
    %193 = vector.broadcast %192 : vector<16x1xf32> to vector<16x32xf32>
    %194 = arith.mulf %184, %193 : vector<16x32xf32>
    %195 = vector.extract_strided_slice %178 {offsets = [0, 0], sizes = [1, 32], strides = [1, 1]} : vector<2x32xf32> to vector<1x32xf32>
    %196 = vector.broadcast %195 : vector<1x32xf32> to vector<16x32xf32>
    %197 = arith.mulf %194, %196 : vector<16x32xf32>
    %198 = vector.extract_strided_slice %178 {offsets = [1, 0], sizes = [1, 32], strides = [1, 1]} : vector<2x32xf32> to vector<1x32xf32>
    %199 = vector.broadcast %198 : vector<1x32xf32> to vector<16x32xf32>
    %200 = arith.addf %197, %199 : vector<16x32xf32>
    %201 = arith.truncf %200 : vector<16x32xf32> to vector<16x32xbf16>
    %c0_67 = arith.constant 0 : index
    %c0_68 = arith.constant 0 : index
    %c0_69 = arith.constant 0 : index
    %202 = vector.load %arg15[%c0_67, %c0_68, %c0_69] : memref<2x32x64xbf16, #tpu.memory_space<vmem>>, vector<1x32x64xbf16>
    %203 = vector.shape_cast %202 : vector<1x32x64xbf16> to vector<32x64xbf16>
    %cst_70 = arith.constant dense<0.000000e+00> : vector<16x64xf32>
    %204 = tpu.matmul %201, %203, %cst_70 {dimension_numbers = #tpu.dot_dimension_numbers<[1], [0], [0], [1], [0, 0, 1, 1], [], []>} : vector<16x32xbf16>, vector<32x64xbf16>, vector<16x64xf32> -> vector<16x64xf32>
    %c0_71 = arith.constant 0 : index
    %c0_72 = arith.constant 0 : index
    %c0_73 = arith.constant 0 : index
    %205 = vector.load %arg16[%c0_71, %c0_72, %c0_73] : memref<2x1x64xf32, #tpu.memory_space<vmem>>, vector<1x1x64xf32>
    %206 = vector.shape_cast %205 : vector<1x1x64xf32> to vector<1x64xf32>
    %207 = vector.broadcast %206 : vector<1x64xf32> to vector<16x64xf32>
    %208 = arith.addf %204, %207 : vector<16x64xf32>
    %209 = arith.mulf %208, %208 : vector<16x64xf32>
    %210 = arith.mulf %208, %209 : vector<16x64xf32>
    %cst_74 = arith.constant 4.471500e-02 : f32
    %211 = vector.broadcast %cst_74 : f32 to vector<16x64xf32>
    %212 = arith.mulf %211, %210 : vector<16x64xf32>
    %213 = arith.addf %208, %212 : vector<16x64xf32>
    %cst_75 = arith.constant 0.797884583 : f32
    %214 = vector.broadcast %cst_75 : f32 to vector<16x64xf32>
    %215 = arith.mulf %214, %213 : vector<16x64xf32>
    %216 = math.tanh %215 : vector<16x64xf32>
    %cst_76 = arith.constant 1.000000e+00 : f32
    %217 = vector.broadcast %cst_76 : f32 to vector<16x64xf32>
    %218 = arith.addf %217, %216 : vector<16x64xf32>
    %cst_77 = arith.constant 5.000000e-01 : f32
    %219 = vector.broadcast %cst_77 : f32 to vector<16x64xf32>
    %220 = arith.mulf %219, %218 : vector<16x64xf32>
    %221 = arith.mulf %208, %220 : vector<16x64xf32>
    %222 = arith.truncf %221 : vector<16x64xf32> to vector<16x64xbf16>
    %c0_78 = arith.constant 0 : index
    %c0_79 = arith.constant 0 : index
    %c0_80 = arith.constant 0 : index
    %223 = vector.load %arg17[%c0_78, %c0_79, %c0_80] : memref<2x64x32xbf16, #tpu.memory_space<vmem>>, vector<1x64x32xbf16>
    %224 = vector.shape_cast %223 : vector<1x64x32xbf16> to vector<64x32xbf16>
    %cst_81 = arith.constant dense<0.000000e+00> : vector<16x32xf32>
    %225 = tpu.matmul %222, %224, %cst_81 {dimension_numbers = #tpu.dot_dimension_numbers<[1], [0], [0], [1], [0, 0, 1, 1], [], []>} : vector<16x64xbf16>, vector<64x32xbf16>, vector<16x32xf32> -> vector<16x32xf32>
    %226 = arith.addf %176, %225 : vector<16x32xf32>
    %c0_82 = arith.constant 0 : index
    %c0_83 = arith.constant 0 : index
    %c0_84 = arith.constant 0 : index
    %227 = vector.load %arg18[%c0_82, %c0_83, %c0_84] : memref<2x1x32xf32, #tpu.memory_space<vmem>>, vector<1x1x32xf32>
    %228 = vector.shape_cast %227 : vector<1x1x32xf32> to vector<1x32xf32>
    %229 = vector.broadcast %228 : vector<1x32xf32> to vector<16x32xf32>
    %230 = arith.addf %226, %229 : vector<16x32xf32>
    %c1_85 = arith.constant 1 : index
    %c0_86 = arith.constant 0 : index
    %c0_87 = arith.constant 0 : index
    %231 = vector.load %arg13[%c1_85, %c0_86, %c0_87] : memref<2x2x32xf32, #tpu.memory_space<vmem>>, vector<1x2x32xf32>
    %232 = vector.shape_cast %231 : vector<1x2x32xf32> to vector<2x32xf32>
    %cst_88 = arith.constant dense<0.000000e+00> : vector<16xf32>
    %233 = vector.multi_reduction <add>, %230, %cst_88 [1] : vector<16x32xf32> to vector<16xf32>
    %234 = vector.shape_cast %233 : vector<16xf32> to vector<16x1xf32>
    %cst_89 = arith.constant 3.200000e+01 : f32
    %235 = vector.broadcast %cst_89 : f32 to vector<16x1xf32>
    %236 = arith.divf %234, %235 : vector<16x1xf32>
    %237 = vector.broadcast %236 : vector<16x1xf32> to vector<16x32xf32>
    %238 = arith.subf %230, %237 : vector<16x32xf32>
    %239 = arith.mulf %238, %238 : vector<16x32xf32>
    %cst_90 = arith.constant dense<0.000000e+00> : vector<16xf32>
    %240 = vector.multi_reduction <add>, %239, %cst_90 [1] : vector<16x32xf32> to vector<16xf32>
    %241 = vector.shape_cast %240 : vector<16xf32> to vector<16x1xf32>
    %cst_91 = arith.constant 3.200000e+01 : f32
    %242 = vector.broadcast %cst_91 : f32 to vector<16x1xf32>
    %243 = arith.divf %241, %242 : vector<16x1xf32>
    %cst_92 = arith.constant 9.99999974E-6 : f32
    %244 = vector.broadcast %cst_92 : f32 to vector<16x1xf32>
    %245 = arith.addf %243, %244 : vector<16x1xf32>
    %246 = math.rsqrt %245 : vector<16x1xf32>
    %247 = vector.broadcast %246 : vector<16x1xf32> to vector<16x32xf32>
    %248 = arith.mulf %238, %247 : vector<16x32xf32>
    %249 = vector.extract_strided_slice %232 {offsets = [0, 0], sizes = [1, 32], strides = [1, 1]} : vector<2x32xf32> to vector<1x32xf32>
    %250 = vector.broadcast %249 : vector<1x32xf32> to vector<16x32xf32>
    %251 = arith.mulf %248, %250 : vector<16x32xf32>
    %252 = vector.extract_strided_slice %232 {offsets = [1, 0], sizes = [1, 32], strides = [1, 1]} : vector<2x32xf32> to vector<1x32xf32>
    %253 = vector.broadcast %252 : vector<1x32xf32> to vector<16x32xf32>
    %254 = arith.addf %251, %253 : vector<16x32xf32>
    %255 = arith.truncf %254 : vector<16x32xf32> to vector<16x32xbf16>
    %c1_93 = arith.constant 1 : index
    %c0_94 = arith.constant 0 : index
    %c0_95 = arith.constant 0 : index
    %256 = vector.load %arg9[%c1_93, %c0_94, %c0_95] : memref<2x32x96xbf16, #tpu.memory_space<vmem>>, vector<1x32x96xbf16>
    %257 = vector.shape_cast %256 : vector<1x32x96xbf16> to vector<32x96xbf16>
    %cst_96 = arith.constant dense<0.000000e+00> : vector<16x96xf32>
    %258 = tpu.matmul %255, %257, %cst_96 {dimension_numbers = #tpu.dot_dimension_numbers<[1], [0], [0], [1], [0, 0, 1, 1], [], []>} : vector<16x32xbf16>, vector<32x96xbf16>, vector<16x96xf32> -> vector<16x96xf32>
    %c1_97 = arith.constant 1 : index
    %c0_98 = arith.constant 0 : index
    %c0_99 = arith.constant 0 : index
    %259 = vector.load %arg10[%c1_97, %c0_98, %c0_99] : memref<2x1x96xf32, #tpu.memory_space<vmem>>, vector<1x1x96xf32>
    %260 = vector.shape_cast %259 : vector<1x1x96xf32> to vector<1x96xf32>
    %261 = vector.broadcast %260 : vector<1x96xf32> to vector<16x96xf32>
    %262 = arith.addf %258, %261 : vector<16x96xf32>
    %263 = vector.shape_cast %262 : vector<16x96xf32> to vector<2x8x96xf32>
    %264 = vector.extract_strided_slice %263 {offsets = [0, 0, 0], sizes = [2, 8, 8], strides = [1, 1, 1]} : vector<2x8x96xf32> to vector<2x8x8xf32>
    %265 = arith.truncf %264 : vector<2x8x8xf32> to vector<2x8x8xbf16>
    %266 = vector.extract_strided_slice %263 {offsets = [0, 0, 32], sizes = [2, 8, 8], strides = [1, 1, 1]} : vector<2x8x96xf32> to vector<2x8x8xf32>
    %267 = arith.truncf %266 : vector<2x8x8xf32> to vector<2x8x8xbf16>
    %268 = vector.extract_strided_slice %263 {offsets = [0, 0, 64], sizes = [2, 8, 8], strides = [1, 1, 1]} : vector<2x8x96xf32> to vector<2x8x8xf32>
    %269 = arith.truncf %268 : vector<2x8x8xf32> to vector<2x8x8xbf16>
    "tpu.trace_start"() <{level = 10 : i32, message = "bqd,bkd->bqk"}> : () -> ()
    %cst_100 = arith.constant dense<0.000000e+00> : vector<2x8x8xf32>
    %270 = tpu.matmul %265, %267, %cst_100 {dimension_numbers = #tpu.dot_dimension_numbers<[2], [2], [1], [1], [0, 0, 0, 1, 1, 1], [0], [0]>} : vector<2x8x8xbf16>, vector<2x8x8xbf16>, vector<2x8x8xf32> -> vector<2x8x8xf32>
    "tpu.trace_stop"() : () -> ()
    %c8 = arith.constant 8 : index
    %271 = memref.load %arg22[%c8] : memref<16xf32, #tpu.memory_space<smem>>
    %c9 = arith.constant 9 : index
    %272 = memref.load %arg22[%c9] : memref<16xf32, #tpu.memory_space<smem>>
    %273 = vector.broadcast %271 : f32 to vector<2x8x8xf32>
    %274 = arith.mulf %11, %273 : vector<2x8x8xf32>
    %275 = arith.addf %270, %274 : vector<2x8x8xf32>
    %276 = vector.broadcast %272 : f32 to vector<2x8x8xf32>
    %277 = arith.mulf %24, %276 : vector<2x8x8xf32>
    %278 = arith.subf %275, %277 : vector<2x8x8xf32>
    %cst_101 = arith.constant dense<0xFF800000> : vector<2x8xf32>
    %279 = vector.multi_reduction <maximumf>, %278, %cst_101 [2] : vector<2x8x8xf32> to vector<2x8xf32>
    %280 = vector.shape_cast %279 : vector<2x8xf32> to vector<2x8x1xf32>
    %281 = vector.broadcast %280 : vector<2x8x1xf32> to vector<2x8x8xf32>
    %282 = arith.subf %278, %281 : vector<2x8x8xf32>
    %283 = math.exp %282 : vector<2x8x8xf32>
    %cst_102 = arith.constant dense<0.000000e+00> : vector<2x8xf32>
    %284 = vector.multi_reduction <add>, %283, %cst_102 [2] : vector<2x8x8xf32> to vector<2x8xf32>
    %285 = vector.shape_cast %284 : vector<2x8xf32> to vector<2x8x1xf32>
    %286 = tpu.reciprocal %285 : vector<2x8x1xf32> -> vector<2x8x1xf32>
    %287 = vector.broadcast %286 : vector<2x8x1xf32> to vector<2x8x8xf32>
    %288 = arith.mulf %283, %287 : vector<2x8x8xf32>
    %289 = arith.truncf %288 : vector<2x8x8xf32> to vector<2x8x8xbf16>
    "tpu.trace_start"() <{level = 10 : i32, message = "bqk,bkd->bqd"}> : () -> ()
    %cst_103 = arith.constant dense<0.000000e+00> : vector<2x8x8xf32>
    %290 = tpu.matmul %289, %269, %cst_103 {dimension_numbers = #tpu.dot_dimension_numbers<[2], [1], [1], [2], [0, 0, 0, 1, 1, 2], [0], [0]>} : vector<2x8x8xbf16>, vector<2x8x8xbf16>, vector<2x8x8xf32> -> vector<2x8x8xf32>
    "tpu.trace_stop"() : () -> ()
    %291 = vector.extract_strided_slice %263 {offsets = [0, 0, 8], sizes = [2, 8, 8], strides = [1, 1, 1]} : vector<2x8x96xf32> to vector<2x8x8xf32>
    %292 = arith.truncf %291 : vector<2x8x8xf32> to vector<2x8x8xbf16>
    %293 = vector.extract_strided_slice %263 {offsets = [0, 0, 40], sizes = [2, 8, 8], strides = [1, 1, 1]} : vector<2x8x96xf32> to vector<2x8x8xf32>
    %294 = arith.truncf %293 : vector<2x8x8xf32> to vector<2x8x8xbf16>
    %295 = vector.extract_strided_slice %263 {offsets = [0, 0, 72], sizes = [2, 8, 8], strides = [1, 1, 1]} : vector<2x8x96xf32> to vector<2x8x8xf32>
    %296 = arith.truncf %295 : vector<2x8x8xf32> to vector<2x8x8xbf16>
    "tpu.trace_start"() <{level = 10 : i32, message = "bqd,bkd->bqk"}> : () -> ()
    %cst_104 = arith.constant dense<0.000000e+00> : vector<2x8x8xf32>
    %297 = tpu.matmul %292, %294, %cst_104 {dimension_numbers = #tpu.dot_dimension_numbers<[2], [2], [1], [1], [0, 0, 0, 1, 1, 1], [0], [0]>} : vector<2x8x8xbf16>, vector<2x8x8xbf16>, vector<2x8x8xf32> -> vector<2x8x8xf32>
    "tpu.trace_stop"() : () -> ()
    %c10 = arith.constant 10 : index
    %298 = memref.load %arg22[%c10] : memref<16xf32, #tpu.memory_space<smem>>
    %c11 = arith.constant 11 : index
    %299 = memref.load %arg22[%c11] : memref<16xf32, #tpu.memory_space<smem>>
    %300 = vector.broadcast %298 : f32 to vector<2x8x8xf32>
    %301 = arith.mulf %11, %300 : vector<2x8x8xf32>
    %302 = arith.addf %297, %301 : vector<2x8x8xf32>
    %303 = vector.broadcast %299 : f32 to vector<2x8x8xf32>
    %304 = arith.mulf %24, %303 : vector<2x8x8xf32>
    %305 = arith.subf %302, %304 : vector<2x8x8xf32>
    %cst_105 = arith.constant dense<0xFF800000> : vector<2x8xf32>
    %306 = vector.multi_reduction <maximumf>, %305, %cst_105 [2] : vector<2x8x8xf32> to vector<2x8xf32>
    %307 = vector.shape_cast %306 : vector<2x8xf32> to vector<2x8x1xf32>
    %308 = vector.broadcast %307 : vector<2x8x1xf32> to vector<2x8x8xf32>
    %309 = arith.subf %305, %308 : vector<2x8x8xf32>
    %310 = math.exp %309 : vector<2x8x8xf32>
    %cst_106 = arith.constant dense<0.000000e+00> : vector<2x8xf32>
    %311 = vector.multi_reduction <add>, %310, %cst_106 [2] : vector<2x8x8xf32> to vector<2x8xf32>
    %312 = vector.shape_cast %311 : vector<2x8xf32> to vector<2x8x1xf32>
    %313 = tpu.reciprocal %312 : vector<2x8x1xf32> -> vector<2x8x1xf32>
    %314 = vector.broadcast %313 : vector<2x8x1xf32> to vector<2x8x8xf32>
    %315 = arith.mulf %310, %314 : vector<2x8x8xf32>
    %316 = arith.truncf %315 : vector<2x8x8xf32> to vector<2x8x8xbf16>
    "tpu.trace_start"() <{level = 10 : i32, message = "bqk,bkd->bqd"}> : () -> ()
    %cst_107 = arith.constant dense<0.000000e+00> : vector<2x8x8xf32>
    %317 = tpu.matmul %316, %296, %cst_107 {dimension_numbers = #tpu.dot_dimension_numbers<[2], [1], [1], [2], [0, 0, 0, 1, 1, 2], [0], [0]>} : vector<2x8x8xbf16>, vector<2x8x8xbf16>, vector<2x8x8xf32> -> vector<2x8x8xf32>
    "tpu.trace_stop"() : () -> ()
    %318 = vector.extract_strided_slice %263 {offsets = [0, 0, 16], sizes = [2, 8, 8], strides = [1, 1, 1]} : vector<2x8x96xf32> to vector<2x8x8xf32>
    %319 = arith.truncf %318 : vector<2x8x8xf32> to vector<2x8x8xbf16>
    %320 = vector.extract_strided_slice %263 {offsets = [0, 0, 48], sizes = [2, 8, 8], strides = [1, 1, 1]} : vector<2x8x96xf32> to vector<2x8x8xf32>
    %321 = arith.truncf %320 : vector<2x8x8xf32> to vector<2x8x8xbf16>
    %322 = vector.extract_strided_slice %263 {offsets = [0, 0, 80], sizes = [2, 8, 8], strides = [1, 1, 1]} : vector<2x8x96xf32> to vector<2x8x8xf32>
    %323 = arith.truncf %322 : vector<2x8x8xf32> to vector<2x8x8xbf16>
    "tpu.trace_start"() <{level = 10 : i32, message = "bqd,bkd->bqk"}> : () -> ()
    %cst_108 = arith.constant dense<0.000000e+00> : vector<2x8x8xf32>
    %324 = tpu.matmul %319, %321, %cst_108 {dimension_numbers = #tpu.dot_dimension_numbers<[2], [2], [1], [1], [0, 0, 0, 1, 1, 1], [0], [0]>} : vector<2x8x8xbf16>, vector<2x8x8xbf16>, vector<2x8x8xf32> -> vector<2x8x8xf32>
    "tpu.trace_stop"() : () -> ()
    %c12 = arith.constant 12 : index
    %325 = memref.load %arg22[%c12] : memref<16xf32, #tpu.memory_space<smem>>
    %c13 = arith.constant 13 : index
    %326 = memref.load %arg22[%c13] : memref<16xf32, #tpu.memory_space<smem>>
    %327 = vector.broadcast %325 : f32 to vector<2x8x8xf32>
    %328 = arith.mulf %11, %327 : vector<2x8x8xf32>
    %329 = arith.addf %324, %328 : vector<2x8x8xf32>
    %330 = vector.broadcast %326 : f32 to vector<2x8x8xf32>
    %331 = arith.mulf %24, %330 : vector<2x8x8xf32>
    %332 = arith.subf %329, %331 : vector<2x8x8xf32>
    %cst_109 = arith.constant dense<0xFF800000> : vector<2x8xf32>
    %333 = vector.multi_reduction <maximumf>, %332, %cst_109 [2] : vector<2x8x8xf32> to vector<2x8xf32>
    %334 = vector.shape_cast %333 : vector<2x8xf32> to vector<2x8x1xf32>
    %335 = vector.broadcast %334 : vector<2x8x1xf32> to vector<2x8x8xf32>
    %336 = arith.subf %332, %335 : vector<2x8x8xf32>
    %337 = math.exp %336 : vector<2x8x8xf32>
    %cst_110 = arith.constant dense<0.000000e+00> : vector<2x8xf32>
    %338 = vector.multi_reduction <add>, %337, %cst_110 [2] : vector<2x8x8xf32> to vector<2x8xf32>
    %339 = vector.shape_cast %338 : vector<2x8xf32> to vector<2x8x1xf32>
    %340 = tpu.reciprocal %339 : vector<2x8x1xf32> -> vector<2x8x1xf32>
    %341 = vector.broadcast %340 : vector<2x8x1xf32> to vector<2x8x8xf32>
    %342 = arith.mulf %337, %341 : vector<2x8x8xf32>
    %343 = arith.truncf %342 : vector<2x8x8xf32> to vector<2x8x8xbf16>
    "tpu.trace_start"() <{level = 10 : i32, message = "bqk,bkd->bqd"}> : () -> ()
    %cst_111 = arith.constant dense<0.000000e+00> : vector<2x8x8xf32>
    %344 = tpu.matmul %343, %323, %cst_111 {dimension_numbers = #tpu.dot_dimension_numbers<[2], [1], [1], [2], [0, 0, 0, 1, 1, 2], [0], [0]>} : vector<2x8x8xbf16>, vector<2x8x8xbf16>, vector<2x8x8xf32> -> vector<2x8x8xf32>
    "tpu.trace_stop"() : () -> ()
    %345 = vector.extract_strided_slice %263 {offsets = [0, 0, 24], sizes = [2, 8, 8], strides = [1, 1, 1]} : vector<2x8x96xf32> to vector<2x8x8xf32>
    %346 = arith.truncf %345 : vector<2x8x8xf32> to vector<2x8x8xbf16>
    %347 = vector.extract_strided_slice %263 {offsets = [0, 0, 56], sizes = [2, 8, 8], strides = [1, 1, 1]} : vector<2x8x96xf32> to vector<2x8x8xf32>
    %348 = arith.truncf %347 : vector<2x8x8xf32> to vector<2x8x8xbf16>
    %349 = vector.extract_strided_slice %263 {offsets = [0, 0, 88], sizes = [2, 8, 8], strides = [1, 1, 1]} : vector<2x8x96xf32> to vector<2x8x8xf32>
    %350 = arith.truncf %349 : vector<2x8x8xf32> to vector<2x8x8xbf16>
    "tpu.trace_start"() <{level = 10 : i32, message = "bqd,bkd->bqk"}> : () -> ()
    %cst_112 = arith.constant dense<0.000000e+00> : vector<2x8x8xf32>
    %351 = tpu.matmul %346, %348, %cst_112 {dimension_numbers = #tpu.dot_dimension_numbers<[2], [2], [1], [1], [0, 0, 0, 1, 1, 1], [0], [0]>} : vector<2x8x8xbf16>, vector<2x8x8xbf16>, vector<2x8x8xf32> -> vector<2x8x8xf32>
    "tpu.trace_stop"() : () -> ()
    %c14 = arith.constant 14 : index
    %352 = memref.load %arg22[%c14] : memref<16xf32, #tpu.memory_space<smem>>
    %c15 = arith.constant 15 : index
    %353 = memref.load %arg22[%c15] : memref<16xf32, #tpu.memory_space<smem>>
    %354 = vector.broadcast %352 : f32 to vector<2x8x8xf32>
    %355 = arith.mulf %11, %354 : vector<2x8x8xf32>
    %356 = arith.addf %351, %355 : vector<2x8x8xf32>
    %357 = vector.broadcast %353 : f32 to vector<2x8x8xf32>
    %358 = arith.mulf %24, %357 : vector<2x8x8xf32>
    %359 = arith.subf %356, %358 : vector<2x8x8xf32>
    %cst_113 = arith.constant dense<0xFF800000> : vector<2x8xf32>
    %360 = vector.multi_reduction <maximumf>, %359, %cst_113 [2] : vector<2x8x8xf32> to vector<2x8xf32>
    %361 = vector.shape_cast %360 : vector<2x8xf32> to vector<2x8x1xf32>
    %362 = vector.broadcast %361 : vector<2x8x1xf32> to vector<2x8x8xf32>
    %363 = arith.subf %359, %362 : vector<2x8x8xf32>
    %364 = math.exp %363 : vector<2x8x8xf32>
    %cst_114 = arith.constant dense<0.000000e+00> : vector<2x8xf32>
    %365 = vector.multi_reduction <add>, %364, %cst_114 [2] : vector<2x8x8xf32> to vector<2x8xf32>
    %366 = vector.shape_cast %365 : vector<2x8xf32> to vector<2x8x1xf32>
    %367 = tpu.reciprocal %366 : vector<2x8x1xf32> -> vector<2x8x1xf32>
    %368 = vector.broadcast %367 : vector<2x8x1xf32> to vector<2x8x8xf32>
    %369 = arith.mulf %364, %368 : vector<2x8x8xf32>
    %370 = arith.truncf %369 : vector<2x8x8xf32> to vector<2x8x8xbf16>
    "tpu.trace_start"() <{level = 10 : i32, message = "bqk,bkd->bqd"}> : () -> ()
    %cst_115 = arith.constant dense<0.000000e+00> : vector<2x8x8xf32>
    %371 = tpu.matmul %370, %350, %cst_115 {dimension_numbers = #tpu.dot_dimension_numbers<[2], [1], [1], [2], [0, 0, 0, 1, 1, 2], [0], [0]>} : vector<2x8x8xbf16>, vector<2x8x8xbf16>, vector<2x8x8xf32> -> vector<2x8x8xf32>
    "tpu.trace_stop"() : () -> ()
    %372 = tpu.concatenate %290, %317, %344, %371 in 2 : vector<2x8x8xf32>, vector<2x8x8xf32>, vector<2x8x8xf32>, vector<2x8x8xf32> -> vector<2x8x32xf32>
    %373 = vector.shape_cast %372 : vector<2x8x32xf32> to vector<16x32xf32>
    %374 = arith.truncf %373 : vector<16x32xf32> to vector<16x32xbf16>
    %c1_116 = arith.constant 1 : index
    %c0_117 = arith.constant 0 : index
    %c0_118 = arith.constant 0 : index
    %375 = vector.load %arg11[%c1_116, %c0_117, %c0_118] : memref<2x32x32xbf16, #tpu.memory_space<vmem>>, vector<1x32x32xbf16>
    %376 = vector.shape_cast %375 : vector<1x32x32xbf16> to vector<32x32xbf16>
    %cst_119 = arith.constant dense<0.000000e+00> : vector<16x32xf32>
    %377 = tpu.matmul %374, %376, %cst_119 {dimension_numbers = #tpu.dot_dimension_numbers<[1], [0], [0], [1], [0, 0, 1, 1], [], []>} : vector<16x32xbf16>, vector<32x32xbf16>, vector<16x32xf32> -> vector<16x32xf32>
    %378 = arith.addf %230, %377 : vector<16x32xf32>
    %c1_120 = arith.constant 1 : index
    %c0_121 = arith.constant 0 : index
    %c0_122 = arith.constant 0 : index
    %379 = vector.load %arg12[%c1_120, %c0_121, %c0_122] : memref<2x1x32xf32, #tpu.memory_space<vmem>>, vector<1x1x32xf32>
    %380 = vector.shape_cast %379 : vector<1x1x32xf32> to vector<1x32xf32>
    %381 = vector.broadcast %380 : vector<1x32xf32> to vector<16x32xf32>
    %382 = arith.addf %378, %381 : vector<16x32xf32>
    %c1_123 = arith.constant 1 : index
    %c0_124 = arith.constant 0 : index
    %c0_125 = arith.constant 0 : index
    %383 = vector.load %arg14[%c1_123, %c0_124, %c0_125] : memref<2x2x32xf32, #tpu.memory_space<vmem>>, vector<1x2x32xf32>
    %384 = vector.shape_cast %383 : vector<1x2x32xf32> to vector<2x32xf32>
    %cst_126 = arith.constant dense<0.000000e+00> : vector<16xf32>
    %385 = vector.multi_reduction <add>, %382, %cst_126 [1] : vector<16x32xf32> to vector<16xf32>
    %386 = vector.shape_cast %385 : vector<16xf32> to vector<16x1xf32>
    %cst_127 = arith.constant 3.200000e+01 : f32
    %387 = vector.broadcast %cst_127 : f32 to vector<16x1xf32>
    %388 = arith.divf %386, %387 : vector<16x1xf32>
    %389 = vector.broadcast %388 : vector<16x1xf32> to vector<16x32xf32>
    %390 = arith.subf %382, %389 : vector<16x32xf32>
    %391 = arith.mulf %390, %390 : vector<16x32xf32>
    %cst_128 = arith.constant dense<0.000000e+00> : vector<16xf32>
    %392 = vector.multi_reduction <add>, %391, %cst_128 [1] : vector<16x32xf32> to vector<16xf32>
    %393 = vector.shape_cast %392 : vector<16xf32> to vector<16x1xf32>
    %cst_129 = arith.constant 3.200000e+01 : f32
    %394 = vector.broadcast %cst_129 : f32 to vector<16x1xf32>
    %395 = arith.divf %393, %394 : vector<16x1xf32>
    %cst_130 = arith.constant 9.99999974E-6 : f32
    %396 = vector.broadcast %cst_130 : f32 to vector<16x1xf32>
    %397 = arith.addf %395, %396 : vector<16x1xf32>
    %398 = math.rsqrt %397 : vector<16x1xf32>
    %399 = vector.broadcast %398 : vector<16x1xf32> to vector<16x32xf32>
    %400 = arith.mulf %390, %399 : vector<16x32xf32>
    %401 = vector.extract_strided_slice %384 {offsets = [0, 0], sizes = [1, 32], strides = [1, 1]} : vector<2x32xf32> to vector<1x32xf32>
    %402 = vector.broadcast %401 : vector<1x32xf32> to vector<16x32xf32>
    %403 = arith.mulf %400, %402 : vector<16x32xf32>
    %404 = vector.extract_strided_slice %384 {offsets = [1, 0], sizes = [1, 32], strides = [1, 1]} : vector<2x32xf32> to vector<1x32xf32>
    %405 = vector.broadcast %404 : vector<1x32xf32> to vector<16x32xf32>
    %406 = arith.addf %403, %405 : vector<16x32xf32>
    %407 = arith.truncf %406 : vector<16x32xf32> to vector<16x32xbf16>
    %c1_131 = arith.constant 1 : index
    %c0_132 = arith.constant 0 : index
    %c0_133 = arith.constant 0 : index
    %408 = vector.load %arg15[%c1_131, %c0_132, %c0_133] : memref<2x32x64xbf16, #tpu.memory_space<vmem>>, vector<1x32x64xbf16>
    %409 = vector.shape_cast %408 : vector<1x32x64xbf16> to vector<32x64xbf16>
    %cst_134 = arith.constant dense<0.000000e+00> : vector<16x64xf32>
    %410 = tpu.matmul %407, %409, %cst_134 {dimension_numbers = #tpu.dot_dimension_numbers<[1], [0], [0], [1], [0, 0, 1, 1], [], []>} : vector<16x32xbf16>, vector<32x64xbf16>, vector<16x64xf32> -> vector<16x64xf32>
    %c1_135 = arith.constant 1 : index
    %c0_136 = arith.constant 0 : index
    %c0_137 = arith.constant 0 : index
    %411 = vector.load %arg16[%c1_135, %c0_136, %c0_137] : memref<2x1x64xf32, #tpu.memory_space<vmem>>, vector<1x1x64xf32>
    %412 = vector.shape_cast %411 : vector<1x1x64xf32> to vector<1x64xf32>
    %413 = vector.broadcast %412 : vector<1x64xf32> to vector<16x64xf32>
    %414 = arith.addf %410, %413 : vector<16x64xf32>
    %415 = arith.mulf %414, %414 : vector<16x64xf32>
    %416 = arith.mulf %414, %415 : vector<16x64xf32>
    %cst_138 = arith.constant 4.471500e-02 : f32
    %417 = vector.broadcast %cst_138 : f32 to vector<16x64xf32>
    %418 = arith.mulf %417, %416 : vector<16x64xf32>
    %419 = arith.addf %414, %418 : vector<16x64xf32>
    %cst_139 = arith.constant 0.797884583 : f32
    %420 = vector.broadcast %cst_139 : f32 to vector<16x64xf32>
    %421 = arith.mulf %420, %419 : vector<16x64xf32>
    %422 = math.tanh %421 : vector<16x64xf32>
    %cst_140 = arith.constant 1.000000e+00 : f32
    %423 = vector.broadcast %cst_140 : f32 to vector<16x64xf32>
    %424 = arith.addf %423, %422 : vector<16x64xf32>
    %cst_141 = arith.constant 5.000000e-01 : f32
    %425 = vector.broadcast %cst_141 : f32 to vector<16x64xf32>
    %426 = arith.mulf %425, %424 : vector<16x64xf32>
    %427 = arith.mulf %414, %426 : vector<16x64xf32>
    %428 = arith.truncf %427 : vector<16x64xf32> to vector<16x64xbf16>
    %c1_142 = arith.constant 1 : index
    %c0_143 = arith.constant 0 : index
    %c0_144 = arith.constant 0 : index
    %429 = vector.load %arg17[%c1_142, %c0_143, %c0_144] : memref<2x64x32xbf16, #tpu.memory_space<vmem>>, vector<1x64x32xbf16>
    %430 = vector.shape_cast %429 : vector<1x64x32xbf16> to vector<64x32xbf16>
    %cst_145 = arith.constant dense<0.000000e+00> : vector<16x32xf32>
    %431 = tpu.matmul %428, %430, %cst_145 {dimension_numbers = #tpu.dot_dimension_numbers<[1], [0], [0], [1], [0, 0, 1, 1], [], []>} : vector<16x64xbf16>, vector<64x32xbf16>, vector<16x32xf32> -> vector<16x32xf32>
    %432 = arith.addf %382, %431 : vector<16x32xf32>
    %c1_146 = arith.constant 1 : index
    %c0_147 = arith.constant 0 : index
    %c0_148 = arith.constant 0 : index
    %433 = vector.load %arg18[%c1_146, %c0_147, %c0_148] : memref<2x1x32xf32, #tpu.memory_space<vmem>>, vector<1x1x32xf32>
    %434 = vector.shape_cast %433 : vector<1x1x32xf32> to vector<1x32xf32>
    %435 = vector.broadcast %434 : vector<1x32xf32> to vector<16x32xf32>
    %436 = arith.addf %432, %435 : vector<16x32xf32>
    %c0_149 = arith.constant 0 : index
    %c0_150 = arith.constant 0 : index
    %437 = vector.load %arg19[%c0_149, %c0_150] : memref<2x32xf32, #tpu.memory_space<vmem>>, vector<2x32xf32>
    %cst_151 = arith.constant dense<0.000000e+00> : vector<16xf32>
    %438 = vector.multi_reduction <add>, %436, %cst_151 [1] : vector<16x32xf32> to vector<16xf32>
    %439 = vector.shape_cast %438 : vector<16xf32> to vector<16x1xf32>
    %cst_152 = arith.constant 3.200000e+01 : f32
    %440 = vector.broadcast %cst_152 : f32 to vector<16x1xf32>
    %441 = arith.divf %439, %440 : vector<16x1xf32>
    %442 = vector.broadcast %441 : vector<16x1xf32> to vector<16x32xf32>
    %443 = arith.subf %436, %442 : vector<16x32xf32>
    %444 = arith.mulf %443, %443 : vector<16x32xf32>
    %cst_153 = arith.constant dense<0.000000e+00> : vector<16xf32>
    %445 = vector.multi_reduction <add>, %444, %cst_153 [1] : vector<16x32xf32> to vector<16xf32>
    %446 = vector.shape_cast %445 : vector<16xf32> to vector<16x1xf32>
    %cst_154 = arith.constant 3.200000e+01 : f32
    %447 = vector.broadcast %cst_154 : f32 to vector<16x1xf32>
    %448 = arith.divf %446, %447 : vector<16x1xf32>
    %cst_155 = arith.constant 9.99999974E-6 : f32
    %449 = vector.broadcast %cst_155 : f32 to vector<16x1xf32>
    %450 = arith.addf %448, %449 : vector<16x1xf32>
    %451 = math.rsqrt %450 : vector<16x1xf32>
    %452 = vector.broadcast %451 : vector<16x1xf32> to vector<16x32xf32>
    %453 = arith.mulf %443, %452 : vector<16x32xf32>
    %454 = vector.extract_strided_slice %437 {offsets = [0, 0], sizes = [1, 32], strides = [1, 1]} : vector<2x32xf32> to vector<1x32xf32>
    %455 = vector.broadcast %454 : vector<1x32xf32> to vector<16x32xf32>
    %456 = arith.mulf %453, %455 : vector<16x32xf32>
    %457 = vector.extract_strided_slice %437 {offsets = [1, 0], sizes = [1, 32], strides = [1, 1]} : vector<2x32xf32> to vector<1x32xf32>
    %458 = vector.broadcast %457 : vector<1x32xf32> to vector<16x32xf32>
    %459 = arith.addf %456, %458 : vector<16x32xf32>
    %460 = arith.truncf %459 : vector<16x32xf32> to vector<16x32xbf16>
    %c0_156 = arith.constant 0 : index
    %c0_157 = arith.constant 0 : index
    %461 = vector.load %arg20[%c0_156, %c0_157] : memref<32x128xbf16, #tpu.memory_space<vmem>>, vector<32x128xbf16>
    %cst_158 = arith.constant dense<0.000000e+00> : vector<16x128xf32>
    %462 = tpu.matmul %460, %461, %cst_158 {dimension_numbers = #tpu.dot_dimension_numbers<[1], [0], [0], [1], [0, 0, 1, 1], [], []>} : vector<16x32xbf16>, vector<32x128xbf16>, vector<16x128xf32> -> vector<16x128xf32>
    %c0_159 = arith.constant 0 : index
    %c0_160 = arith.constant 0 : index
    %463 = vector.load %arg21[%c0_159, %c0_160] : memref<1x128xf32, #tpu.memory_space<vmem>>, vector<1x128xf32>
    %464 = vector.broadcast %463 : vector<1x128xf32> to vector<16x128xf32>
    %465 = arith.addf %462, %464 : vector<16x128xf32>
    %466 = vector.shape_cast %465 : vector<16x128xf32> to vector<2x8x128xf32>
    %c0_161 = arith.constant 0 : index
    %c0_162 = arith.constant 0 : index
    %c0_163 = arith.constant 0 : index
    %467 = vector.load %arg23[%c0_161, %c0_162, %c0_163] : memref<2x8x128xf32, #tpu.memory_space<vmem>>, vector<2x8x128xf32>
    tpu.vector_store %arg23[%c0_161, %c0_162, %c0_163], %466 {strides = array<i32>} : memref<2x8x128xf32, #tpu.memory_space<vmem>>, vector<2x8x128xf32>,
    %468 = tpu.iota {dimensions = array<i32: 1>} : vector<16x128xi32>
    %c21_i32 = arith.constant 21 : i32
    %469 = vector.broadcast %c21_i32 : i32 to vector<16x128xi32>
    %470 = arith.cmpi slt, %468, %469 : vector<16x128xi32>
    %cst_164 = arith.constant -1.000000e+30 : f32
    %471 = vector.broadcast %cst_164 : f32 to vector<16x128xf32>
    %472 = arith.select %470, %465, %471 : vector<16x128xi1>, vector<16x128xf32>
    %cst_165 = arith.constant dense<0xFF800000> : vector<16xf32>
    %473 = vector.multi_reduction <maximumf>, %472, %cst_165 [1] : vector<16x128xf32> to vector<16xf32>
    %474 = vector.shape_cast %473 : vector<16xf32> to vector<16x1xf32>
    %475 = vector.broadcast %474 : vector<16x1xf32> to vector<16x128xf32>
    %476 = arith.subf %472, %475 : vector<16x128xf32>
    %477 = math.exp %476 : vector<16x128xf32>
    %cst_166 = arith.constant dense<0.000000e+00> : vector<16xf32>
    %478 = vector.multi_reduction <add>, %477, %cst_166 [1] : vector<16x128xf32> to vector<16xf32>
    %479 = vector.shape_cast %478 : vector<16xf32> to vector<16x1xf32>
    %480 = math.log %479 : vector<16x1xf32>
    %481 = arith.addf %480, %474 : vector<16x1xf32>
    %c0_167 = arith.constant 0 : index
    %c0_168 = arith.constant 0 : index
    %c0_169 = arith.constant 0 : index
    %482 = vector.load %arg5[%c0_167, %c0_168, %c0_169] : memref<2x8x1xi32, #tpu.memory_space<vmem>>, vector<2x8x1xi32>
    %483 = vector.shape_cast %482 : vector<2x8x1xi32> to vector<16x1xi32>
    %484 = vector.broadcast %483 : vector<16x1xi32> to vector<16x128xi32>
    %485 = arith.cmpi eq, %468, %484 : vector<16x128xi32>
    %486 = arith.extui %485 : vector<16x128xi1> to vector<16x128xi32>
    %487 = arith.sitofp %486 : vector<16x128xi32> to vector<16x128xf32>
    %488 = arith.mulf %465, %487 : vector<16x128xf32>
    %cst_170 = arith.constant dense<0.000000e+00> : vector<16xf32>
    %489 = vector.multi_reduction <add>, %488, %cst_170 [1] : vector<16x128xf32> to vector<16xf32>
    %490 = vector.shape_cast %489 : vector<16xf32> to vector<16x1xf32>
    %491 = arith.subf %481, %490 : vector<16x1xf32>
    %c0_171 = arith.constant 0 : index
    %c0_172 = arith.constant 0 : index
    %c0_173 = arith.constant 0 : index
    %492 = vector.load %arg6[%c0_171, %c0_172, %c0_173] : memref<2x8x1xf32, #tpu.memory_space<vmem>>, vector<2x8x1xf32>
    %493 = vector.shape_cast %492 : vector<2x8x1xf32> to vector<16x1xf32>
    %494 = arith.mulf %491, %493 : vector<16x1xf32>
    %cst_174 = arith.constant dense<0.000000e+00> : vector<1xf32>
    %495 = vector.multi_reduction <add>, %494, %cst_174 [0] : vector<16x1xf32> to vector<1xf32>
    %496 = vector.shape_cast %495 : vector<1xf32> to vector<1x1xf32>
    %c0_175 = arith.constant 0 : index
    %c0_176 = arith.constant 0 : index
    %c0_177 = arith.constant 0 : index
    %497 = vector.load %arg24[%c0_175, %c0_176, %c0_177] : memref<1x1x1xf32, #tpu.memory_space<vmem>>, vector<1x1x1xf32>
    %498 = vector.shape_cast %497 : vector<1x1x1xf32> to vector<1x1xf32>
    %499 = vector.shape_cast %496 : vector<1x1xf32> to vector<1x1x1xf32>
    tpu.vector_store %arg24[%c0_175, %c0_176, %c0_177], %499 {strides = array<i32>} : memref<1x1x1xf32, #tpu.memory_space<vmem>>, vector<1x1x1xf32>,
    return
  }
  func.func @transform_0(%arg0: i32) -> (i32, i32, i32) {
    %c0_i32 = arith.constant 0 : i32
    %c0_i32_0 = arith.constant 0 : i32
    %c0_i32_1 = arith.constant 0 : i32
    return %arg0, %c0_i32, %c0_i32_0 : i32, i32, i32
  }
  func.func @transform_1(%arg0: i32) -> (i32, i32, i32) {
    %c0_i32 = arith.constant 0 : i32
    %c0_i32_0 = arith.constant 0 : i32
    %c0_i32_1 = arith.constant 0 : i32
    return %arg0, %c0_i32, %c0_i32_0 : i32, i32, i32
  }
  func.func @transform_2(%arg0: i32) -> (i32, i32, i32) {
    %c0_i32 = arith.constant 0 : i32
    %c0_i32_0 = arith.constant 0 : i32
    %c0_i32_1 = arith.constant 0 : i32
    return %arg0, %c0_i32, %c0_i32_0 : i32, i32, i32
  }
  func.func @transform_3(%arg0: i32) -> (i32, i32, i32) {
    %c0_i32 = arith.constant 0 : i32
    %c0_i32_0 = arith.constant 0 : i32
    %c0_i32_1 = arith.constant 0 : i32
    return %arg0, %c0_i32, %c0_i32_0 : i32, i32, i32
  }
  func.func @transform_4(%arg0: i32) -> (i32, i32, i32) {
    %c0_i32 = arith.constant 0 : i32
    %c0_i32_0 = arith.constant 0 : i32
    %c0_i32_1 = arith.constant 0 : i32
    return %arg0, %c0_i32, %c0_i32_0 : i32, i32, i32
  }
  func.func @transform_5(%arg0: i32) -> (i32, i32, i32) {
    %c0_i32 = arith.constant 0 : i32
    %c0_i32_0 = arith.constant 0 : i32
    %c0_i32_1 = arith.constant 0 : i32
    return %arg0, %c0_i32, %c0_i32_0 : i32, i32, i32
  }
  func.func @transform_6(%arg0: i32) -> (i32, i32) {
    %c0_i32 = arith.constant 0 : i32
    %c0_i32_0 = arith.constant 0 : i32
    %c0_i32_1 = arith.constant 0 : i32
    return %c0_i32, %c0_i32_0 : i32, i32
  }
  func.func @transform_7(%arg0: i32) -> (i32, i32) {
    %c0_i32 = arith.constant 0 : i32
    %c0_i32_0 = arith.constant 0 : i32
    %c0_i32_1 = arith.constant 0 : i32
    return %c0_i32, %c0_i32_0 : i32, i32
  }
  func.func @transform_8(%arg0: i32) -> (i32, i32, i32) {
    %c0_i32 = arith.constant 0 : i32
    %c0_i32_0 = arith.constant 0 : i32
    %c0_i32_1 = arith.constant 0 : i32
    %c0_i32_2 = arith.constant 0 : i32
    return %c0_i32, %c0_i32_0, %c0_i32_1 : i32, i32, i32
  }
  func.func @transform_9(%arg0: i32) -> (i32, i32, i32) {
    %c0_i32 = arith.constant 0 : i32
    %c0_i32_0 = arith.constant 0 : i32
    %c0_i32_1 = arith.constant 0 : i32
    %c0_i32_2 = arith.constant 0 : i32
    return %c0_i32, %c0_i32_0, %c0_i32_1 : i32, i32, i32
  }
  func.func @transform_10(%arg0: i32) -> (i32, i32, i32) {
    %c0_i32 = arith.constant 0 : i32
    %c0_i32_0 = arith.constant 0 : i32
    %c0_i32_1 = arith.constant 0 : i32
    %c0_i32_2 = arith.constant 0 : i32
    return %c0_i32, %c0_i32_0, %c0_i32_1 : i32, i32, i32
  }
  func.func @transform_11(%arg0: i32) -> (i32, i32, i32) {
    %c0_i32 = arith.constant 0 : i32
    %c0_i32_0 = arith.constant 0 : i32
    %c0_i32_1 = arith.constant 0 : i32
    %c0_i32_2 = arith.constant 0 : i32
    return %c0_i32, %c0_i32_0, %c0_i32_1 : i32, i32, i32
  }
  func.func @transform_12(%arg0: i32) -> (i32, i32, i32) {
    %c0_i32 = arith.constant 0 : i32
    %c0_i32_0 = arith.constant 0 : i32
    %c0_i32_1 = arith.constant 0 : i32
    %c0_i32_2 = arith.constant 0 : i32
    return %c0_i32, %c0_i32_0, %c0_i32_1 : i32, i32, i32
  }
  func.func @transform_13(%arg0: i32) -> (i32, i32, i32) {
    %c0_i32 = arith.constant 0 : i32
    %c0_i32_0 = arith.constant 0 : i32
    %c0_i32_1 = arith.constant 0 : i32
    %c0_i32_2 = arith.constant 0 : i32
    return %c0_i32, %c0_i32_0, %c0_i32_1 : i32, i32, i32
  }
  func.func @transform_14(%arg0: i32) -> (i32, i32, i32) {
    %c0_i32 = arith.constant 0 : i32
    %c0_i32_0 = arith.constant 0 : i32
    %c0_i32_1 = arith.constant 0 : i32
    %c0_i32_2 = arith.constant 0 : i32
    return %c0_i32, %c0_i32_0, %c0_i32_1 : i32, i32, i32
  }
  func.func @transform_15(%arg0: i32) -> (i32, i32, i32) {
    %c0_i32 = arith.constant 0 : i32
    %c0_i32_0 = arith.constant 0 : i32
    %c0_i32_1 = arith.constant 0 : i32
    %c0_i32_2 = arith.constant 0 : i32
    return %c0_i32, %c0_i32_0, %c0_i32_1 : i32, i32, i32
  }
  func.func @transform_16(%arg0: i32) -> (i32, i32, i32) {
    %c0_i32 = arith.constant 0 : i32
    %c0_i32_0 = arith.constant 0 : i32
    %c0_i32_1 = arith.constant 0 : i32
    %c0_i32_2 = arith.constant 0 : i32
    return %c0_i32, %c0_i32_0, %c0_i32_1 : i32, i32, i32
  }
  func.func @transform_17(%arg0: i32) -> (i32, i32, i32) {
    %c0_i32 = arith.constant 0 : i32
    %c0_i32_0 = arith.constant 0 : i32
    %c0_i32_1 = arith.constant 0 : i32
    %c0_i32_2 = arith.constant 0 : i32
    return %c0_i32, %c0_i32_0, %c0_i32_1 : i32, i32, i32
  }
  func.func @transform_18(%arg0: i32) -> (i32, i32) {
    %c0_i32 = arith.constant 0 : i32
    %c0_i32_0 = arith.constant 0 : i32
    %c0_i32_1 = arith.constant 0 : i32
    return %c0_i32, %c0_i32_0 : i32, i32
  }
  func.func @transform_19(%arg0: i32) -> (i32, i32) {
    %c0_i32 = arith.constant 0 : i32
    %c0_i32_0 = arith.constant 0 : i32
    %c0_i32_1 = arith.constant 0 : i32
    return %c0_i32, %c0_i32_0 : i32, i32
  }
  func.func @transform_20(%arg0: i32) -> (i32, i32) {
    %c0_i32 = arith.constant 0 : i32
    %c0_i32_0 = arith.constant 0 : i32
    %c0_i32_1 = arith.constant 0 : i32
    return %c0_i32, %c0_i32_0 : i32, i32
  }
  func.func @transform_21(%arg0: i32) -> i32 {
    %c0_i32 = arith.constant 0 : i32
    %c0_i32_0 = arith.constant 0 : i32
    return %c0_i32 : i32
  }
  func.func @transform_22(%arg0: i32) -> (i32, i32, i32) {
    %c0_i32 = arith.constant 0 : i32
    %c0_i32_0 = arith.constant 0 : i32
    %c0_i32_1 = arith.constant 0 : i32
    return %arg0, %c0_i32, %c0_i32_0 : i32, i32, i32
  }
  func.func @transform_23(%arg0: i32) -> (i32, i32, i32) {
    %c0_i32 = arith.constant 0 : i32
    %c0_i32_0 = arith.constant 0 : i32
    %c0_i32_1 = arith.constant 0 : i32
    return %arg0, %c0_i32, %c0_i32_0 : i32, i32, i32
  }
}

</mosaic_0001>

<llo_original>
// kernel: atom_transformer_mlm_forward.1
$region0: #{atom_transformer_mlm_forward.1}
  #allocation0 [shape = 'u32[]', space=smem, size = 0x4, offset = 0x4, fixed_abs, tag = 'smem constant byte address 0x4 - core index']
  #allocation1 [shape = 'u32[144,128]{1,0:T(1,128)}', space=vmem, size = 0x12000, scoped, tag = 'internal scratch']
  %s0 = inlined_call_operand.vmem [shape: f32[2,8,32], index: 0, kind: input, shape index: {}]
  %s1 = inlined_call_operand.vmem [shape: bf16[2,8,3], index: 1, kind: input, shape index: {}]
  %s2 = inlined_call_operand.vmem [shape: f32[2,8,3], index: 2, kind: input, shape index: {}]
  %s3 = inlined_call_operand.vmem [shape: bf16[2,8,8], index: 3, kind: input, shape index: {}]
  %s4 = inlined_call_operand.vmem [shape: s32[2,8,1], index: 4, kind: input, shape index: {}]
  %s5 = inlined_call_operand.vmem [shape: f32[2,8,1], index: 5, kind: input, shape index: {}]
  %s6 = inlined_call_operand.vmem [shape: bf16[3,32], index: 6, kind: input, shape index: {}]
  %s7 = inlined_call_operand.vmem [shape: f32[1,32], index: 7, kind: input, shape index: {}]
  %s8 = inlined_call_operand.vmem [shape: bf16[2,32,96], index: 8, kind: input, shape index: {}]
  %s9 = inlined_call_operand.vmem [shape: f32[2,1,96], index: 9, kind: input, shape index: {}]
  %s10 = inlined_call_operand.vmem [shape: bf16[2,32,32], index: 10, kind: input, shape index: {}]
  %s11 = inlined_call_operand.vmem [shape: f32[2,1,32], index: 11, kind: input, shape index: {}]
  %s12 = inlined_call_operand.vmem [shape: f32[2,2,32], index: 12, kind: input, shape index: {}]
  %s13 = inlined_call_operand.vmem [shape: f32[2,2,32], index: 13, kind: input, shape index: {}]
  %s14 = inlined_call_operand.vmem [shape: bf16[2,32,64], index: 14, kind: input, shape index: {}]
  %s15 = inlined_call_operand.vmem [shape: f32[2,1,64], index: 15, kind: input, shape index: {}]
  %s16 = inlined_call_operand.vmem [shape: bf16[2,64,32], index: 16, kind: input, shape index: {}]
  %s17 = inlined_call_operand.vmem [shape: f32[2,1,32], index: 17, kind: input, shape index: {}]
  %s18 = inlined_call_operand.vmem [shape: f32[2,32], index: 18, kind: input, shape index: {}]
  %s19 = inlined_call_operand.vmem [shape: bf16[32,128], index: 19, kind: input, shape index: {}]
  %s20 = inlined_call_operand.vmem [shape: f32[1,128], index: 20, kind: input, shape index: {}]
  %s21 = inlined_call_operand.vmem [shape: f32[16], index: 21, kind: input, shape index: {}]
  %s22 = inlined_call_operand.hbm [shape: f32[2,8,128], index: 22, kind: output, shape index: {0}]
  %s23 = inlined_call_operand.hbm [shape: f32[1,1,1], index: 23, kind: output, shape index: {1}]
  %24 = xla_tuple %s22, %s23
  %s25 = sld [smem:[#allocation0]]
  $region110: #{atom_transformer_mlm_forward.1} parent=0
    _
  %s27 = ssub.s32 1, %s25
  %s28 = scalar_select 0, %s27, %s25
  $region1: #{atom_transformer_mlm_forward.1} parent=0
    #allocation2 [shape = 'u8[512]{0}', space=smem, size = 0x200, scoped, tag = 'input window, operand 21, single buffered']
    #allocation3 [shape = 's32[1]{0}', space=sflag, size = 0x4, scoped, tag = 'scoped memory for atom_transformer_mlm_forward.1']
    #allocation4 [shape = 's32[1]{0}', space=sflag, size = 0x4, scoped, tag = 'scoped memory for atom_transformer_mlm_forward.1']
    #allocation5 [shape = 'u8[8192]{0}', space=vmem, size = 0x2000, scoped, tag = 'output window, operand 0, single buffered']
    #allocation6 [shape = 'u8[512]{0}', space=vmem, size = 0x400, scoped, tag = 'output window, operand 1, single buffered']
    #allocation7 [shape = 's32[1]{0}', space=sflag, size = 0x4, scoped, tag = 'scoped memory for atom_transformer_mlm_forward.1']
    %29 = vsyncpa [#allocation4], 0
    %30 = vsyncpa [#allocation3], 0
    %31 = vsyncpa [#allocation7], 0
    // Predicated region
    $region2: #{atom_transformer_mlm_forward.1} parent=1 // pred_check
      _
    $region3: #{atom_transformer_mlm_forward.1} parent=1 // pred_check_branch
      %33 = sbr.rel (0) target = $region5
    $region4: #{atom_transformer_mlm_forward.1} parent=1 // pred_region
      _
    $region5: #{atom_transformer_mlm_forward.1} parent=1 // pred_fallthru
      _
    // Predicated region
    $region6: #{atom_transformer_mlm_forward.1} parent=1 // pred_check
      _
    $region7: #{atom_transformer_mlm_forward.1} parent=1 // pred_check_branch
      %35 = sbr.rel (0) target = $region9
    $region8: #{atom_transformer_mlm_forward.1} parent=1 // pred_region
      _
    $region9: #{atom_transformer_mlm_forward.1} parent=1 // pred_fallthru
      _
    // Predicated region
    $region10: #{atom_transformer_mlm_forward.1} parent=1 // pred_check
      _
    $region11: #{atom_transformer_mlm_forward.1} parent=1 // pred_check_branch
      %37 = sbr.rel (0) target = $region13
    $region12: #{atom_transformer_mlm_forward.1} parent=1 // pred_region
      _
    $region13: #{atom_transformer_mlm_forward.1} parent=1 // pred_fallthru
      _
    // Predicated region
    $region14: #{atom_transformer_mlm_forward.1} parent=1 // pred_check
      _
    $region15: #{atom_transformer_mlm_forward.1} parent=1 // pred_check_branch
      %39 = sbr.rel (0) target = $region17
    $region16: #{atom_transformer_mlm_forward.1} parent=1 // pred_region
      _
    $region17: #{atom_transformer_mlm_forward.1} parent=1 // pred_fallthru
      _
    // Predicated region
    $region18: #{atom_transformer_mlm_forward.1} parent=1 // pred_check
      _
    $region19: #{atom_transformer_mlm_forward.1} parent=1 // pred_check_branch
      %41 = sbr.rel (0) target = $region21
    $region20: #{atom_transformer_mlm_forward.1} parent=1 // pred_region
      _
    $region21: #{atom_transformer_mlm_forward.1} parent=1 // pred_fallthru
      _
    // Predicated region
    $region22: #{atom_transformer_mlm_forward.1} parent=1 // pred_check
      _
    $region23: #{atom_transformer_mlm_forward.1} parent=1 // pred_check_branch
      %43 = sbr.rel (0) target = $region25
    $region24: #{atom_transformer_mlm_forward.1} parent=1 // pred_region
      _
    $region25: #{atom_transformer_mlm_forward.1} parent=1 // pred_fallthru
      _
    // Predicated region
    $region26: #{atom_transformer_mlm_forward.1} parent=1 // pred_check
      _
    $region27: #{atom_transformer_mlm_forward.1} parent=1 // pred_check_branch
      %45 = sbr.rel (0) target = $region29
    $region28: #{atom_transformer_mlm_forward.1} parent=1 // pred_region
      _
    $region29: #{atom_transformer_mlm_forward.1} parent=1 // pred_fallthru
      _
    // Predicated region
    $region30: #{atom_transformer_mlm_forward.1} parent=1 // pred_check
      _
    $region31: #{atom_transformer_mlm_forward.1} parent=1 // pred_check_branch
      %47 = sbr.rel (0) target = $region33
    $region32: #{atom_transformer_mlm_forward.1} parent=1 // pred_region
      _
    $region33: #{atom_transformer_mlm_forward.1} parent=1 // pred_fallthru
      _
    // Predicated region
    $region34: #{atom_transformer_mlm_forward.1} parent=1 // pred_check
      _
    $region35: #{atom_transformer_mlm_forward.1} parent=1 // pred_check_branch
      %49 = sbr.rel (0) target = $region37
    $region36: #{atom_transformer_mlm_forward.1} parent=1 // pred_region
      _
    $region37: #{atom_transformer_mlm_forward.1} parent=1 // pred_fallthru
      _
    // Predicated region
    $region38: #{atom_transformer_mlm_forward.1} parent=1 // pred_check
      _
    $region39: #{atom_transformer_mlm_forward.1} parent=1 // pred_check_branch
      %51 = sbr.rel (0) target = $region41
    $region40: #{atom_transformer_mlm_forward.1} parent=1 // pred_region
      _
    $region41: #{atom_transformer_mlm_forward.1} parent=1 // pred_fallthru
      _
    // Predicated region
    $region42: #{atom_transformer_mlm_forward.1} parent=1 // pred_check
      _
    $region43: #{atom_transformer_mlm_forward.1} parent=1 // pred_check_branch
      %53 = sbr.rel (0) target = $region45
    $region44: #{atom_transformer_mlm_forward.1} parent=1 // pred_region
      _
    $region45: #{atom_transformer_mlm_forward.1} parent=1 // pred_fallthru
      _
    // Predicated region
    $region46: #{atom_transformer_mlm_forward.1} parent=1 // pred_check
      _
    $region47: #{atom_transformer_mlm_forward.1} parent=1 // pred_check_branch
      %55 = sbr.rel (0) target = $region49
    $region48: #{atom_transformer_mlm_forward.1} parent=1 // pred_region
      _
    $region49: #{atom_transformer_mlm_forward.1} parent=1 // pred_fallthru
      _
    // Predicated region
    $region50: #{atom_transformer_mlm_forward.1} parent=1 // pred_check
      _
    $region51: #{atom_transformer_mlm_forward.1} parent=1 // pred_check_branch
      %57 = sbr.rel (0) target = $region53
    $region52: #{atom_transformer_mlm_forward.1} parent=1 // pred_region
      _
    $region53: #{atom_transformer_mlm_forward.1} parent=1 // pred_fallthru
      _
    // Predicated region
    $region54: #{atom_transformer_mlm_forward.1} parent=1 // pred_check
      _
    $region55: #{atom_transformer_mlm_forward.1} parent=1 // pred_check_branch
      %59 = sbr.rel (0) target = $region57
    $region56: #{atom_transformer_mlm_forward.1} parent=1 // pred_region
      _
    $region57: #{atom_transformer_mlm_forward.1} parent=1 // pred_fallthru
      _
    // Predicated region
    $region58: #{atom_transformer_mlm_forward.1} parent=1 // pred_check
      _
    $region59: #{atom_transformer_mlm_forward.1} parent=1 // pred_check_branch
      %61 = sbr.rel (0) target = $region61
    $region60: #{atom_transformer_mlm_forward.1} parent=1 // pred_region
      _
    $region61: #{atom_transformer_mlm_forward.1} parent=1 // pred_fallthru
      _
    // Predicated region
    $region62: #{atom_transformer_mlm_forward.1} parent=1 // pred_check
      _
    $region63: #{atom_transformer_mlm_forward.1} parent=1 // pred_check_branch
      %63 = sbr.rel (0) target = $region65
    $region64: #{atom_transformer_mlm_forward.1} parent=1 // pred_region
      _
    $region65: #{atom_transformer_mlm_forward.1} parent=1 // pred_fallthru
      _
    // Predicated region
    $region66: #{atom_transformer_mlm_forward.1} parent=1 // pred_check
      _
    $region67: #{atom_transformer_mlm_forward.1} parent=1 // pred_check_branch
      %65 = sbr.rel (0) target = $region69
    $region68: #{atom_transformer_mlm_forward.1} parent=1 // pred_region
      _
    $region69: #{atom_transformer_mlm_forward.1} parent=1 // pred_fallthru
      _
    // Predicated region
    $region70: #{atom_transformer_mlm_forward.1} parent=1 // pred_check
      _
    $region71: #{atom_transformer_mlm_forward.1} parent=1 // pred_check_branch
      %67 = sbr.rel (0) target = $region73
    $region72: #{atom_transformer_mlm_forward.1} parent=1 // pred_region
      _
    $region73: #{atom_transformer_mlm_forward.1} parent=1 // pred_fallthru
      _
    // Predicated region
    $region74: #{atom_transformer_mlm_forward.1} parent=1 // pred_check
      _
    $region75: #{atom_transformer_mlm_forward.1} parent=1 // pred_check_branch
      %69 = sbr.rel (0) target = $region77
    $region76: #{atom_transformer_mlm_forward.1} parent=1 // pred_region
      _
    $region77: #{atom_transformer_mlm_forward.1} parent=1 // pred_fallthru
      _
    // Predicated region
    $region78: #{atom_transformer_mlm_forward.1} parent=1 // pred_check
      _
    $region79: #{atom_transformer_mlm_forward.1} parent=1 // pred_check_branch
      %71 = sbr.rel (0) target = $region81
    $region80: #{atom_transformer_mlm_forward.1} parent=1 // pred_region
      _
    $region81: #{atom_transformer_mlm_forward.1} parent=1 // pred_fallthru
      _
    // Predicated region
    $region82: #{atom_transformer_mlm_forward.1} parent=1 // pred_check
      _
    $region83: #{atom_transformer_mlm_forward.1} parent=1 // pred_check_branch
      %73 = sbr.rel (0) target = $region85
    $region84: #{atom_transformer_mlm_forward.1} parent=1 // pred_region
      _
    $region85: #{atom_transformer_mlm_forward.1} parent=1 // pred_fallthru
      _
    // Predicated region
    $region86: #{atom_transformer_mlm_forward.1} parent=1 // pred_check
      _
    $region87: #{atom_transformer_mlm_forward.1} parent=1 // pred_check_branch
      %75 = sbr.rel (0) target = $region89
    $region88: #{atom_transformer_mlm_forward.1} parent=1 // pred_region
      %s77 = ssub.s32 16, 16
      %78 = vsyncadd [#allocation4], %s77
      %s80 = sshll.u32 %s21, 4
      %s81 = int_to_ptr.vmem [resolvable:$true] %s80
      %83 = dma.vmem_to_smem %s81, 16, [#allocation2], [#allocation4]
    $region89: #{atom_transformer_mlm_forward.1} parent=1 // pred_fallthru
      _
    // Predicated region
    $region90: #{atom_transformer_mlm_forward.1} parent=1 // pred_check
      _
    $region91: #{atom_transformer_mlm_forward.1} parent=1 // pred_check_branch
      %85 = sbr.rel (0) target = $region93
    $region92: #{atom_transformer_mlm_forward.1} parent=1 // pred_region
      %86 = dma.done [#allocation4], 16
    $region93: #{atom_transformer_mlm_forward.1} parent=1 // pred_fallthru
      _
    %87 = sfence
    %v89 = vld [vmem:[%s0] sm:$0xff]
    %v90 = vld [vmem:[%s0 + $0x8] sm:$0xff]
    %v91 = vld [vmem:[%s1] sm:$0xf]
    %v92 = vld [vmem:[%s1 + $0x4] sm:$0xf]
    %v93 = vld [vmem:[%s6] sm:$0x3]
    %v96 = vunpack.c.l.b16 %v91
    %v97 = vunpack.c.l.b16 %v92
    %v98 = vpack.c.b16 %v97, %v96
    %vm99 = vcmask 23552
    %v101 = vsel %vm99, %v98, 0
    %vm103 = vcmask 1040384
    %vm104 = vcmask 1041408
    %v105 = vsel %vm103, 4294967295, 65535
    %v106 = vsel %vm104, %v105, 0
    %v108 = vand.u32 %v93, %v106
    %110 = vmatprep.subr.bf16.mxu0 0
    %111 = vmatpush1.bf16.msra.mxu0 %v108
    %112 = vmatprep.subr.bf16.mxu0 0
    %113 = vmatpush1.bf16.msra.mxu0 0
    %114 = vmatprep.subr.bf16.mxu0 0
    %115 = vmatpush1.bf16.msra.mxu0 0
    %116 = vmatprep.subr.bf16.mxu0 0
    %117 = vmatpush1.bf16.msra.mxu0 0
    %118 = vmatprep.subr.bf16.mxu0 0
    %119 = vmatpush1.bf16.msra.mxu0 0
    %120 = vmatprep.subr.bf16.mxu0 0
    %121 = vmatpush1.bf16.msra.mxu0 0
    %122 = vmatprep.subr.bf16.mxu0 0
    %123 = vmatpush1.bf16.msra.mxu0 0
    %124 = vmatprep.subr.bf16.mxu0 0
    %125 = vmatpush1.bf16.msra.mxu0 0
    %126 = vmatprep.subr.bf16.mxu0 0
    %127 = vmatpush1.bf16.msra.mxu0 0
    %128 = vmatprep.subr.bf16.mxu0 0
    %129 = vmatpush1.bf16.msra.mxu0 0
    %130 = vmatprep.subr.bf16.mxu0 0
    %131 = vmatpush1.bf16.msra.mxu0 0
    %132 = vmatprep.subr.bf16.mxu0 0
    %133 = vmatpush1.bf16.msra.mxu0 0
    %134 = vmatprep.subr.bf16.mxu0 0
    %135 = vmatpush1.bf16.msra.mxu0 0
    %136 = vmatprep.subr.bf16.mxu0 0
    %137 = vmatpush1.bf16.msra.mxu0 0
    %138 = vmatprep.subr.bf16.mxu0 0
    %139 = vmatpush1.bf16.msra.mxu0 0
    %140 = vmatprep.subr.bf16.mxu0 0
    %141 = vmatpush1.bf16.msra.mxu0 0
    %142 = vmatprep.mubr.bf16.mxu0 0
    %143 = vmatmul.mubr.bf16.gmra.mrb[0].mxu0 %v101
    %v144 = vpop.f32.mrb[0].mxu0
    %v145 = vadd.f32 0.0, %v144
    %v146 = vpop.f32.mrb[0].mxu0
    %v147 = vpop.f32.mrb[0].mxu0
    %v148 = vadd.f32 0.0, %v147
    %v149 = vpop.f32.mrb[0].mxu0
    %150 = vdwg.mxu0
    %v151 = vadd.f32 %v89, %v145
    %v152 = vadd.f32 %v90, %v148
    %v153 = vld [vmem:[%s7] sm:$0x1]
    %v155 = vlaneseq
    %v156 = vshrl.u32 %v155, 7
    %v157 = vsub.s32 0, %v156
    %v158 = vrot.slane %v153, %v157
    %v160 = vadd.f32 %v151, %v158
    %v161 = vadd.f32 %v152, %v158
    %v162 = vld [vmem:[%s3] sm:$0xf]
    %v163 = vld [vmem:[%s3 + $0x4] sm:$0xf]
    %v164 = vunpack.c.l.bf16 %v162
    %v165 = vunpack.c.l.bf16 %v163
    %v166 = vld [vmem:[%s2] sm:$0xff]
    %v167 = vld [vmem:[%s2 + $0x8] sm:$0xff]
    %v168 = vmul.f32 %v166, %v166
    %v169 = vmul.f32 %v167, %v167
    %v170 = vsel %vm99, %v168, 0.0
    %171 = vadd.xlane.f32.xlu0 %v170
    %v172 = vpop.xlane.xlu0 %171
    %v173 = vsel %vm99, %v169, 0.0
    %174 = vadd.xlane.f32.xlu0 %v173
    %v175 = vpop.xlane.xlu0 %174
    %v176 = vsel %vm99, %v166, %v172
    %v177 = vsel %vm99, %v167, %v175
    %vm178 = vcmask 31744
    %v179 = vsel %vm178, %v176, 1.0
    %v180 = vsel %vm178, %v177, 1.0
    %v181 = vmul.f32 %v166, -2.0
    %v182 = vmul.f32 %v167, -2.0
    %v183 = vsel %vm99, %v181, 1.0
    %v184 = vsel %vm99, %v182, 1.0
    %v185 = vsel %vm178, %v183, %v172
    %v186 = vsel %vm178, %v184, %v175
    %vm187 = vcmask 39936
    %v189 = vsel %vm187, %v179, 0
    %v192 = vsel %vm187, %v185, 0
    %194 = vmatprep.subr.mxu0 0.0
    %195 = vmatpush1.xpose.msra.mxu0 %v192
    %196 = vmatprep.subr.mxu0 0.0
    %197 = vmatpush1.xpose.msra.mxu0 0.0
    %198 = vmatprep.subr.mxu0 0.0
    %199 = vmatpush1.xpose.msra.mxu0 0.0
    %200 = vmatprep.subr.mxu0 0.0
    %201 = vmatpush1.xpose.msra.mxu0 0.0
    %202 = vmatprep.subr.mxu0 0.0
    %203 = vmatpush1.xpose.msra.mxu0 0.0
    %204 = vmatprep.subr.mxu0 0.0
    %205 = vmatpush1.xpose.msra.mxu0 0.0
    %206 = vmatprep.subr.mxu0 0.0
    %207 = vmatpush1.xpose.msra.mxu0 0.0
    %208 = vmatprep.subr.mxu0 0.0
    %209 = vmatpush1.xpose.msra.mxu0 0.0
    %210 = vmatprep.subr.mxu0 0.0
    %211 = vmatpush1.xpose.msra.mxu0 0.0
    %212 = vmatprep.subr.mxu0 0.0
    %213 = vmatpush1.xpose.msra.mxu0 0.0
    %214 = vmatprep.subr.mxu0 0.0
    %215 = vmatpush1.xpose.msra.mxu0 0.0
    %216 = vmatprep.subr.mxu0 0.0
    %217 = vmatpush1.xpose.msra.mxu0 0.0
    %218 = vmatprep.subr.mxu0 0.0
    %219 = vmatpush1.xpose.msra.mxu0 0.0
    %220 = vmatprep.subr.mxu0 0.0
    %221 = vmatpush1.xpose.msra.mxu0 0.0
    %222 = vmatprep.subr.mxu0 0.0
    %223 = vmatpush1.xpose.msra.mxu0 0.0
    %224 = vmatprep.subr.mxu0 0.0
    %225 = vmatpush1.xpose.msra.mxu0 0.0
    %226 = vmatprep.subr.mxu0 0.0
    %227 = vmatpush1.xpose.msra.mxu0 0.0
    %228 = vmatprep.subr.mxu0 0.0
    %229 = vmatpush1.xpose.msra.mxu0 0.0
    %230 = vmatprep.subr.mxu0 0.0
    %231 = vmatpush1.xpose.msra.mxu0 0.0
    %232 = vmatprep.subr.mxu0 0.0
    %233 = vmatpush1.xpose.msra.mxu0 0.0
    %234 = vmatprep.subr.mxu0 0.0
    %235 = vmatpush1.xpose.msra.mxu0 0.0
    %236 = vmatprep.subr.mxu0 0.0
    %237 = vmatpush1.xpose.msra.mxu0 0.0
    %238 = vmatprep.subr.mxu0 0.0
    %239 = vmatpush1.xpose.msra.mxu0 0.0
    %240 = vmatprep.subr.mxu0 0.0
    %241 = vmatpush1.xpose.msra.mxu0 0.0
    %242 = vmatprep.subr.mxu0 0.0
    %243 = vmatpush1.xpose.msra.mxu0 0.0
    %244 = vmatprep.subr.mxu0 0.0
    %245 = vmatpush1.xpose.msra.mxu0 0.0
    %246 = vmatprep.subr.mxu0 0.0
    %247 = vmatpush1.xpose.msra.mxu0 0.0
    %248 = vmatprep.subr.mxu0 0.0
    %249 = vmatpush1.xpose.msra.mxu0 0.0
    %250 = vmatprep.subr.mxu0 0.0
    %251 = vmatpush1.xpose.msra.mxu0 0.0
    %252 = vmatprep.subr.mxu0 0.0
    %253 = vmatpush1.xpose.msra.mxu0 0.0
    %254 = vmatprep.subr.mxu0 0.0
    %255 = vmatpush1.xpose.msra.mxu0 0.0
    %256 = vmatprep.subr.mxu0 0.0
    %257 = vmatpush1.xpose.msra.mxu0 0.0
    %258 = vmatprep.mubr.f32.mxu0 0.0
    %259 = vmatmul.mubr.f32.gmra.mrb[0].mxu0 %v189
    %v260 = vpop.f32.mrb[0].mxu0
    %v261 = vadd.f32 0.0, %v260
    %v262 = vpop.f32.mrb[0].mxu0
    %263 = vdwg.mxu0
    %v265 = vsel %vm187, %v180, 0
    %v268 = vsel %vm187, %v186, 0
    %270 = vmatprep.subr.mxu0 0.0
    %271 = vmatpush1.xpose.msra.mxu0 %v268
    %272 = vmatprep.subr.mxu0 0.0
    %273 = vmatpush1.xpose.msra.mxu0 0.0
    %274 = vmatprep.subr.mxu0 0.0
    %275 = vmatpush1.xpose.msra.mxu0 0.0
    %276 = vmatprep.subr.mxu0 0.0
    %277 = vmatpush1.xpose.msra.mxu0 0.0
    %278 = vmatprep.subr.mxu0 0.0
    %279 = vmatpush1.xpose.msra.mxu0 0.0
    %280 = vmatprep.subr.mxu0 0.0
    %281 = vmatpush1.xpose.msra.mxu0 0.0
    %282 = vmatprep.subr.mxu0 0.0
    %283 = vmatpush1.xpose.msra.mxu0 0.0
    %284 = vmatprep.subr.mxu0 0.0
    %285 = vmatpush1.xpose.msra.mxu0 0.0
    %286 = vmatprep.subr.mxu0 0.0
    %287 = vmatpush1.xpose.msra.mxu0 0.0
    %288 = vmatprep.subr.mxu0 0.0
    %289 = vmatpush1.xpose.msra.mxu0 0.0
    %290 = vmatprep.subr.mxu0 0.0
    %291 = vmatpush1.xpose.msra.mxu0 0.0
    %292 = vmatprep.subr.mxu0 0.0
    %293 = vmatpush1.xpose.msra.mxu0 0.0
    %294 = vmatprep.subr.mxu0 0.0
    %295 = vmatpush1.xpose.msra.mxu0 0.0
    %296 = vmatprep.subr.mxu0 0.0
    %297 = vmatpush1.xpose.msra.mxu0 0.0
    %298 = vmatprep.subr.mxu0 0.0
    %299 = vmatpush1.xpose.msra.mxu0 0.0
    %300 = vmatprep.subr.mxu0 0.0
    %301 = vmatpush1.xpose.msra.mxu0 0.0
    %302 = vmatprep.subr.mxu0 0.0
    %303 = vmatpush1.xpose.msra.mxu0 0.0
    %304 = vmatprep.subr.mxu0 0.0
    %305 = vmatpush1.xpose.msra.mxu0 0.0
    %306 = vmatprep.subr.mxu0 0.0
    %307 = vmatpush1.xpose.msra.mxu0 0.0
    %308 = vmatprep.subr.mxu0 0.0
    %309 = vmatpush1.xpose.msra.mxu0 0.0
    %310 = vmatprep.subr.mxu0 0.0
    %311 = vmatpush1.xpose.msra.mxu0 0.0
    %312 = vmatprep.subr.mxu0 0.0
    %313 = vmatpush1.xpose.msra.mxu0 0.0
    %314 = vmatprep.subr.mxu0 0.0
    %315 = vmatpush1.xpose.msra.mxu0 0.0
    %316 = vmatprep.subr.mxu0 0.0
    %317 = vmatpush1.xpose.msra.mxu0 0.0
    %318 = vmatprep.subr.mxu0 0.0
    %319 = vmatpush1.xpose.msra.mxu0 0.0
    %320 = vmatprep.subr.mxu0 0.0
    %321 = vmatpush1.xpose.msra.mxu0 0.0
    %322 = vmatprep.subr.mxu0 0.0
    %323 = vmatpush1.xpose.msra.mxu0 0.0
    %324 = vmatprep.subr.mxu0 0.0
    %325 = vmatpush1.xpose.msra.mxu0 0.0
    %326 = vmatprep.subr.mxu0 0.0
    %327 = vmatpush1.xpose.msra.mxu0 0.0
    %328 = vmatprep.subr.mxu0 0.0
    %329 = vmatpush1.xpose.msra.mxu0 0.0
    %330 = vmatprep.subr.mxu0 0.0
    %331 = vmatpush1.xpose.msra.mxu0 0.0
    %332 = vmatprep.subr.mxu0 0.0
    %333 = vmatpush1.xpose.msra.mxu0 0.0
    %334 = vmatprep.mubr.f32.mxu0 0.0
    %335 = vmatmul.mubr.f32.gmra.mrb[0].mxu0 %v265
    %v336 = vpop.f32.mrb[0].mxu0
    %v337 = vadd.f32 0.0, %v336
    %v338 = vpop.f32.mrb[0].mxu0
    %339 = vdwg.mxu0
    %v340 = vmax.f32 %v261, 0.0
    %v341 = vmax.f32 %v337, 0.0
    %v342 = vrsqrt.pop %v340
    %v343 = vmul.f32 %v340, %v342
    %vm344 = vcmp.eq.f32.partialorder %v340, inf
    %v345 = vsel %vm344, %v340, %v343
    %vm346 = vcmp.eq.f32.partialorder %v340, 0.0
    %v347 = vand.u32 %v340, 2147483648
    %v348 = vsel %vm346, %v347, %v345
    %v349 = vrsqrt.pop %v341
    %v350 = vmul.f32 %v341, %v349
    %vm351 = vcmp.eq.f32.partialorder %v341, inf
    %v352 = vsel %vm351, %v341, %v350
    %vm353 = vcmp.eq.f32.partialorder %v341, 0.0
    %v354 = vand.u32 %v341, 2147483648
    %v355 = vsel %vm353, %v354, %v352
    %v356 = vld [vmem:[%s12] sm:$0x3]
    %vm357 = vcmask 261120
    %v358 = vsel %vm357, %v160, 0.0
    %359 = vadd.xlane.f32.xlu0 %v358
    %v360 = vpop.xlane.xlu0 %359
    %v361 = vsel %vm357, %v161, 0.0
    %362 = vadd.xlane.f32.xlu0 %v361
    %v363 = vpop.xlane.xlu0 %362
    %v364 = vrcp.pop 32.0
    %v365 = vmul.f32 %v360, %v364
    %v366 = vmul.f32 %v363, %v364
    %v367 = vsub.f32 %v160, %v365
    %v368 = vsub.f32 %v161, %v366
    %v369 = vmul.f32 %v367, %v367
    %v370 = vmul.f32 %v368, %v368
    %v371 = vsel %vm357, %v369, 0.0
    %372 = vadd.xlane.f32.xlu0 %v371
    %v373 = vpop.xlane.xlu0 %372
    %v374 = vsel %vm357, %v370, 0.0
    %375 = vadd.xlane.f32.xlu0 %v374
    %v376 = vpop.xlane.xlu0 %375
    %v377 = vmul.f32 %v373, %v364
    %v378 = vmul.f32 %v376, %v364
    %v379 = vadd.f32 %v377, 1e-05
    %v380 = vadd.f32 %v378, 1e-05
    %v381 = vrsqrt.pop %v379
    %v382 = vrsqrt.pop %v380
    %v383 = vmul.f32 %v367, %v381
    %v384 = vmul.f32 %v368, %v382
    %v385 = vlaneseq
    %v386 = vshrl.u32 %v385, 7
    %v387 = vsub.s32 0, %v386
    %v388 = vrot.slane %v356, %v387
    %v389 = vmul.f32 %v383, %v388
    %v390 = vmul.f32 %v384, %v388
    %v391 = vlaneseq
    %v392 = vshrl.u32 %v391, 7
    %v393 = vsub.s32 1, %v392
    %v394 = vrot.slane %v356, %v393
    %v395 = vadd.f32 %v389, %v394
    %v396 = vadd.f32 %v390, %v394
    %v397 = vpack.c.bf16 %v396, %v395
    %v398 = vld [vmem:[%s8] sm:$0xf]
    %v399 = vld [vmem:[%s8 + $0x4] sm:$0xf]
    %v400 = vld [vmem:[%s8 + $0x8] sm:$0xf]
    %v401 = vld [vmem:[%s8 + $0xc] sm:$0xf]
    %v402 = vld [vmem:[%s9] sm:$0x1]
    %v404 = vlaneseq
    %v405 = vshrl.u32 %v404, 7
    %v406 = vsub.s32 0, %v405
    %v407 = vrot.slane %v402, %v406
    %v413 = vunpack.c.l.b16 %v398
    %v414 = vunpack.c.l.b16 %v399
    %v415 = vunpack.c.l.b16 %v400
    %v416 = vunpack.c.l.b16 %v401
    %v417 = vpack.c.b16 %v414, %v413
    %v418 = vpack.c.b16 %v416, %v415
    %v422 = vsel %vm357, %v397, 0
    %424 = vmatprep.subr.bf16.mxu0 0
    %425 = vmatpush1.bf16.msra.mxu0 %v417
    %426 = vmatprep.subr.bf16.mxu0 0
    %427 = vmatpush1.bf16.msra.mxu0 %v418
    %428 = vmatprep.subr.bf16.mxu0 0
    %429 = vmatpush1.bf16.msra.mxu0 0
    %430 = vmatprep.subr.bf16.mxu0 0
    %431 = vmatpush1.bf16.msra.mxu0 0
    %432 = vmatprep.subr.bf16.mxu0 0
    %433 = vmatpush1.bf16.msra.mxu0 0
    %434 = vmatprep.subr.bf16.mxu0 0
    %435 = vmatpush1.bf16.msra.mxu0 0
    %436 = vmatprep.subr.bf16.mxu0 0
    %437 = vmatpush1.bf16.msra.mxu0 0
    %438 = vmatprep.subr.bf16.mxu0 0
    %439 = vmatpush1.bf16.msra.mxu0 0
    %440 = vmatprep.subr.bf16.mxu0 0
    %441 = vmatpush1.bf16.msra.mxu0 0
    %442 = vmatprep.subr.bf16.mxu0 0
    %443 = vmatpush1.bf16.msra.mxu0 0
    %444 = vmatprep.subr.bf16.mxu0 0
    %445 = vmatpush1.bf16.msra.mxu0 0
    %446 = vmatprep.subr.bf16.mxu0 0
    %447 = vmatpush1.bf16.msra.mxu0 0
    %448 = vmatprep.subr.bf16.mxu0 0
    %449 = vmatpush1.bf16.msra.mxu0 0
    %450 = vmatprep.subr.bf16.mxu0 0
    %451 = vmatpush1.bf16.msra.mxu0 0
    %452 = vmatprep.subr.bf16.mxu0 0
    %453 = vmatpush1.bf16.msra.mxu0 0
    %454 = vmatprep.subr.bf16.mxu0 0
    %455 = vmatpush1.bf16.msra.mxu0 0
    %456 = vmatprep.mubr.bf16.mxu0 0
    %457 = vmatmul.mubr.bf16.gmra.mrb[0].mxu0 %v422
    %v458 = vpop.f32.mrb[0].mxu0
    %v459 = vadd.f32 %v407, %v458
    %v460 = vpop.f32.mrb[0].mxu0
    %v461 = vpop.f32.mrb[0].mxu0
    %v462 = vadd.f32 %v407, %v461
    %v463 = vpop.f32.mrb[0].mxu0
    %464 = vdwg.mxu0
    %v465 = vpack.c.bf16 %v459, %v459
    %v466 = vpack.c.bf16 %v462, %v462
    %s467 = sld [smem:[#allocation2]]
    %s468 = sld [smem:[#allocation2 + $0x1]]
    %v469 = vstv %s467
    %v470 = vmul.f32 %v164, %v469
    %v471 = vmul.f32 %v165, %v469
    %473 = vrot.lane.b32.xlu0 %v465, 96
    %v474 = vpop.permute.xlu0 %473
    %vm475 = vcmask 64512
    %v477 = vsel %vm475, %v465, 0
    %v480 = vsel %vm475, %v474, 0
    %482 = vmatprep.subr.bf16.mxu0 0
    %483 = vmatpush1.bf16.xpose.msra.mxu0 %v480
    %484 = vmatprep.subr.bf16.mxu0 0
    %485 = vmatpush1.bf16.xpose.msra.mxu0 0
    %486 = vmatprep.subr.bf16.mxu0 0
    %487 = vmatpush1.bf16.xpose.msra.mxu0 0
    %488 = vmatprep.subr.bf16.mxu0 0
    %489 = vmatpush1.bf16.xpose.msra.mxu0 0
    %490 = vmatprep.subr.bf16.mxu0 0
    %491 = vmatpush1.bf16.xpose.msra.mxu0 0
    %492 = vmatprep.subr.bf16.mxu0 0
    %493 = vmatpush1.bf16.xpose.msra.mxu0 0
    %494 = vmatprep.subr.bf16.mxu0 0
    %495 = vmatpush1.bf16.xpose.msra.mxu0 0
    %496 = vmatprep.subr.bf16.mxu0 0
    %497 = vmatpush1.bf16.xpose.msra.mxu0 0
    %498 = vmatprep.subr.bf16.mxu0 0
    %499 = vmatpush1.bf16.xpose.msra.mxu0 0
    %500 = vmatprep.subr.bf16.mxu0 0
    %501 = vmatpush1.bf16.xpose.msra.mxu0 0
    %502 = vmatprep.subr.bf16.mxu0 0
    %503 = vmatpush1.bf16.xpose.msra.mxu0 0
    %504 = vmatprep.subr.bf16.mxu0 0
    %505 = vmatpush1.bf16.xpose.msra.mxu0 0
    %506 = vmatprep.subr.bf16.mxu0 0
    %507 = vmatpush1.bf16.xpose.msra.mxu0 0
    %508 = vmatprep.subr.bf16.mxu0 0
    %509 = vmatpush1.bf16.xpose.msra.mxu0 0
    %510 = vmatprep.subr.bf16.mxu0 0
    %511 = vmatpush1.bf16.xpose.msra.mxu0 0
    %512 = vmatprep.subr.bf16.mxu0 0
    %513 = vmatpush1.bf16.xpose.msra.mxu0 0
    %514 = vmatprep.mubr.bf16.mxu0 0
    %515 = vmatmul.mubr.bf16.gmra.mrb[0].mxu0 %v477
    %v516 = vpop.f32.mrb[0].mxu0
    %v517 = vadd.f32 %v470, %v516
    %v518 = vpop.f32.mrb[0].mxu0
    %v519 = vpop.f32.mrb[0].mxu0
    %v520 = vpop.f32.mrb[0].mxu0
    %521 = vdwg.mxu0
    %523 = vrot.lane.b32.xlu0 %v466, 96
    %v524 = vpop.permute.xlu0 %523
    %v526 = vsel %vm475, %v466, 0
    %v529 = vsel %vm475, %v524, 0
    %531 = vmatprep.subr.bf16.mxu0 0
    %532 = vmatpush1.bf16.xpose.msra.mxu0 %v529
    %533 = vmatprep.subr.bf16.mxu0 0
    %534 = vmatpush1.bf16.xpose.msra.mxu0 0
    %535 = vmatprep.subr.bf16.mxu0 0
    %536 = vmatpush1.bf16.xpose.msra.mxu0 0
    %537 = vmatprep.subr.bf16.mxu0 0
    %538 = vmatpush1.bf16.xpose.msra.mxu0 0
    %539 = vmatprep.subr.bf16.mxu0 0
    %540 = vmatpush1.bf16.xpose.msra.mxu0 0
    %541 = vmatprep.subr.bf16.mxu0 0
    %542 = vmatpush1.bf16.xpose.msra.mxu0 0
    %543 = vmatprep.subr.bf16.mxu0 0
    %544 = vmatpush1.bf16.xpose.msra.mxu0 0
    %545 = vmatprep.subr.bf16.mxu0 0
    %546 = vmatpush1.bf16.xpose.msra.mxu0 0
    %547 = vmatprep.subr.bf16.mxu0 0
    %548 = vmatpush1.bf16.xpose.msra.mxu0 0
    %549 = vmatprep.subr.bf16.mxu0 0
    %550 = vmatpush1.bf16.xpose.msra.mxu0 0
    %551 = vmatprep.subr.bf16.mxu0 0
    %552 = vmatpush1.bf16.xpose.msra.mxu0 0
    %553 = vmatprep.subr.bf16.mxu0 0
    %554 = vmatpush1.bf16.xpose.msra.mxu0 0
    %555 = vmatprep.subr.bf16.mxu0 0
    %556 = vmatpush1.bf16.xpose.msra.mxu0 0
    %557 = vmatprep.subr.bf16.mxu0 0
    %558 = vmatpush1.bf16.xpose.msra.mxu0 0
    %559 = vmatprep.subr.bf16.mxu0 0
    %560 = vmatpush1.bf16.xpose.msra.mxu0 0
    %561 = vmatprep.subr.bf16.mxu0 0
    %562 = vmatpush1.bf16.xpose.msra.mxu0 0
    %563 = vmatprep.mubr.bf16.mxu0 0
    %564 = vmatmul.mubr.bf16.gmra.mrb[0].mxu0 %v526
    %v565 = vpop.f32.mrb[0].mxu0
    %v566 = vadd.f32 %v471, %v565
    %v567 = vpop.f32.mrb[0].mxu0
    %v568 = vpop.f32.mrb[0].mxu0
    %v569 = vpop.f32.mrb[0].mxu0
    %570 = vdwg.mxu0
    %v571 = vstv %s468
    %v572 = vmul.f32 %v348, %v571
    %v573 = vmul.f32 %v355, %v571
    %v574 = vsub.f32 %v517, %v572
    %v575 = vsub.f32 %v566, %v573
    %v576 = vsel %vm475, %v574, -inf
    %577 = vmax.xlane.f32.xlu0 %v576
    %v578 = vpop.xlane.xlu0 %577
    %v579 = vsel %vm475, %v575, -inf
    %580 = vmax.xlane.f32.xlu0 %v579
    %v581 = vpop.xlane.xlu0 %580
    %v582 = vsub.f32 %v574, %v578
    %v583 = vsub.f32 %v575, %v581
    %v584 = vmul.f32 %v582, 1.442695
    %v585 = vpow.pop %v584
    %v586 = vmul.f32 %v583, 1.442695
    %v587 = vpow.pop %v586
    %v588 = vsel %vm475, %v585, 0.0
    %589 = vadd.xlane.f32.xlu0 %v588
    %v590 = vpop.xlane.xlu0 %589
    %v591 = vsel %vm475, %v587, 0.0
    %592 = vadd.xlane.f32.xlu0 %v591
    %v593 = vpop.xlane.xlu0 %592
    %v594 = vrcp.pop %v590
    %v595 = vrcp.pop %v593
    %v596 = vmul.f32 %v585, %v594
    %v597 = vmul.f32 %v587, %v595
    %v598 = vpack.c.bf16 %v596, %v596
    %v599 = vpack.c.bf16 %v597, %v597
    %600 = vrot.lane.b32.xlu0 %v465, 64
    %v601 = vpop.permute.xlu0 %600
    %v603 = vsel %vm475, %v598, 0
    %vm605 = vcmask 1043456
    %v607 = vsel %vm605, %v601, 0
    %609 = vmatprep.subr.bf16.mxu0 0
    %610 = vmatpush1.bf16.msra.mxu0 %v607
    %611 = vmatprep.subr.bf16.mxu0 0
    %612 = vmatpush1.bf16.msra.mxu0 0
    %613 = vmatprep.subr.bf16.mxu0 0
    %614 = vmatpush1.bf16.msra.mxu0 0
    %615 = vmatprep.subr.bf16.mxu0 0
    %616 = vmatpush1.bf16.msra.mxu0 0
    %617 = vmatprep.subr.bf16.mxu0 0
    %618 = vmatpush1.bf16.msra.mxu0 0
    %619 = vmatprep.subr.bf16.mxu0 0
    %620 = vmatpush1.bf16.msra.mxu0 0
    %621 = vmatprep.subr.bf16.mxu0 0
    %622 = vmatpush1.bf16.msra.mxu0 0
    %623 = vmatprep.subr.bf16.mxu0 0
    %624 = vmatpush1.bf16.msra.mxu0 0
    %625 = vmatprep.subr.bf16.mxu0 0
    %626 = vmatpush1.bf16.msra.mxu0 0
    %627 = vmatprep.subr.bf16.mxu0 0
    %628 = vmatpush1.bf16.msra.mxu0 0
    %629 = vmatprep.subr.bf16.mxu0 0
    %630 = vmatpush1.bf16.msra.mxu0 0
    %631 = vmatprep.subr.bf16.mxu0 0
    %632 = vmatpush1.bf16.msra.mxu0 0
    %633 = vmatprep.subr.bf16.mxu0 0
    %634 = vmatpush1.bf16.msra.mxu0 0
    %635 = vmatprep.subr.bf16.mxu0 0
    %636 = vmatpush1.bf16.msra.mxu0 0
    %637 = vmatprep.subr.bf16.mxu0 0
    %638 = vmatpush1.bf16.msra.mxu0 0
    %639 = vmatprep.subr.bf16.mxu0 0
    %640 = vmatpush1.bf16.msra.mxu0 0
    %641 = vmatprep.mubr.bf16.mxu0 0
    %642 = vmatmul.mubr.bf16.gmra.mrb[0].mxu0 %v603
    %v643 = vpop.f32.mrb[0].mxu0
    %v644 = vadd.f32 0.0, %v643
    %v645 = vpop.f32.mrb[0].mxu0
    %v646 = vpop.f32.mrb[0].mxu0
    %v647 = vpop.f32.mrb[0].mxu0
    %648 = vdwg.mxu0
    %649 = vrot.lane.b32.xlu0 %v466, 64
    %v650 = vpop.permute.xlu0 %649
    %v652 = vsel %vm475, %v599, 0
    %v655 = vsel %vm605, %v650, 0
    %657 = vmatprep.subr.bf16.mxu0 0
    %658 = vmatpush1.bf16.msra.mxu0 %v655
    %659 = vmatprep.subr.bf16.mxu0 0
    %660 = vmatpush1.bf16.msra.mxu0 0
    %661 = vmatprep.subr.bf16.mxu0 0
    %662 = vmatpush1.bf16.msra.mxu0 0
    %663 = vmatprep.subr.bf16.mxu0 0
    %664 = vmatpush1.bf16.msra.mxu0 0
    %665 = vmatprep.subr.bf16.mxu0 0
    %666 = vmatpush1.bf16.msra.mxu0 0
    %667 = vmatprep.subr.bf16.mxu0 0
    %668 = vmatpush1.bf16.msra.mxu0 0
    %669 = vmatprep.subr.bf16.mxu0 0
    %670 = vmatpush1.bf16.msra.mxu0 0
    %671 = vmatprep.subr.bf16.mxu0 0
    %672 = vmatpush1.bf16.msra.mxu0 0
    %673 = vmatprep.subr.bf16.mxu0 0
    %674 = vmatpush1.bf16.msra.mxu0 0
    %675 = vmatprep.subr.bf16.mxu0 0
    %676 = vmatpush1.bf16.msra.mxu0 0
    %677 = vmatprep.subr.bf16.mxu0 0
    %678 = vmatpush1.bf16.msra.mxu0 0
    %679 = vmatprep.subr.bf16.mxu0 0
    %680 = vmatpush1.bf16.msra.mxu0 0
    %681 = vmatprep.subr.bf16.mxu0 0
    %682 = vmatpush1.bf16.msra.mxu0 0
    %683 = vmatprep.subr.bf16.mxu0 0
    %684 = vmatpush1.bf16.msra.mxu0 0
    %685 = vmatprep.subr.bf16.mxu0 0
    %686 = vmatpush1.bf16.msra.mxu0 0
    %687 = vmatprep.subr.bf16.mxu0 0
    %688 = vmatpush1.bf16.msra.mxu0 0
    %689 = vmatprep.mubr.bf16.mxu0 0
    %690 = vmatmul.mubr.bf16.gmra.mrb[0].mxu0 %v652
    %v691 = vpop.f32.mrb[0].mxu0
    %v692 = vadd.f32 0.0, %v691
    %v693 = vpop.f32.mrb[0].mxu0
    %v694 = vpop.f32.mrb[0].mxu0
    %v695 = vpop.f32.mrb[0].mxu0
    %696 = vdwg.mxu0
    %s697 = sld [smem:[#allocation2 + $0x2]]
    %s698 = sld [smem:[#allocation2 + $0x3]]
    %v699 = vstv %s697
    %v700 = vmul.f32 %v164, %v699
    %v701 = vmul.f32 %v165, %v699
    %702 = vrot.lane.b32.xlu0 %v465, 120
    %v703 = vpop.permute.xlu0 %702
    %704 = vrot.lane.b32.xlu0 %v465, 88
    %v705 = vpop.permute.xlu0 %704
    %v707 = vsel %vm475, %v703, 0
    %v710 = vsel %vm475, %v705, 0
    %712 = vmatprep.subr.bf16.mxu0 0
    %713 = vmatpush1.bf16.xpose.msra.mxu0 %v710
    %714 = vmatprep.subr.bf16.mxu0 0
    %715 = vmatpush1.bf16.xpose.msra.mxu0 0
    %716 = vmatprep.subr.bf16.mxu0 0
    %717 = vmatpush1.bf16.xpose.msra.mxu0 0
    %718 = vmatprep.subr.bf16.mxu0 0
    %719 = vmatpush1.bf16.xpose.msra.mxu0 0
    %720 = vmatprep.subr.bf16.mxu0 0
    %721 = vmatpush1.bf16.xpose.msra.mxu0 0
    %722 = vmatprep.subr.bf16.mxu0 0
    %723 = vmatpush1.bf16.xpose.msra.mxu0 0
    %724 = vmatprep.subr.bf16.mxu0 0
    %725 = vmatpush1.bf16.xpose.msra.mxu0 0
    %726 = vmatprep.subr.bf16.mxu0 0
    %727 = vmatpush1.bf16.xpose.msra.mxu0 0
    %728 = vmatprep.subr.bf16.mxu0 0
    %729 = vmatpush1.bf16.xpose.msra.mxu0 0
    %730 = vmatprep.subr.bf16.mxu0 0
    %731 = vmatpush1.bf16.xpose.msra.mxu0 0
    %732 = vmatprep.subr.bf16.mxu0 0
    %733 = vmatpush1.bf16.xpose.msra.mxu0 0
    %734 = vmatprep.subr.bf16.mxu0 0
    %735 = vmatpush1.bf16.xpose.msra.mxu0 0
    %736 = vmatprep.subr.bf16.mxu0 0
    %737 = vmatpush1.bf16.xpose.msra.mxu0 0
    %738 = vmatprep.subr.bf16.mxu0 0
    %739 = vmatpush1.bf16.xpose.msra.mxu0 0
    %740 = vmatprep.subr.bf16.mxu0 0
    %741 = vmatpush1.bf16.xpose.msra.mxu0 0
    %742 = vmatprep.subr.bf16.mxu0 0
    %743 = vmatpush1.bf16.xpose.msra.mxu0 0
    %744 = vmatprep.mubr.bf16.mxu0 0
    %745 = vmatmul.mubr.bf16.gmra.mrb[0].mxu0 %v707
    %v746 = vpop.f32.mrb[0].mxu0
    %v747 = vadd.f32 %v700, %v746
    %v748 = vpop.f32.mrb[0].mxu0
    %v749 = vpop.f32.mrb[0].mxu0
    %v750 = vpop.f32.mrb[0].mxu0
    %751 = vdwg.mxu0
    %752 = vrot.lane.b32.xlu0 %v466, 120
    %v753 = vpop.permute.xlu0 %752
    %754 = vrot.lane.b32.xlu0 %v466, 88
    %v755 = vpop.permute.xlu0 %754
    %v757 = vsel %vm475, %v753, 0
    %v760 = vsel %vm475, %v755, 0
    %762 = vmatprep.subr.bf16.mxu0 0
    %763 = vmatpush1.bf16.xpose.msra.mxu0 %v760
    %764 = vmatprep.subr.bf16.mxu0 0
    %765 = vmatpush1.bf16.xpose.msra.mxu0 0
    %766 = vmatprep.subr.bf16.mxu0 0
    %767 = vmatpush1.bf16.xpose.msra.mxu0 0
    %768 = vmatprep.subr.bf16.mxu0 0
    %769 = vmatpush1.bf16.xpose.msra.mxu0 0
    %770 = vmatprep.subr.bf16.mxu0 0
    %771 = vmatpush1.bf16.xpose.msra.mxu0 0
    %772 = vmatprep.subr.bf16.mxu0 0
    %773 = vmatpush1.bf16.xpose.msra.mxu0 0
    %774 = vmatprep.subr.bf16.mxu0 0
    %775 = vmatpush1.bf16.xpose.msra.mxu0 0
    %776 = vmatprep.subr.bf16.mxu0 0
    %777 = vmatpush1.bf16.xpose.msra.mxu0 0
    %778 = vmatprep.subr.bf16.mxu0 0
    %779 = vmatpush1.bf16.xpose.msra.mxu0 0
    %780 = vmatprep.subr.bf16.mxu0 0
    %781 = vmatpush1.bf16.xpose.msra.mxu0 0
    %782 = vmatprep.subr.bf16.mxu0 0
    %783 = vmatpush1.bf16.xpose.msra.mxu0 0
    %784 = vmatprep.subr.bf16.mxu0 0
    %785 = vmatpush1.bf16.xpose.msra.mxu0 0
    %786 = vmatprep.subr.bf16.mxu0 0
    %787 = vmatpush1.bf16.xpose.msra.mxu0 0
    %788 = vmatprep.subr.bf16.mxu0 0
    %789 = vmatpush1.bf16.xpose.msra.mxu0 0
    %790 = vmatprep.subr.bf16.mxu0 0
    %791 = vmatpush1.bf16.xpose.msra.mxu0 0
    %792 = vmatprep.subr.bf16.mxu0 0
    %793 = vmatpush1.bf16.xpose.msra.mxu0 0
    %794 = vmatprep.mubr.bf16.mxu0 0
    %795 = vmatmul.mubr.bf16.gmra.mrb[0].mxu0 %v757
    %v796 = vpop.f32.mrb[0].mxu0
    %v797 = vadd.f32 %v701, %v796
    %v798 = vpop.f32.mrb[0].mxu0
    %v799 = vpop.f32.mrb[0].mxu0
    %v800 = vpop.f32.mrb[0].mxu0
    %801 = vdwg.mxu0
    %v802 = vstv %s698
    %v803 = vmul.f32 %v348, %v802
    %v804 = vmul.f32 %v355, %v802
    %v805 = vsub.f32 %v747, %v803
    %v806 = vsub.f32 %v797, %v804
    %v807 = vsel %vm475, %v805, -inf
    %808 = vmax.xlane.f32.xlu0 %v807
    %v809 = vpop.xlane.xlu0 %808
    %v810 = vsel %vm475, %v806, -inf
    %811 = vmax.xlane.f32.xlu0 %v810
    %v812 = vpop.xlane.xlu0 %811
    %v813 = vsub.f32 %v805, %v809
    %v814 = vsub.f32 %v806, %v812
    %v815 = vmul.f32 %v813, 1.442695
    %v816 = vpow.pop %v815
    %v817 = vmul.f32 %v814, 1.442695
    %v818 = vpow.pop %v817
    %v819 = vsel %vm475, %v816, 0.0
    %820 = vadd.xlane.f32.xlu0 %v819
    %v821 = vpop.xlane.xlu0 %820
    %v822 = vsel %vm475, %v818, 0.0
    %823 = vadd.xlane.f32.xlu0 %v822
    %v824 = vpop.xlane.xlu0 %823
    %v825 = vrcp.pop %v821
    %v826 = vrcp.pop %v824
    %v827 = vmul.f32 %v816, %v825
    %v828 = vmul.f32 %v818, %v826
    %v829 = vpack.c.bf16 %v827, %v827
    %v830 = vpack.c.bf16 %v828, %v828
    %831 = vrot.lane.b32.xlu0 %v465, 56
    %v832 = vpop.permute.xlu0 %831
    %v834 = vsel %vm475, %v829, 0
    %v837 = vsel %vm605, %v832, 0
    %839 = vmatprep.subr.bf16.mxu0 0
    %840 = vmatpush1.bf16.msra.mxu0 %v837
    %841 = vmatprep.subr.bf16.mxu0 0
    %842 = vmatpush1.bf16.msra.mxu0 0
    %843 = vmatprep.subr.bf16.mxu0 0
    %844 = vmatpush1.bf16.msra.mxu0 0
    %845 = vmatprep.subr.bf16.mxu0 0
    %846 = vmatpush1.bf16.msra.mxu0 0
    %847 = vmatprep.subr.bf16.mxu0 0
    %848 = vmatpush1.bf16.msra.mxu0 0
    %849 = vmatprep.subr.bf16.mxu0 0
    %850 = vmatpush1.bf16.msra.mxu0 0
    %851 = vmatprep.subr.bf16.mxu0 0
    %852 = vmatpush1.bf16.msra.mxu0 0
    %853 = vmatprep.subr.bf16.mxu0 0
    %854 = vmatpush1.bf16.msra.mxu0 0
    %855 = vmatprep.subr.bf16.mxu0 0
    %856 = vmatpush1.bf16.msra.mxu0 0
    %857 = vmatprep.subr.bf16.mxu0 0
    %858 = vmatpush1.bf16.msra.mxu0 0
    %859 = vmatprep.subr.bf16.mxu0 0
    %860 = vmatpush1.bf16.msra.mxu0 0
    %861 = vmatprep.subr.bf16.mxu0 0
    %862 = vmatpush1.bf16.msra.mxu0 0
    %863 = vmatprep.subr.bf16.mxu0 0
    %864 = vmatpush1.bf16.msra.mxu0 0
    %865 = vmatprep.subr.bf16.mxu0 0
    %866 = vmatpush1.bf16.msra.mxu0 0
    %867 = vmatprep.subr.bf16.mxu0 0
    %868 = vmatpush1.bf16.msra.mxu0 0
    %869 = vmatprep.subr.bf16.mxu0 0
    %870 = vmatpush1.bf16.msra.mxu0 0
    %871 = vmatprep.mubr.bf16.mxu0 0
    %872 = vmatmul.mubr.bf16.gmra.mrb[0].mxu0 %v834
    %v873 = vpop.f32.mrb[0].mxu0
    %v874 = vadd.f32 0.0, %v873
    %v875 = vpop.f32.mrb[0].mxu0
    %v876 = vpop.f32.mrb[0].mxu0
    %v877 = vpop.f32.mrb[0].mxu0
    %878 = vdwg.mxu0
    %879 = vrot.lane.b32.xlu0 %v466, 56
    %v880 = vpop.permute.xlu0 %879
    %v882 = vsel %vm475, %v830, 0
    %v885 = vsel %vm605, %v880, 0
    %887 = vmatprep.subr.bf16.mxu0 0
    %888 = vmatpush1.bf16.msra.mxu0 %v885
    %889 = vmatprep.subr.bf16.mxu0 0
    %890 = vmatpush1.bf16.msra.mxu0 0
    %891 = vmatprep.subr.bf16.mxu0 0
    %892 = vmatpush1.bf16.msra.mxu0 0
    %893 = vmatprep.subr.bf16.mxu0 0
    %894 = vmatpush1.bf16.msra.mxu0 0
    %895 = vmatprep.subr.bf16.mxu0 0
    %896 = vmatpush1.bf16.msra.mxu0 0
    %897 = vmatprep.subr.bf16.mxu0 0
    %898 = vmatpush1.bf16.msra.mxu0 0
    %899 = vmatprep.subr.bf16.mxu0 0
    %900 = vmatpush1.bf16.msra.mxu0 0
    %901 = vmatprep.subr.bf16.mxu0 0
    %902 = vmatpush1.bf16.msra.mxu0 0
    %903 = vmatprep.subr.bf16.mxu0 0
    %904 = vmatpush1.bf16.msra.mxu0 0
    %905 = vmatprep.subr.bf16.mxu0 0
    %906 = vmatpush1.bf16.msra.mxu0 0
    %907 = vmatprep.subr.bf16.mxu0 0
    %908 = vmatpush1.bf16.msra.mxu0 0
    %909 = vmatprep.subr.bf16.mxu0 0
    %910 = vmatpush1.bf16.msra.mxu0 0
    %911 = vmatprep.subr.bf16.mxu0 0
    %912 = vmatpush1.bf16.msra.mxu0 0
    %913 = vmatprep.subr.bf16.mxu0 0
    %914 = vmatpush1.bf16.msra.mxu0 0
    %915 = vmatprep.subr.bf16.mxu0 0
    %916 = vmatpush1.bf16.msra.mxu0 0
    %917 = vmatprep.subr.bf16.mxu0 0
    %918 = vmatpush1.bf16.msra.mxu0 0
    %919 = vmatprep.mubr.bf16.mxu0 0
    %920 = vmatmul.mubr.bf16.gmra.mrb[0].mxu0 %v882
    %v921 = vpop.f32.mrb[0].mxu0
    %v922 = vadd.f32 0.0, %v921
    %v923 = vpop.f32.mrb[0].mxu0
    %v924 = vpop.f32.mrb[0].mxu0
    %v925 = vpop.f32.mrb[0].mxu0
    %926 = vdwg.mxu0
    %s927 = sld [smem:[#allocation2 + $0x4]]
    %s928 = sld [smem:[#allocation2 + $0x5]]
    %v929 = vstv %s927
    %v930 = vmul.f32 %v164, %v929
    %v931 = vmul.f32 %v165, %v929
    %932 = vrot.lane.b32.xlu0 %v465, 112
    %v933 = vpop.permute.xlu0 %932
    %934 = vrot.lane.b32.xlu0 %v465, 80
    %v935 = vpop.permute.xlu0 %934
    %v937 = vsel %vm475, %v933, 0
    %v940 = vsel %vm475, %v935, 0
    %942 = vmatprep.subr.bf16.mxu0 0
    %943 = vmatpush1.bf16.xpose.msra.mxu0 %v940
    %944 = vmatprep.subr.bf16.mxu0 0
    %945 = vmatpush1.bf16.xpose.msra.mxu0 0
    %946 = vmatprep.subr.bf16.mxu0 0
    %947 = vmatpush1.bf16.xpose.msra.mxu0 0
    %948 = vmatprep.subr.bf16.mxu0 0
    %949 = vmatpush1.bf16.xpose.msra.mxu0 0
    %950 = vmatprep.subr.bf16.mxu0 0
    %951 = vmatpush1.bf16.xpose.msra.mxu0 0
    %952 = vmatprep.subr.bf16.mxu0 0
    %953 = vmatpush1.bf16.xpose.msra.mxu0 0
    %954 = vmatprep.subr.bf16.mxu0 0
    %955 = vmatpush1.bf16.xpose.msra.mxu0 0
    %956 = vmatprep.subr.bf16.mxu0 0
    %957 = vmatpush1.bf16.xpose.msra.mxu0 0
    %958 = vmatprep.subr.bf16.mxu0 0
    %959 = vmatpush1.bf16.xpose.msra.mxu0 0
    %960 = vmatprep.subr.bf16.mxu0 0
    %961 = vmatpush1.bf16.xpose.msra.mxu0 0
    %962 = vmatprep.subr.bf16.mxu0 0
    %963 = vmatpush1.bf16.xpose.msra.mxu0 0
    %964 = vmatprep.subr.bf16.mxu0 0
    %965 = vmatpush1.bf16.xpose.msra.mxu0 0
    %966 = vmatprep.subr.bf16.mxu0 0
    %967 = vmatpush1.bf16.xpose.msra.mxu0 0
    %968 = vmatprep.subr.bf16.mxu0 0
    %969 = vmatpush1.bf16.xpose.msra.mxu0 0
    %970 = vmatprep.subr.bf16.mxu0 0
    %971 = vmatpush1.bf16.xpose.msra.mxu0 0
    %972 = vmatprep.subr.bf16.mxu0 0
    %973 = vmatpush1.bf16.xpose.msra.mxu0 0
    %974 = vmatprep.mubr.bf16.mxu0 0
    %975 = vmatmul.mubr.bf16.gmra.mrb[0].mxu0 %v937
    %v976 = vpop.f32.mrb[0].mxu0
    %v977 = vadd.f32 %v930, %v976
    %v978 = vpop.f32.mrb[0].mxu0
    %v979 = vpop.f32.mrb[0].mxu0
    %v980 = vpop.f32.mrb[0].mxu0
    %981 = vdwg.mxu0
    %982 = vrot.lane.b32.xlu0 %v466, 112
    %v983 = vpop.permute.xlu0 %982
    %984 = vrot.lane.b32.xlu0 %v466, 80
    %v985 = vpop.permute.xlu0 %984
    %v987 = vsel %vm475, %v983, 0
    %v990 = vsel %vm475, %v985, 0
    %992 = vmatprep.subr.bf16.mxu0 0
    %993 = vmatpush1.bf16.xpose.msra.mxu0 %v990
    %994 = vmatprep.subr.bf16.mxu0 0
    %995 = vmatpush1.bf16.xpose.msra.mxu0 0
    %996 = vmatprep.subr.bf16.mxu0 0
    %997 = vmatpush1.bf16.xpose.msra.mxu0 0
    %998 = vmatprep.subr.bf16.mxu0 0
    %999 = vmatpush1.bf16.xpose.msra.mxu0 0
    %1000 = vmatprep.subr.bf16.mxu0 0
    %1001 = vmatpush1.bf16.xpose.msra.mxu0 0
    %1002 = vmatprep.subr.bf16.mxu0 0
    %1003 = vmatpush1.bf16.xpose.msra.mxu0 0
    %1004 = vmatprep.subr.bf16.mxu0 0
    %1005 = vmatpush1.bf16.xpose.msra.mxu0 0
    %1006 = vmatprep.subr.bf16.mxu0 0
    %1007 = vmatpush1.bf16.xpose.msra.mxu0 0
    %1008 = vmatprep.subr.bf16.mxu0 0
    %1009 = vmatpush1.bf16.xpose.msra.mxu0 0
    %1010 = vmatprep.subr.bf16.mxu0 0
    %1011 = vmatpush1.bf16.xpose.msra.mxu0 0
    %1012 = vmatprep.subr.bf16.mxu0 0
    %1013 = vmatpush1.bf16.xpose.msra.mxu0 0
    %1014 = vmatprep.subr.bf16.mxu0 0
    %1015 = vmatpush1.bf16.xpose.msra.mxu0 0
    %1016 = vmatprep.subr.bf16.mxu0 0
    %1017 = vmatpush1.bf16.xpose.msra.mxu0 0
    %1018 = vmatprep.subr.bf16.mxu0 0
    %1019 = vmatpush1.bf16.xpose.msra.mxu0 0
    %1020 = vmatprep.subr.bf16.mxu0 0
    %1021 = vmatpush1.bf16.xpose.msra.mxu0 0
    %1022 = vmatprep.subr.bf16.mxu0 0
    %1023 = vmatpush1.bf16.xpose.msra.mxu0 0
    %1024 = vmatprep.mubr.bf16.mxu0 0
    %1025 = vmatmul.mubr.bf16.gmra.mrb[0].mxu0 %v987
    %v1026 = vpop.f32.mrb[0].mxu0
    %v1027 = vadd.f32 %v931, %v1026
    %v1028 = vpop.f32.mrb[0].mxu0
    %v1029 = vpop.f32.mrb[0].mxu0
    %v1030 = vpop.f32.mrb[0].mxu0
    %1031 = vdwg.mxu0
    %v1032 = vstv %s928
    %v1033 = vmul.f32 %v348, %v1032
    %v1034 = vmul.f32 %v355, %v1032
    %v1035 = vsub.f32 %v977, %v1033
    %v1036 = vsub.f32 %v1027, %v1034
    %v1037 = vsel %vm475, %v1035, -inf
    %1038 = vmax.xlane.f32.xlu0 %v1037
    %v1039 = vpop.xlane.xlu0 %1038
    %v1040 = vsel %vm475, %v1036, -inf
    %1041 = vmax.xlane.f32.xlu0 %v1040
    %v1042 = vpop.xlane.xlu0 %1041
    %v1043 = vsub.f32 %v1035, %v1039
    %v1044 = vsub.f32 %v1036, %v1042
    %v1045 = vmul.f32 %v1043, 1.442695
    %v1046 = vpow.pop %v1045
    %v1047 = vmul.f32 %v1044, 1.442695
    %v1048 = vpow.pop %v1047
    %v1049 = vsel %vm475, %v1046, 0.0
    %1050 = vadd.xlane.f32.xlu0 %v1049
    %v1051 = vpop.xlane.xlu0 %1050
    %v1052 = vsel %vm475, %v1048, 0.0
    %1053 = vadd.xlane.f32.xlu0 %v1052
    %v1054 = vpop.xlane.xlu0 %1053
    %v1055 = vrcp.pop %v1051
    %v1056 = vrcp.pop %v1054
    %v1057 = vmul.f32 %v1046, %v1055
    %v1058 = vmul.f32 %v1048, %v1056
    %v1059 = vpack.c.bf16 %v1057, %v1057
    %v1060 = vpack.c.bf16 %v1058, %v1058
    %1061 = vrot.lane.b32.xlu0 %v465, 48
    %v1062 = vpop.permute.xlu0 %1061
    %v1064 = vsel %vm475, %v1059, 0
    %v1067 = vsel %vm605, %v1062, 0
    %1069 = vmatprep.subr.bf16.mxu0 0
    %1070 = vmatpush1.bf16.msra.mxu0 %v1067
    %1071 = vmatprep.subr.bf16.mxu0 0
    %1072 = vmatpush1.bf16.msra.mxu0 0
    %1073 = vmatprep.subr.bf16.mxu0 0
    %1074 = vmatpush1.bf16.msra.mxu0 0
    %1075 = vmatprep.subr.bf16.mxu0 0
    %1076 = vmatpush1.bf16.msra.mxu0 0
    %1077 = vmatprep.subr.bf16.mxu0 0
    %1078 = vmatpush1.bf16.msra.mxu0 0
    %1079 = vmatprep.subr.bf16.mxu0 0
    %1080 = vmatpush1.bf16.msra.mxu0 0
    %1081 = vmatprep.subr.bf16.mxu0 0
    %1082 = vmatpush1.bf16.msra.mxu0 0
    %1083 = vmatprep.subr.bf16.mxu0 0
    %1084 = vmatpush1.bf16.msra.mxu0 0
    %1085 = vmatprep.subr.bf16.mxu0 0
    %1086 = vmatpush1.bf16.msra.mxu0 0
    %1087 = vmatprep.subr.bf16.mxu0 0
    %1088 = vmatpush1.bf16.msra.mxu0 0
    %1089 = vmatprep.subr.bf16.mxu0 0
    %1090 = vmatpush1.bf16.msra.mxu0 0
    %1091 = vmatprep.subr.bf16.mxu0 0
    %1092 = vmatpush1.bf16.msra.mxu0 0
    %1093 = vmatprep.subr.bf16.mxu0 0
    %1094 = vmatpush1.bf16.msra.mxu0 0
    %1095 = vmatprep.subr.bf16.mxu0 0
    %1096 = vmatpush1.bf16.msra.mxu0 0
    %1097 = vmatprep.subr.bf16.mxu0 0
    %1098 = vmatpush1.bf16.msra.mxu0 0
    %1099 = vmatprep.subr.bf16.mxu0 0
    %1100 = vmatpush1.bf16.msra.mxu0 0
    %1101 = vmatprep.mubr.bf16.mxu0 0
    %1102 = vmatmul.mubr.bf16.gmra.mrb[0].mxu0 %v1064
    %v1103 = vpop.f32.mrb[0].mxu0
    %v1104 = vadd.f32 0.0, %v1103
    %v1105 = vpop.f32.mrb[0].mxu0
    %v1106 = vpop.f32.mrb[0].mxu0
    %v1107 = vpop.f32.mrb[0].mxu0
    %1108 = vdwg.mxu0
    %1109 = vrot.lane.b32.xlu0 %v466, 48
    %v1110 = vpop.permute.xlu0 %1109
    %v1112 = vsel %vm475, %v1060, 0
    %v1115 = vsel %vm605, %v1110, 0
    %1117 = vmatprep.subr.bf16.mxu0 0
    %1118 = vmatpush1.bf16.msra.mxu0 %v1115
    %1119 = vmatprep.subr.bf16.mxu0 0
    %1120 = vmatpush1.bf16.msra.mxu0 0
    %1121 = vmatprep.subr.bf16.mxu0 0
    %1122 = vmatpush1.bf16.msra.mxu0 0
    %1123 = vmatprep.subr.bf16.mxu0 0
    %1124 = vmatpush1.bf16.msra.mxu0 0
    %1125 = vmatprep.subr.bf16.mxu0 0
    %1126 = vmatpush1.bf16.msra.mxu0 0
    %1127 = vmatprep.subr.bf16.mxu0 0
    %1128 = vmatpush1.bf16.msra.mxu0 0
    %1129 = vmatprep.subr.bf16.mxu0 0
    %1130 = vmatpush1.bf16.msra.mxu0 0
    %1131 = vmatprep.subr.bf16.mxu0 0
    %1132 = vmatpush1.bf16.msra.mxu0 0
    %1133 = vmatprep.subr.bf16.mxu0 0
    %1134 = vmatpush1.bf16.msra.mxu0 0
    %1135 = vmatprep.subr.bf16.mxu0 0
    %1136 = vmatpush1.bf16.msra.mxu0 0
    %1137 = vmatprep.subr.bf16.mxu0 0
    %1138 = vmatpush1.bf16.msra.mxu0 0
    %1139 = vmatprep.subr.bf16.mxu0 0
    %1140 = vmatpush1.bf16.msra.mxu0 0
    %1141 = vmatprep.subr.bf16.mxu0 0
    %1142 = vmatpush1.bf16.msra.mxu0 0
    %1143 = vmatprep.subr.bf16.mxu0 0
    %1144 = vmatpush1.bf16.msra.mxu0 0
    %1145 = vmatprep.subr.bf16.mxu0 0
    %1146 = vmatpush1.bf16.msra.mxu0 0
    %1147 = vmatprep.subr.bf16.mxu0 0
    %1148 = vmatpush1.bf16.msra.mxu0 0
    %1149 = vmatprep.mubr.bf16.mxu0 0
    %1150 = vmatmul.mubr.bf16.gmra.mrb[0].mxu0 %v1112
    %v1151 = vpop.f32.mrb[0].mxu0
    %v1152 = vadd.f32 0.0, %v1151
    %v1153 = vpop.f32.mrb[0].mxu0
    %v1154 = vpop.f32.mrb[0].mxu0
    %v1155 = vpop.f32.mrb[0].mxu0
    %1156 = vdwg.mxu0
    %s1157 = sld [smem:[#allocation2 + $0x6]]
    %s1158 = sld [smem:[#allocation2 + $0x7]]
    %v1159 = vstv %s1157
    %v1160 = vmul.f32 %v164, %v1159
    %v1161 = vmul.f32 %v165, %v1159
    %1162 = vrot.lane.b32.xlu0 %v465, 104
    %v1163 = vpop.permute.xlu0 %1162
    %1164 = vrot.lane.b32.xlu0 %v465, 72
    %v1165 = vpop.permute.xlu0 %1164
    %v1167 = vsel %vm475, %v1163, 0
    %v1170 = vsel %vm475, %v1165, 0
    %1172 = vmatprep.subr.bf16.mxu0 0
    %1173 = vmatpush1.bf16.xpose.msra.mxu0 %v1170
    %1174 = vmatprep.subr.bf16.mxu0 0
    %1175 = vmatpush1.bf16.xpose.msra.mxu0 0
    %1176 = vmatprep.subr.bf16.mxu0 0
    %1177 = vmatpush1.bf16.xpose.msra.mxu0 0
    %1178 = vmatprep.subr.bf16.mxu0 0
    %1179 = vmatpush1.bf16.xpose.msra.mxu0 0
    %1180 = vmatprep.subr.bf16.mxu0 0
    %1181 = vmatpush1.bf16.xpose.msra.mxu0 0
    %1182 = vmatprep.subr.bf16.mxu0 0
    %1183 = vmatpush1.bf16.xpose.msra.mxu0 0
    %1184 = vmatprep.subr.bf16.mxu0 0
    %1185 = vmatpush1.bf16.xpose.msra.mxu0 0
    %1186 = vmatprep.subr.bf16.mxu0 0
    %1187 = vmatpush1.bf16.xpose.msra.mxu0 0
    %1188 = vmatprep.subr.bf16.mxu0 0
    %1189 = vmatpush1.bf16.xpose.msra.mxu0 0
    %1190 = vmatprep.subr.bf16.mxu0 0
    %1191 = vmatpush1.bf16.xpose.msra.mxu0 0
    %1192 = vmatprep.subr.bf16.mxu0 0
    %1193 = vmatpush1.bf16.xpose.msra.mxu0 0
    %1194 = vmatprep.subr.bf16.mxu0 0
    %1195 = vmatpush1.bf16.xpose.msra.mxu0 0
    %1196 = vmatprep.subr.bf16.mxu0 0
    %1197 = vmatpush1.bf16.xpose.msra.mxu0 0
    %1198 = vmatprep.subr.bf16.mxu0 0
    %1199 = vmatpush1.bf16.xpose.msra.mxu0 0
    %1200 = vmatprep.subr.bf16.mxu0 0
    %1201 = vmatpush1.bf16.xpose.msra.mxu0 0
    %1202 = vmatprep.subr.bf16.mxu0 0
    %1203 = vmatpush1.bf16.xpose.msra.mxu0 0
    %1204 = vmatprep.mubr.bf16.mxu0 0
    %1205 = vmatmul.mubr.bf16.gmra.mrb[0].mxu0 %v1167
    %v1206 = vpop.f32.mrb[0].mxu0
    %v1207 = vadd.f32 %v1160, %v1206
    %v1208 = vpop.f32.mrb[0].mxu0
    %v1209 = vpop.f32.mrb[0].mxu0
    %v1210 = vpop.f32.mrb[0].mxu0
    %1211 = vdwg.mxu0
    %1212 = vrot.lane.b32.xlu0 %v466, 104
    %v1213 = vpop.permute.xlu0 %1212
    %1214 = vrot.lane.b32.xlu0 %v466, 72
    %v1215 = vpop.permute.xlu0 %1214
    %v1217 = vsel %vm475, %v1213, 0
    %v1220 = vsel %vm475, %v1215, 0
    %1222 = vmatprep.subr.bf16.mxu0 0
    %1223 = vmatpush1.bf16.xpose.msra.mxu0 %v1220
    %1224 = vmatprep.subr.bf16.mxu0 0
    %1225 = vmatpush1.bf16.xpose.msra.mxu0 0
    %1226 = vmatprep.subr.bf16.mxu0 0
    %1227 = vmatpush1.bf16.xpose.msra.mxu0 0
    %1228 = vmatprep.subr.bf16.mxu0 0
    %1229 = vmatpush1.bf16.xpose.msra.mxu0 0
    %1230 = vmatprep.subr.bf16.mxu0 0
    %1231 = vmatpush1.bf16.xpose.msra.mxu0 0
    %1232 = vmatprep.subr.bf16.mxu0 0
    %1233 = vmatpush1.bf16.xpose.msra.mxu0 0
    %1234 = vmatprep.subr.bf16.mxu0 0
    %1235 = vmatpush1.bf16.xpose.msra.mxu0 0
    %1236 = vmatprep.subr.bf16.mxu0 0
    %1237 = vmatpush1.bf16.xpose.msra.mxu0 0
    %1238 = vmatprep.subr.bf16.mxu0 0
    %1239 = vmatpush1.bf16.xpose.msra.mxu0 0
    %1240 = vmatprep.subr.bf16.mxu0 0
    %1241 = vmatpush1.bf16.xpose.msra.mxu0 0
    %1242 = vmatprep.subr.bf16.mxu0 0
    %1243 = vmatpush1.bf16.xpose.msra.mxu0 0
    %1244 = vmatprep.subr.bf16.mxu0 0
    %1245 = vmatpush1.bf16.xpose.msra.mxu0 0
    %1246 = vmatprep.subr.bf16.mxu0 0
    %1247 = vmatpush1.bf16.xpose.msra.mxu0 0
    %1248 = vmatprep.subr.bf16.mxu0 0
    %1249 = vmatpush1.bf16.xpose.msra.mxu0 0
    %1250 = vmatprep.subr.bf16.mxu0 0
    %1251 = vmatpush1.bf16.xpose.msra.mxu0 0
    %1252 = vmatprep.subr.bf16.mxu0 0
    %1253 = vmatpush1.bf16.xpose.msra.mxu0 0
    %1254 = vmatprep.mubr.bf16.mxu0 0
    %1255 = vmatmul.mubr.bf16.gmra.mrb[0].mxu0 %v1217
    %v1256 = vpop.f32.mrb[0].mxu0
    %v1257 = vadd.f32 %v1161, %v1256
    %v1258 = vpop.f32.mrb[0].mxu0
    %v1259 = vpop.f32.mrb[0].mxu0
    %v1260 = vpop.f32.mrb[0].mxu0
    %1261 = vdwg.mxu0
    %v1262 = vstv %s1158
    %v1263 = vmul.f32 %v348, %v1262
    %v1264 = vmul.f32 %v355, %v1262
    %v1265 = vsub.f32 %v1207, %v1263
    %v1266 = vsub.f32 %v1257, %v1264
    %v1267 = vsel %vm475, %v1265, -inf
    %1268 = vmax.xlane.f32.xlu0 %v1267
    %v1269 = vpop.xlane.xlu0 %1268
    %v1270 = vsel %vm475, %v1266, -inf
    %1271 = vmax.xlane.f32.xlu0 %v1270
    %v1272 = vpop.xlane.xlu0 %1271
    %v1273 = vsub.f32 %v1265, %v1269
    %v1274 = vsub.f32 %v1266, %v1272
    %v1275 = vmul.f32 %v1273, 1.442695
    %v1276 = vpow.pop %v1275
    %v1277 = vmul.f32 %v1274, 1.442695
    %v1278 = vpow.pop %v1277
    %v1279 = vsel %vm475, %v1276, 0.0
    %1280 = vadd.xlane.f32.xlu0 %v1279
    %v1281 = vpop.xlane.xlu0 %1280
    %v1282 = vsel %vm475, %v1278, 0.0
    %1283 = vadd.xlane.f32.xlu0 %v1282
    %v1284 = vpop.xlane.xlu0 %1283
    %v1285 = vrcp.pop %v1281
    %v1286 = vrcp.pop %v1284
    %v1287 = vmul.f32 %v1276, %v1285
    %v1288 = vmul.f32 %v1278, %v1286
    %v1289 = vpack.c.bf16 %v1287, %v1287
    %v1290 = vpack.c.bf16 %v1288, %v1288
    %1291 = vrot.lane.b32.xlu0 %v465, 40
    %v1292 = vpop.permute.xlu0 %1291
    %v1294 = vsel %vm475, %v1289, 0
    %v1297 = vsel %vm605, %v1292, 0
    %1299 = vmatprep.subr.bf16.mxu0 0
    %1300 = vmatpush1.bf16.msra.mxu0 %v1297
    %1301 = vmatprep.subr.bf16.mxu0 0
    %1302 = vmatpush1.bf16.msra.mxu0 0
    %1303 = vmatprep.subr.bf16.mxu0 0
    %1304 = vmatpush1.bf16.msra.mxu0 0
    %1305 = vmatprep.subr.bf16.mxu0 0
    %1306 = vmatpush1.bf16.msra.mxu0 0
    %1307 = vmatprep.subr.bf16.mxu0 0
    %1308 = vmatpush1.bf16.msra.mxu0 0
    %1309 = vmatprep.subr.bf16.mxu0 0
    %1310 = vmatpush1.bf16.msra.mxu0 0
    %1311 = vmatprep.subr.bf16.mxu0 0
    %1312 = vmatpush1.bf16.msra.mxu0 0
    %1313 = vmatprep.subr.bf16.mxu0 0
    %1314 = vmatpush1.bf16.msra.mxu0 0
    %1315 = vmatprep.subr.bf16.mxu0 0
    %1316 = vmatpush1.bf16.msra.mxu0 0
    %1317 = vmatprep.subr.bf16.mxu0 0
    %1318 = vmatpush1.bf16.msra.mxu0 0
    %1319 = vmatprep.subr.bf16.mxu0 0
    %1320 = vmatpush1.bf16.msra.mxu0 0
    %1321 = vmatprep.subr.bf16.mxu0 0
    %1322 = vmatpush1.bf16.msra.mxu0 0
    %1323 = vmatprep.subr.bf16.mxu0 0
    %1324 = vmatpush1.bf16.msra.mxu0 0
    %1325 = vmatprep.subr.bf16.mxu0 0
    %1326 = vmatpush1.bf16.msra.mxu0 0
    %1327 = vmatprep.subr.bf16.mxu0 0
    %1328 = vmatpush1.bf16.msra.mxu0 0
    %1329 = vmatprep.subr.bf16.mxu0 0
    %1330 = vmatpush1.bf16.msra.mxu0 0
    %1331 = vmatprep.mubr.bf16.mxu0 0
    %1332 = vmatmul.mubr.bf16.gmra.mrb[0].mxu0 %v1294
    %v1333 = vpop.f32.mrb[0].mxu0
    %v1334 = vadd.f32 0.0, %v1333
    %v1335 = vpop.f32.mrb[0].mxu0
    %v1336 = vpop.f32.mrb[0].mxu0
    %v1337 = vpop.f32.mrb[0].mxu0
    %1338 = vdwg.mxu0
    %1339 = vrot.lane.b32.xlu0 %v466, 40
    %v1340 = vpop.permute.xlu0 %1339
    %v1342 = vsel %vm475, %v1290, 0
    %v1345 = vsel %vm605, %v1340, 0
    %1347 = vmatprep.subr.bf16.mxu0 0
    %1348 = vmatpush1.bf16.msra.mxu0 %v1345
    %1349 = vmatprep.subr.bf16.mxu0 0
    %1350 = vmatpush1.bf16.msra.mxu0 0
    %1351 = vmatprep.subr.bf16.mxu0 0
    %1352 = vmatpush1.bf16.msra.mxu0 0
    %1353 = vmatprep.subr.bf16.mxu0 0
    %1354 = vmatpush1.bf16.msra.mxu0 0
    %1355 = vmatprep.subr.bf16.mxu0 0
    %1356 = vmatpush1.bf16.msra.mxu0 0
    %1357 = vmatprep.subr.bf16.mxu0 0
    %1358 = vmatpush1.bf16.msra.mxu0 0
    %1359 = vmatprep.subr.bf16.mxu0 0
    %1360 = vmatpush1.bf16.msra.mxu0 0
    %1361 = vmatprep.subr.bf16.mxu0 0
    %1362 = vmatpush1.bf16.msra.mxu0 0
    %1363 = vmatprep.subr.bf16.mxu0 0
    %1364 = vmatpush1.bf16.msra.mxu0 0
    %1365 = vmatprep.subr.bf16.mxu0 0
    %1366 = vmatpush1.bf16.msra.mxu0 0
    %1367 = vmatprep.subr.bf16.mxu0 0
    %1368 = vmatpush1.bf16.msra.mxu0 0
    %1369 = vmatprep.subr.bf16.mxu0 0
    %1370 = vmatpush1.bf16.msra.mxu0 0
    %1371 = vmatprep.subr.bf16.mxu0 0
    %1372 = vmatpush1.bf16.msra.mxu0 0
    %1373 = vmatprep.subr.bf16.mxu0 0
    %1374 = vmatpush1.bf16.msra.mxu0 0
    %1375 = vmatprep.subr.bf16.mxu0 0
    %1376 = vmatpush1.bf16.msra.mxu0 0
    %1377 = vmatprep.subr.bf16.mxu0 0
    %1378 = vmatpush1.bf16.msra.mxu0 0
    %1379 = vmatprep.mubr.bf16.mxu0 0
    %1380 = vmatmul.mubr.bf16.gmra.mrb[0].mxu0 %v1342
    %v1381 = vpop.f32.mrb[0].mxu0
    %v1382 = vadd.f32 0.0, %v1381
    %v1383 = vpop.f32.mrb[0].mxu0
    %v1384 = vpop.f32.mrb[0].mxu0
    %v1385 = vpop.f32.mrb[0].mxu0
    %1386 = vdwg.mxu0
    %1389 = vrot.lane.b32.xlu0 %v874, 8
    %v1390 = vpop.permute.xlu0 %1389
    %1391 = vrot.lane.b32.xlu0 %v922, 8
    %v1392 = vpop.permute.xlu0 %1391
    %1397 = vrot.lane.b32.xlu0 %v1104, 16
    %v1398 = vpop.permute.xlu0 %1397
    %1399 = vrot.lane.b32.xlu0 %v1152, 16
    %v1400 = vpop.permute.xlu0 %1399
    %1405 = vrot.lane.b32.xlu0 %v1334, 24
    %v1406 = vpop.permute.xlu0 %1405
    %1407 = vrot.lane.b32.xlu0 %v1382, 24
    %v1408 = vpop.permute.xlu0 %1407
    %v1411 = vsel %vm475, %v644, %v1390
    %v1412 = vsel %vm475, %v692, %v1392
    %vm1413 = vcmask 130048
    %v1414 = vsel %vm1413, %v1411, %v1398
    %v1415 = vsel %vm1413, %v1412, %v1400
    %vm1416 = vcmask 195584
    %v1417 = vsel %vm1416, %v1414, %v1406
    %v1418 = vsel %vm1416, %v1415, %v1408
    %v1419 = vpack.c.bf16 %v1418, %v1417
    %v1420 = vld [vmem:[%s10] sm:$0xf]
    %v1421 = vld [vmem:[%s10 + $0x4] sm:$0xf]
    %v1422 = vld [vmem:[%s10 + $0x8] sm:$0xf]
    %v1423 = vld [vmem:[%s10 + $0xc] sm:$0xf]
    %v1428 = vunpack.c.l.b16 %v1420
    %v1429 = vunpack.c.l.b16 %v1421
    %v1430 = vunpack.c.l.b16 %v1422
    %v1431 = vunpack.c.l.b16 %v1423
    %v1432 = vpack.c.b16 %v1429, %v1428
    %v1433 = vpack.c.b16 %v1431, %v1430
    %v1437 = vsel %vm357, %v1419, 0
    %1439 = vmatprep.subr.bf16.mxu0 0
    %1440 = vmatpush1.bf16.msra.mxu0 %v1432
    %1441 = vmatprep.subr.bf16.mxu0 0
    %1442 = vmatpush1.bf16.msra.mxu0 %v1433
    %1443 = vmatprep.subr.bf16.mxu0 0
    %1444 = vmatpush1.bf16.msra.mxu0 0
    %1445 = vmatprep.subr.bf16.mxu0 0
    %1446 = vmatpush1.bf16.msra.mxu0 0
    %1447 = vmatprep.subr.bf16.mxu0 0
    %1448 = vmatpush1.bf16.msra.mxu0 0
    %1449 = vmatprep.subr.bf16.mxu0 0
    %1450 = vmatpush1.bf16.msra.mxu0 0
    %1451 = vmatprep.subr.bf16.mxu0 0
    %1452 = vmatpush1.bf16.msra.mxu0 0
    %1453 = vmatprep.subr.bf16.mxu0 0
    %1454 = vmatpush1.bf16.msra.mxu0 0
    %1455 = vmatprep.subr.bf16.mxu0 0
    %1456 = vmatpush1.bf16.msra.mxu0 0
    %1457 = vmatprep.subr.bf16.mxu0 0
    %1458 = vmatpush1.bf16.msra.mxu0 0
    %1459 = vmatprep.subr.bf16.mxu0 0
    %1460 = vmatpush1.bf16.msra.mxu0 0
    %1461 = vmatprep.subr.bf16.mxu0 0
    %1462 = vmatpush1.bf16.msra.mxu0 0
    %1463 = vmatprep.subr.bf16.mxu0 0
    %1464 = vmatpush1.bf16.msra.mxu0 0
    %1465 = vmatprep.subr.bf16.mxu0 0
    %1466 = vmatpush1.bf16.msra.mxu0 0
    %1467 = vmatprep.subr.bf16.mxu0 0
    %1468 = vmatpush1.bf16.msra.mxu0 0
    %1469 = vmatprep.subr.bf16.mxu0 0
    %1470 = vmatpush1.bf16.msra.mxu0 0
    %1471 = vmatprep.mubr.bf16.mxu0 0
    %1472 = vmatmul.mubr.bf16.gmra.mrb[0].mxu0 %v1437
    %v1473 = vpop.f32.mrb[0].mxu0
    %v1474 = vadd.f32 0.0, %v1473
    %v1475 = vpop.f32.mrb[0].mxu0
    %v1476 = vpop.f32.mrb[0].mxu0
    %v1477 = vadd.f32 0.0, %v1476
    %v1478 = vpop.f32.mrb[0].mxu0
    %1479 = vdwg.mxu0
    %v1480 = vadd.f32 %v160, %v1474
    %v1481 = vadd.f32 %v161, %v1477
    %v1482 = vld [vmem:[%s11] sm:$0x1]
    %v1484 = vlaneseq
    %v1485 = vshrl.u32 %v1484, 7
    %v1486 = vsub.s32 0, %v1485
    %v1487 = vrot.slane %v1482, %v1486
    %v1489 = vadd.f32 %v1480, %v1487
    %v1490 = vadd.f32 %v1481, %v1487
    %v1491 = vld [vmem:[%s13] sm:$0x3]
    %v1492 = vsel %vm357, %v1489, 0.0
    %1493 = vadd.xlane.f32.xlu0 %v1492
    %v1494 = vpop.xlane.xlu0 %1493
    %v1495 = vsel %vm357, %v1490, 0.0
    %1496 = vadd.xlane.f32.xlu0 %v1495
    %v1497 = vpop.xlane.xlu0 %1496
    %v1498 = vmul.f32 %v1494, %v364
    %v1499 = vmul.f32 %v1497, %v364
    %v1500 = vsub.f32 %v1489, %v1498
    %v1501 = vsub.f32 %v1490, %v1499
    %v1502 = vmul.f32 %v1500, %v1500
    %v1503 = vmul.f32 %v1501, %v1501
    %v1504 = vsel %vm357, %v1502, 0.0
    %1505 = vadd.xlane.f32.xlu0 %v1504
    %v1506 = vpop.xlane.xlu0 %1505
    %v1507 = vsel %vm357, %v1503, 0.0
    %1508 = vadd.xlane.f32.xlu0 %v1507
    %v1509 = vpop.xlane.xlu0 %1508
    %v1510 = vmul.f32 %v1506, %v364
    %v1511 = vmul.f32 %v1509, %v364
    %v1512 = vadd.f32 %v1510, 1e-05
    %v1513 = vadd.f32 %v1511, 1e-05
    %v1514 = vrsqrt.pop %v1512
    %v1515 = vrsqrt.pop %v1513
    %v1516 = vmul.f32 %v1500, %v1514
    %v1517 = vmul.f32 %v1501, %v1515
    %v1518 = vlaneseq
    %v1519 = vshrl.u32 %v1518, 7
    %v1520 = vsub.s32 0, %v1519
    %v1521 = vrot.slane %v1491, %v1520
    %v1522 = vmul.f32 %v1516, %v1521
    %v1523 = vmul.f32 %v1517, %v1521
    %v1524 = vlaneseq
    %v1525 = vshrl.u32 %v1524, 7
    %v1526 = vsub.s32 1, %v1525
    %v1527 = vrot.slane %v1491, %v1526
    %v1528 = vadd.f32 %v1522, %v1527
    %v1529 = vadd.f32 %v1523, %v1527
    %v1530 = vpack.c.bf16 %v1529, %v1528
    %v1531 = vld [vmem:[%s14] sm:$0xf]
    %v1532 = vld [vmem:[%s14 + $0x4] sm:$0xf]
    %v1533 = vld [vmem:[%s14 + $0x8] sm:$0xf]
    %v1534 = vld [vmem:[%s14 + $0xc] sm:$0xf]
    %v1535 = vld [vmem:[%s15] sm:$0x1]
    %v1537 = vlaneseq
    %v1538 = vshrl.u32 %v1537, 7
    %v1539 = vsub.s32 0, %v1538
    %v1540 = vrot.slane %v1535, %v1539
    %v1546 = vunpack.c.l.b16 %v1531
    %v1547 = vunpack.c.l.b16 %v1532
    %v1548 = vunpack.c.l.b16 %v1533
    %v1549 = vunpack.c.l.b16 %v1534
    %v1550 = vpack.c.b16 %v1547, %v1546
    %v1551 = vpack.c.b16 %v1549, %v1548
    %v1555 = vsel %vm357, %v1530, 0
    %1557 = vmatprep.subr.bf16.mxu0 0
    %1558 = vmatpush1.bf16.msra.mxu0 %v1550
    %1559 = vmatprep.subr.bf16.mxu0 0
    %1560 = vmatpush1.bf16.msra.mxu0 %v1551
    %1561 = vmatprep.subr.bf16.mxu0 0
    %1562 = vmatpush1.bf16.msra.mxu0 0
    %1563 = vmatprep.subr.bf16.mxu0 0
    %1564 = vmatpush1.bf16.msra.mxu0 0
    %1565 = vmatprep.subr.bf16.mxu0 0
    %1566 = vmatpush1.bf16.msra.mxu0 0
    %1567 = vmatprep.subr.bf16.mxu0 0
    %1568 = vmatpush1.bf16.msra.mxu0 0
    %1569 = vmatprep.subr.bf16.mxu0 0
    %1570 = vmatpush1.bf16.msra.mxu0 0
    %1571 = vmatprep.subr.bf16.mxu0 0
    %1572 = vmatpush1.bf16.msra.mxu0 0
    %1573 = vmatprep.subr.bf16.mxu0 0
    %1574 = vmatpush1.bf16.msra.mxu0 0
    %1575 = vmatprep.subr.bf16.mxu0 0
    %1576 = vmatpush1.bf16.msra.mxu0 0
    %1577 = vmatprep.subr.bf16.mxu0 0
    %1578 = vmatpush1.bf16.msra.mxu0 0
    %1579 = vmatprep.subr.bf16.mxu0 0
    %1580 = vmatpush1.bf16.msra.mxu0 0
    %1581 = vmatprep.subr.bf16.mxu0 0
    %1582 = vmatpush1.bf16.msra.mxu0 0
    %1583 = vmatprep.subr.bf16.mxu0 0
    %1584 = vmatpush1.bf16.msra.mxu0 0
    %1585 = vmatprep.subr.bf16.mxu0 0
    %1586 = vmatpush1.bf16.msra.mxu0 0
    %1587 = vmatprep.subr.bf16.mxu0 0
    %1588 = vmatpush1.bf16.msra.mxu0 0
    %1589 = vmatprep.mubr.bf16.mxu0 0
    %1590 = vmatmul.mubr.bf16.gmra.mrb[0].mxu0 %v1555
    %v1591 = vpop.f32.mrb[0].mxu0
    %v1592 = vadd.f32 %v1540, %v1591
    %v1593 = vpop.f32.mrb[0].mxu0
    %v1594 = vpop.f32.mrb[0].mxu0
    %v1595 = vadd.f32 %v1540, %v1594
    %v1596 = vpop.f32.mrb[0].mxu0
    %1597 = vdwg.mxu0
    %v1598 = vmul.f32 %v1592, %v1592
    %v1599 = vmul.f32 %v1595, %v1595
    %v1600 = vmul.f32 %v1592, %v1598
    %v1601 = vmul.f32 %v1595, %v1599
    %v1602 = vmul.f32 %v1600, 0.044715
    %v1603 = vmul.f32 %v1601, 0.044715
    %v1604 = vadd.f32 %v1592, %v1602
    %v1605 = vadd.f32 %v1595, %v1603
    %v1606 = vmul.f32 %v1604, 0.7978846
    %v1607 = vmul.f32 %v1605, 0.7978846
    %v1608 = vtanh.pop %v1606
    %v1609 = vtanh.pop %v1607
    %v1610 = vadd.f32 %v1608, 1.0
    %v1611 = vadd.f32 %v1609, 1.0
    %v1612 = vmul.f32 %v1610, 0.5
    %v1613 = vmul.f32 %v1611, 0.5
    %v1614 = vmul.f32 %v1592, %v1612
    %v1615 = vmul.f32 %v1595, %v1613
    %v1616 = vpack.c.bf16 %v1615, %v1614
    %v1617 = vld [vmem:[%s16] sm:$0xf]
    %v1618 = vld [vmem:[%s16 + $0x4] sm:$0xf]
    %v1619 = vld [vmem:[%s16 + $0x8] sm:$0xf]
    %v1620 = vld [vmem:[%s16 + $0xc] sm:$0xf]
    %v1621 = vld [vmem:[%s16 + $0x10] sm:$0xf]
    %v1622 = vld [vmem:[%s16 + $0x14] sm:$0xf]
    %v1623 = vld [vmem:[%s16 + $0x18] sm:$0xf]
    %v1624 = vld [vmem:[%s16 + $0x1c] sm:$0xf]
    %v1633 = vunpack.c.l.b16 %v1617
    %v1634 = vunpack.c.l.b16 %v1618
    %v1635 = vunpack.c.l.b16 %v1619
    %v1636 = vunpack.c.l.b16 %v1620
    %v1637 = vunpack.c.l.b16 %v1621
    %v1638 = vunpack.c.l.b16 %v1622
    %v1639 = vunpack.c.l.b16 %v1623
    %v1640 = vunpack.c.l.b16 %v1624
    %v1641 = vpack.c.b16 %v1634, %v1633
    %v1642 = vpack.c.b16 %v1636, %v1635
    %v1643 = vpack.c.b16 %v1638, %v1637
    %v1644 = vpack.c.b16 %v1640, %v1639
    %vm1649 = vcmask 523264
    %v1651 = vsel %vm1649, %v1616, 0
    %1653 = vmatprep.subr.bf16.mxu0 0
    %1654 = vmatpush1.bf16.msra.mxu0 %v1641
    %1655 = vmatprep.subr.bf16.mxu0 0
    %1656 = vmatpush1.bf16.msra.mxu0 %v1642
    %1657 = vmatprep.subr.bf16.mxu0 0
    %1658 = vmatpush1.bf16.msra.mxu0 %v1643
    %1659 = vmatprep.subr.bf16.mxu0 0
    %1660 = vmatpush1.bf16.msra.mxu0 %v1644
    %1661 = vmatprep.subr.bf16.mxu0 0
    %1662 = vmatpush1.bf16.msra.mxu0 0
    %1663 = vmatprep.subr.bf16.mxu0 0
    %1664 = vmatpush1.bf16.msra.mxu0 0
    %1665 = vmatprep.subr.bf16.mxu0 0
    %1666 = vmatpush1.bf16.msra.mxu0 0
    %1667 = vmatprep.subr.bf16.mxu0 0
    %1668 = vmatpush1.bf16.msra.mxu0 0
    %1669 = vmatprep.subr.bf16.mxu0 0
    %1670 = vmatpush1.bf16.msra.mxu0 0
    %1671 = vmatprep.subr.bf16.mxu0 0
    %1672 = vmatpush1.bf16.msra.mxu0 0
    %1673 = vmatprep.subr.bf16.mxu0 0
    %1674 = vmatpush1.bf16.msra.mxu0 0
    %1675 = vmatprep.subr.bf16.mxu0 0
    %1676 = vmatpush1.bf16.msra.mxu0 0
    %1677 = vmatprep.subr.bf16.mxu0 0
    %1678 = vmatpush1.bf16.msra.mxu0 0
    %1679 = vmatprep.subr.bf16.mxu0 0
    %1680 = vmatpush1.bf16.msra.mxu0 0
    %1681 = vmatprep.subr.bf16.mxu0 0
    %1682 = vmatpush1.bf16.msra.mxu0 0
    %1683 = vmatprep.subr.bf16.mxu0 0
    %1684 = vmatpush1.bf16.msra.mxu0 0
    %1685 = vmatprep.mubr.bf16.mxu0 0
    %1686 = vmatmul.mubr.bf16.gmra.mrb[0].mxu0 %v1651
    %v1687 = vpop.f32.mrb[0].mxu0
    %v1688 = vadd.f32 0.0, %v1687
    %v1689 = vpop.f32.mrb[0].mxu0
    %v1690 = vpop.f32.mrb[0].mxu0
    %v1691 = vadd.f32 0.0, %v1690
    %v1692 = vpop.f32.mrb[0].mxu0
    %1693 = vdwg.mxu0
    %v1694 = vadd.f32 %v1489, %v1688
    %v1695 = vadd.f32 %v1490, %v1691
    %v1696 = vld [vmem:[%s17] sm:$0x1]
    %v1698 = vlaneseq
    %v1699 = vshrl.u32 %v1698, 7
    %v1700 = vsub.s32 0, %v1699
    %v1701 = vrot.slane %v1696, %v1700
    %v1703 = vadd.f32 %v1694, %v1701
    %v1704 = vadd.f32 %v1695, %v1701
    %s1705 = scalar_lea.vmem %s12, 2
    %v1706 = vld [vmem:[%s1705] sm:$0x3]
    %v1707 = vsel %vm357, %v1703, 0.0
    %1708 = vadd.xlane.f32.xlu0 %v1707
    %v1709 = vpop.xlane.xlu0 %1708
    %v1710 = vsel %vm357, %v1704, 0.0
    %1711 = vadd.xlane.f32.xlu0 %v1710
    %v1712 = vpop.xlane.xlu0 %1711
    %v1713 = vmul.f32 %v1709, %v364
    %v1714 = vmul.f32 %v1712, %v364
    %v1715 = vsub.f32 %v1703, %v1713
    %v1716 = vsub.f32 %v1704, %v1714
    %v1717 = vmul.f32 %v1715, %v1715
    %v1718 = vmul.f32 %v1716, %v1716
    %v1719 = vsel %vm357, %v1717, 0.0
    %1720 = vadd.xlane.f32.xlu0 %v1719
    %v1721 = vpop.xlane.xlu0 %1720
    %v1722 = vsel %vm357, %v1718, 0.0
    %1723 = vadd.xlane.f32.xlu0 %v1722
    %v1724 = vpop.xlane.xlu0 %1723
    %v1725 = vmul.f32 %v1721, %v364
    %v1726 = vmul.f32 %v1724, %v364
    %v1727 = vadd.f32 %v1725, 1e-05
    %v1728 = vadd.f32 %v1726, 1e-05
    %v1729 = vrsqrt.pop %v1727
    %v1730 = vrsqrt.pop %v1728
    %v1731 = vmul.f32 %v1715, %v1729
    %v1732 = vmul.f32 %v1716, %v1730
    %v1733 = vlaneseq
    %v1734 = vshrl.u32 %v1733, 7
    %v1735 = vsub.s32 0, %v1734
    %v1736 = vrot.slane %v1706, %v1735
    %v1737 = vmul.f32 %v1731, %v1736
    %v1738 = vmul.f32 %v1732, %v1736
    %v1739 = vlaneseq
    %v1740 = vshrl.u32 %v1739, 7
    %v1741 = vsub.s32 1, %v1740
    %v1742 = vrot.slane %v1706, %v1741
    %v1743 = vadd.f32 %v1737, %v1742
    %v1744 = vadd.f32 %v1738, %v1742
    %v1745 = vpack.c.bf16 %v1744, %v1743
    %s1746 = scalar_lea.vmem %s8, 16
    %v1747 = vld [vmem:[%s1746] sm:$0xf]
    %v1748 = vld [vmem:[%s1746 + $0x4] sm:$0xf]
    %v1749 = vld [vmem:[%s1746 + $0x8] sm:$0xf]
    %v1750 = vld [vmem:[%s1746 + $0xc] sm:$0xf]
    %s1751 = scalar_lea.vmem %s9, 1
    %v1752 = vld [vmem:[%s1751] sm:$0x1]
    %v1754 = vlaneseq
    %v1755 = vshrl.u32 %v1754, 7
    %v1756 = vsub.s32 0, %v1755
    %v1757 = vrot.slane %v1752, %v1756
    %v1763 = vunpack.c.l.b16 %v1747
    %v1764 = vunpack.c.l.b16 %v1748
    %v1765 = vunpack.c.l.b16 %v1749
    %v1766 = vunpack.c.l.b16 %v1750
    %v1767 = vpack.c.b16 %v1764, %v1763
    %v1768 = vpack.c.b16 %v1766, %v1765
    %v1772 = vsel %vm357, %v1745, 0
    %1774 = vmatprep.subr.bf16.mxu0 0
    %1775 = vmatpush1.bf16.msra.mxu0 %v1767
    %1776 = vmatprep.subr.bf16.mxu0 0
    %1777 = vmatpush1.bf16.msra.mxu0 %v1768
    %1778 = vmatprep.subr.bf16.mxu0 0
    %1779 = vmatpush1.bf16.msra.mxu0 0
    %1780 = vmatprep.subr.bf16.mxu0 0
    %1781 = vmatpush1.bf16.msra.mxu0 0
    %1782 = vmatprep.subr.bf16.mxu0 0
    %1783 = vmatpush1.bf16.msra.mxu0 0
    %1784 = vmatprep.subr.bf16.mxu0 0
    %1785 = vmatpush1.bf16.msra.mxu0 0
    %1786 = vmatprep.subr.bf16.mxu0 0
    %1787 = vmatpush1.bf16.msra.mxu0 0
    %1788 = vmatprep.subr.bf16.mxu0 0
    %1789 = vmatpush1.bf16.msra.mxu0 0
    %1790 = vmatprep.subr.bf16.mxu0 0
    %1791 = vmatpush1.bf16.msra.mxu0 0
    %1792 = vmatprep.subr.bf16.mxu0 0
    %1793 = vmatpush1.bf16.msra.mxu0 0
    %1794 = vmatprep.subr.bf16.mxu0 0
    %1795 = vmatpush1.bf16.msra.mxu0 0
    %1796 = vmatprep.subr.bf16.mxu0 0
    %1797 = vmatpush1.bf16.msra.mxu0 0
    %1798 = vmatprep.subr.bf16.mxu0 0
    %1799 = vmatpush1.bf16.msra.mxu0 0
    %1800 = vmatprep.subr.bf16.mxu0 0
    %1801 = vmatpush1.bf16.msra.mxu0 0
    %1802 = vmatprep.subr.bf16.mxu0 0
    %1803 = vmatpush1.bf16.msra.mxu0 0
    %1804 = vmatprep.subr.bf16.mxu0 0
    %1805 = vmatpush1.bf16.msra.mxu0 0
    %1806 = vmatprep.mubr.bf16.mxu0 0
    %1807 = vmatmul.mubr.bf16.gmra.mrb[0].mxu0 %v1772
    %v1808 = vpop.f32.mrb[0].mxu0
    %v1809 = vadd.f32 %v1757, %v1808
    %v1810 = vpop.f32.mrb[0].mxu0
    %v1811 = vpop.f32.mrb[0].mxu0
    %v1812 = vadd.f32 %v1757, %v1811
    %v1813 = vpop.f32.mrb[0].mxu0
    %1814 = vdwg.mxu0
    %v1815 = vpack.c.bf16 %v1809, %v1809
    %v1816 = vpack.c.bf16 %v1812, %v1812
    %s1817 = sld [smem:[#allocation2 + $0x8]]
    %s1818 = sld [smem:[#allocation2 + $0x9]]
    %v1819 = vstv %s1817
    %v1820 = vmul.f32 %v164, %v1819
    %v1821 = vmul.f32 %v165, %v1819
    %1823 = vrot.lane.b32.xlu0 %v1815, 96
    %v1824 = vpop.permute.xlu0 %1823
    %v1826 = vsel %vm475, %v1815, 0
    %v1829 = vsel %vm475, %v1824, 0
    %1831 = vmatprep.subr.bf16.mxu0 0
    %1832 = vmatpush1.bf16.xpose.msra.mxu0 %v1829
    %1833 = vmatprep.subr.bf16.mxu0 0
    %1834 = vmatpush1.bf16.xpose.msra.mxu0 0
    %1835 = vmatprep.subr.bf16.mxu0 0
    %1836 = vmatpush1.bf16.xpose.msra.mxu0 0
    %1837 = vmatprep.subr.bf16.mxu0 0
    %1838 = vmatpush1.bf16.xpose.msra.mxu0 0
    %1839 = vmatprep.subr.bf16.mxu0 0
    %1840 = vmatpush1.bf16.xpose.msra.mxu0 0
    %1841 = vmatprep.subr.bf16.mxu0 0
    %1842 = vmatpush1.bf16.xpose.msra.mxu0 0
    %1843 = vmatprep.subr.bf16.mxu0 0
    %1844 = vmatpush1.bf16.xpose.msra.mxu0 0
    %1845 = vmatprep.subr.bf16.mxu0 0
    %1846 = vmatpush1.bf16.xpose.msra.mxu0 0
    %1847 = vmatprep.subr.bf16.mxu0 0
    %1848 = vmatpush1.bf16.xpose.msra.mxu0 0
    %1849 = vmatprep.subr.bf16.mxu0 0
    %1850 = vmatpush1.bf16.xpose.msra.mxu0 0
    %1851 = vmatprep.subr.bf16.mxu0 0
    %1852 = vmatpush1.bf16.xpose.msra.mxu0 0
    %1853 = vmatprep.subr.bf16.mxu0 0
    %1854 = vmatpush1.bf16.xpose.msra.mxu0 0
    %1855 = vmatprep.subr.bf16.mxu0 0
    %1856 = vmatpush1.bf16.xpose.msra.mxu0 0
    %1857 = vmatprep.subr.bf16.mxu0 0
    %1858 = vmatpush1.bf16.xpose.msra.mxu0 0
    %1859 = vmatprep.subr.bf16.mxu0 0
    %1860 = vmatpush1.bf16.xpose.msra.mxu0 0
    %1861 = vmatprep.subr.bf16.mxu0 0
    %1862 = vmatpush1.bf16.xpose.msra.mxu0 0
    %1863 = vmatprep.mubr.bf16.mxu0 0
    %1864 = vmatmul.mubr.bf16.gmra.mrb[0].mxu0 %v1826
    %v1865 = vpop.f32.mrb[0].mxu0
    %v1866 = vadd.f32 %v1820, %v1865
    %v1867 = vpop.f32.mrb[0].mxu0
    %v1868 = vpop.f32.mrb[0].mxu0
    %v1869 = vpop.f32.mrb[0].mxu0
    %1870 = vdwg.mxu0
    %1872 = vrot.lane.b32.xlu0 %v1816, 96
    %v1873 = vpop.permute.xlu0 %1872
    %v1875 = vsel %vm475, %v1816, 0
    %v1878 = vsel %vm475, %v1873, 0
    %1880 = vmatprep.subr.bf16.mxu0 0
    %1881 = vmatpush1.bf16.xpose.msra.mxu0 %v1878
    %1882 = vmatprep.subr.bf16.mxu0 0
    %1883 = vmatpush1.bf16.xpose.msra.mxu0 0
    %1884 = vmatprep.subr.bf16.mxu0 0
    %1885 = vmatpush1.bf16.xpose.msra.mxu0 0
    %1886 = vmatprep.subr.bf16.mxu0 0
    %1887 = vmatpush1.bf16.xpose.msra.mxu0 0
    %1888 = vmatprep.subr.bf16.mxu0 0
    %1889 = vmatpush1.bf16.xpose.msra.mxu0 0
    %1890 = vmatprep.subr.bf16.mxu0 0
    %1891 = vmatpush1.bf16.xpose.msra.mxu0 0
    %1892 = vmatprep.subr.bf16.mxu0 0
    %1893 = vmatpush1.bf16.xpose.msra.mxu0 0
    %1894 = vmatprep.subr.bf16.mxu0 0
    %1895 = vmatpush1.bf16.xpose.msra.mxu0 0
    %1896 = vmatprep.subr.bf16.mxu0 0
    %1897 = vmatpush1.bf16.xpose.msra.mxu0 0
    %1898 = vmatprep.subr.bf16.mxu0 0
    %1899 = vmatpush1.bf16.xpose.msra.mxu0 0
    %1900 = vmatprep.subr.bf16.mxu0 0
    %1901 = vmatpush1.bf16.xpose.msra.mxu0 0
    %1902 = vmatprep.subr.bf16.mxu0 0
    %1903 = vmatpush1.bf16.xpose.msra.mxu0 0
    %1904 = vmatprep.subr.bf16.mxu0 0
    %1905 = vmatpush1.bf16.xpose.msra.mxu0 0
    %1906 = vmatprep.subr.bf16.mxu0 0
    %1907 = vmatpush1.bf16.xpose.msra.mxu0 0
    %1908 = vmatprep.subr.bf16.mxu0 0
    %1909 = vmatpush1.bf16.xpose.msra.mxu0 0
    %1910 = vmatprep.subr.bf16.mxu0 0
    %1911 = vmatpush1.bf16.xpose.msra.mxu0 0
    %1912 = vmatprep.mubr.bf16.mxu0 0
    %1913 = vmatmul.mubr.bf16.gmra.mrb[0].mxu0 %v1875
    %v1914 = vpop.f32.mrb[0].mxu0
    %v1915 = vadd.f32 %v1821, %v1914
    %v1916 = vpop.f32.mrb[0].mxu0
    %v1917 = vpop.f32.mrb[0].mxu0
    %v1918 = vpop.f32.mrb[0].mxu0
    %1919 = vdwg.mxu0
    %v1920 = vstv %s1818
    %v1921 = vmul.f32 %v348, %v1920
    %v1922 = vmul.f32 %v355, %v1920
    %v1923 = vsub.f32 %v1866, %v1921
    %v1924 = vsub.f32 %v1915, %v1922
    %v1925 = vsel %vm475, %v1923, -inf
    %1926 = vmax.xlane.f32.xlu0 %v1925
    %v1927 = vpop.xlane.xlu0 %1926
    %v1928 = vsel %vm475, %v1924, -inf
    %1929 = vmax.xlane.f32.xlu0 %v1928
    %v1930 = vpop.xlane.xlu0 %1929
    %v1931 = vsub.f32 %v1923, %v1927
    %v1932 = vsub.f32 %v1924, %v1930
    %v1933 = vmul.f32 %v1931, 1.442695
    %v1934 = vpow.pop %v1933
    %v1935 = vmul.f32 %v1932, 1.442695
    %v1936 = vpow.pop %v1935
    %v1937 = vsel %vm475, %v1934, 0.0
    %1938 = vadd.xlane.f32.xlu0 %v1937
    %v1939 = vpop.xlane.xlu0 %1938
    %v1940 = vsel %vm475, %v1936, 0.0
    %1941 = vadd.xlane.f32.xlu0 %v1940
    %v1942 = vpop.xlane.xlu0 %1941
    %v1943 = vrcp.pop %v1939
    %v1944 = vrcp.pop %v1942
    %v1945 = vmul.f32 %v1934, %v1943
    %v1946 = vmul.f32 %v1936, %v1944
    %v1947 = vpack.c.bf16 %v1945, %v1945
    %v1948 = vpack.c.bf16 %v1946, %v1946
    %1949 = vrot.lane.b32.xlu0 %v1815, 64
    %v1950 = vpop.permute.xlu0 %1949
    %v1952 = vsel %vm475, %v1947, 0
    %v1955 = vsel %vm605, %v1950, 0
    %1957 = vmatprep.subr.bf16.mxu0 0
    %1958 = vmatpush1.bf16.msra.mxu0 %v1955
    %1959 = vmatprep.subr.bf16.mxu0 0
    %1960 = vmatpush1.bf16.msra.mxu0 0
    %1961 = vmatprep.subr.bf16.mxu0 0
    %1962 = vmatpush1.bf16.msra.mxu0 0
    %1963 = vmatprep.subr.bf16.mxu0 0
    %1964 = vmatpush1.bf16.msra.mxu0 0
    %1965 = vmatprep.subr.bf16.mxu0 0
    %1966 = vmatpush1.bf16.msra.mxu0 0
    %1967 = vmatprep.subr.bf16.mxu0 0
    %1968 = vmatpush1.bf16.msra.mxu0 0
    %1969 = vmatprep.subr.bf16.mxu0 0
    %1970 = vmatpush1.bf16.msra.mxu0 0
    %1971 = vmatprep.subr.bf16.mxu0 0
    %1972 = vmatpush1.bf16.msra.mxu0 0
    %1973 = vmatprep.subr.bf16.mxu0 0
    %1974 = vmatpush1.bf16.msra.mxu0 0
    %1975 = vmatprep.subr.bf16.mxu0 0
    %1976 = vmatpush1.bf16.msra.mxu0 0
    %1977 = vmatprep.subr.bf16.mxu0 0
    %1978 = vmatpush1.bf16.msra.mxu0 0
    %1979 = vmatprep.subr.bf16.mxu0 0
    %1980 = vmatpush1.bf16.msra.mxu0 0
    %1981 = vmatprep.subr.bf16.mxu0 0
    %1982 = vmatpush1.bf16.msra.mxu0 0
    %1983 = vmatprep.subr.bf16.mxu0 0
    %1984 = vmatpush1.bf16.msra.mxu0 0
    %1985 = vmatprep.subr.bf16.mxu0 0
    %1986 = vmatpush1.bf16.msra.mxu0 0
    %1987 = vmatprep.subr.bf16.mxu0 0
    %1988 = vmatpush1.bf16.msra.mxu0 0
    %1989 = vmatprep.mubr.bf16.mxu0 0
    %1990 = vmatmul.mubr.bf16.gmra.mrb[0].mxu0 %v1952
    %v1991 = vpop.f32.mrb[0].mxu0
    %v1992 = vadd.f32 0.0, %v1991
    %v1993 = vpop.f32.mrb[0].mxu0
    %v1994 = vpop.f32.mrb[0].mxu0
    %v1995 = vpop.f32.mrb[0].mxu0
    %1996 = vdwg.mxu0
    %1997 = vrot.lane.b32.xlu0 %v1816, 64
    %v1998 = vpop.permute.xlu0 %1997
    %v2000 = vsel %vm475, %v1948, 0
    %v2003 = vsel %vm605, %v1998, 0
    %2005 = vmatprep.subr.bf16.mxu0 0
    %2006 = vmatpush1.bf16.msra.mxu0 %v2003
    %2007 = vmatprep.subr.bf16.mxu0 0
    %2008 = vmatpush1.bf16.msra.mxu0 0
    %2009 = vmatprep.subr.bf16.mxu0 0
    %2010 = vmatpush1.bf16.msra.mxu0 0
    %2011 = vmatprep.subr.bf16.mxu0 0
    %2012 = vmatpush1.bf16.msra.mxu0 0
    %2013 = vmatprep.subr.bf16.mxu0 0
    %2014 = vmatpush1.bf16.msra.mxu0 0
    %2015 = vmatprep.subr.bf16.mxu0 0
    %2016 = vmatpush1.bf16.msra.mxu0 0
    %2017 = vmatprep.subr.bf16.mxu0 0
    %2018 = vmatpush1.bf16.msra.mxu0 0
    %2019 = vmatprep.subr.bf16.mxu0 0
    %2020 = vmatpush1.bf16.msra.mxu0 0
    %2021 = vmatprep.subr.bf16.mxu0 0
    %2022 = vmatpush1.bf16.msra.mxu0 0
    %2023 = vmatprep.subr.bf16.mxu0 0
    %2024 = vmatpush1.bf16.msra.mxu0 0
    %2025 = vmatprep.subr.bf16.mxu0 0
    %2026 = vmatpush1.bf16.msra.mxu0 0
    %2027 = vmatprep.subr.bf16.mxu0 0
    %2028 = vmatpush1.bf16.msra.mxu0 0
    %2029 = vmatprep.subr.bf16.mxu0 0
    %2030 = vmatpush1.bf16.msra.mxu0 0
    %2031 = vmatprep.subr.bf16.mxu0 0
    %2032 = vmatpush1.bf16.msra.mxu0 0
    %2033 = vmatprep.subr.bf16.mxu0 0
    %2034 = vmatpush1.bf16.msra.mxu0 0
    %2035 = vmatprep.subr.bf16.mxu0 0
    %2036 = vmatpush1.bf16.msra.mxu0 0
    %2037 = vmatprep.mubr.bf16.mxu0 0
    %2038 = vmatmul.mubr.bf16.gmra.mrb[0].mxu0 %v2000
    %v2039 = vpop.f32.mrb[0].mxu0
    %v2040 = vadd.f32 0.0, %v2039
    %v2041 = vpop.f32.mrb[0].mxu0
    %v2042 = vpop.f32.mrb[0].mxu0
    %v2043 = vpop.f32.mrb[0].mxu0
    %2044 = vdwg.mxu0
    %s2045 = sld [smem:[#allocation2 + $0xa]]
    %s2046 = sld [smem:[#allocation2 + $0xb]]
    %v2047 = vstv %s2045
    %v2048 = vmul.f32 %v164, %v2047
    %v2049 = vmul.f32 %v165, %v2047
    %2050 = vrot.lane.b32.xlu0 %v1815, 120
    %v2051 = vpop.permute.xlu0 %2050
    %2052 = vrot.lane.b32.xlu0 %v1815, 88
    %v2053 = vpop.permute.xlu0 %2052
    %v2055 = vsel %vm475, %v2051, 0
    %v2058 = vsel %vm475, %v2053, 0
    %2060 = vmatprep.subr.bf16.mxu0 0
    %2061 = vmatpush1.bf16.xpose.msra.mxu0 %v2058
    %2062 = vmatprep.subr.bf16.mxu0 0
    %2063 = vmatpush1.bf16.xpose.msra.mxu0 0
    %2064 = vmatprep.subr.bf16.mxu0 0
    %2065 = vmatpush1.bf16.xpose.msra.mxu0 0
    %2066 = vmatprep.subr.bf16.mxu0 0
    %2067 = vmatpush1.bf16.xpose.msra.mxu0 0
    %2068 = vmatprep.subr.bf16.mxu0 0
    %2069 = vmatpush1.bf16.xpose.msra.mxu0 0
    %2070 = vmatprep.subr.bf16.mxu0 0
    %2071 = vmatpush1.bf16.xpose.msra.mxu0 0
    %2072 = vmatprep.subr.bf16.mxu0 0
    %2073 = vmatpush1.bf16.xpose.msra.mxu0 0
    %2074 = vmatprep.subr.bf16.mxu0 0
    %2075 = vmatpush1.bf16.xpose.msra.mxu0 0
    %2076 = vmatprep.subr.bf16.mxu0 0
    %2077 = vmatpush1.bf16.xpose.msra.mxu0 0
    %2078 = vmatprep.subr.bf16.mxu0 0
    %2079 = vmatpush1.bf16.xpose.msra.mxu0 0
    %2080 = vmatprep.subr.bf16.mxu0 0
    %2081 = vmatpush1.bf16.xpose.msra.mxu0 0
    %2082 = vmatprep.subr.bf16.mxu0 0
    %2083 = vmatpush1.bf16.xpose.msra.mxu0 0
    %2084 = vmatprep.subr.bf16.mxu0 0
    %2085 = vmatpush1.bf16.xpose.msra.mxu0 0
    %2086 = vmatprep.subr.bf16.mxu0 0
    %2087 = vmatpush1.bf16.xpose.msra.mxu0 0
    %2088 = vmatprep.subr.bf16.mxu0 0
    %2089 = vmatpush1.bf16.xpose.msra.mxu0 0
    %2090 = vmatprep.subr.bf16.mxu0 0
    %2091 = vmatpush1.bf16.xpose.msra.mxu0 0
    %2092 = vmatprep.mubr.bf16.mxu0 0
    %2093 = vmatmul.mubr.bf16.gmra.mrb[0].mxu0 %v2055
    %v2094 = vpop.f32.mrb[0].mxu0
    %v2095 = vadd.f32 %v2048, %v2094
    %v2096 = vpop.f32.mrb[0].mxu0
    %v2097 = vpop.f32.mrb[0].mxu0
    %v2098 = vpop.f32.mrb[0].mxu0
    %2099 = vdwg.mxu0
    %2100 = vrot.lane.b32.xlu0 %v1816, 120
    %v2101 = vpop.permute.xlu0 %2100
    %2102 = vrot.lane.b32.xlu0 %v1816, 88
    %v2103 = vpop.permute.xlu0 %2102
    %v2105 = vsel %vm475, %v2101, 0
    %v2108 = vsel %vm475, %v2103, 0
    %2110 = vmatprep.subr.bf16.mxu0 0
    %2111 = vmatpush1.bf16.xpose.msra.mxu0 %v2108
    %2112 = vmatprep.subr.bf16.mxu0 0
    %2113 = vmatpush1.bf16.xpose.msra.mxu0 0
    %2114 = vmatprep.subr.bf16.mxu0 0
    %2115 = vmatpush1.bf16.xpose.msra.mxu0 0
    %2116 = vmatprep.subr.bf16.mxu0 0
    %2117 = vmatpush1.bf16.xpose.msra.mxu0 0
    %2118 = vmatprep.subr.bf16.mxu0 0
    %2119 = vmatpush1.bf16.xpose.msra.mxu0 0
    %2120 = vmatprep.subr.bf16.mxu0 0
    %2121 = vmatpush1.bf16.xpose.msra.mxu0 0
    %2122 = vmatprep.subr.bf16.mxu0 0
    %2123 = vmatpush1.bf16.xpose.msra.mxu0 0
    %2124 = vmatprep.subr.bf16.mxu0 0
    %2125 = vmatpush1.bf16.xpose.msra.mxu0 0
    %2126 = vmatprep.subr.bf16.mxu0 0
    %2127 = vmatpush1.bf16.xpose.msra.mxu0 0
    %2128 = vmatprep.subr.bf16.mxu0 0
    %2129 = vmatpush1.bf16.xpose.msra.mxu0 0
    %2130 = vmatprep.subr.bf16.mxu0 0
    %2131 = vmatpush1.bf16.xpose.msra.mxu0 0
    %2132 = vmatprep.subr.bf16.mxu0 0
    %2133 = vmatpush1.bf16.xpose.msra.mxu0 0
    %2134 = vmatprep.subr.bf16.mxu0 0
    %2135 = vmatpush1.bf16.xpose.msra.mxu0 0
    %2136 = vmatprep.subr.bf16.mxu0 0
    %2137 = vmatpush1.bf16.xpose.msra.mxu0 0
    %2138 = vmatprep.subr.bf16.mxu0 0
    %2139 = vmatpush1.bf16.xpose.msra.mxu0 0
    %2140 = vmatprep.subr.bf16.mxu0 0
    %2141 = vmatpush1.bf16.xpose.msra.mxu0 0
    %2142 = vmatprep.mubr.bf16.mxu0 0
    %2143 = vmatmul.mubr.bf16.gmra.mrb[0].mxu0 %v2105
    %v2144 = vpop.f32.mrb[0].mxu0
    %v2145 = vadd.f32 %v2049, %v2144
    %v2146 = vpop.f32.mrb[0].mxu0
    %v2147 = vpop.f32.mrb[0].mxu0
    %v2148 = vpop.f32.mrb[0].mxu0
    %2149 = vdwg.mxu0
    %v2150 = vstv %s2046
    %v2151 = vmul.f32 %v348, %v2150
    %v2152 = vmul.f32 %v355, %v2150
    %v2153 = vsub.f32 %v2095, %v2151
    %v2154 = vsub.f32 %v2145, %v2152
    %v2155 = vsel %vm475, %v2153, -inf
    %2156 = vmax.xlane.f32.xlu0 %v2155
    %v2157 = vpop.xlane.xlu0 %2156
    %v2158 = vsel %vm475, %v2154, -inf
    %2159 = vmax.xlane.f32.xlu0 %v2158
    %v2160 = vpop.xlane.xlu0 %2159
    %v2161 = vsub.f32 %v2153, %v2157
    %v2162 = vsub.f32 %v2154, %v2160
    %v2163 = vmul.f32 %v2161, 1.442695
    %v2164 = vpow.pop %v2163
    %v2165 = vmul.f32 %v2162, 1.442695
    %v2166 = vpow.pop %v2165
    %v2167 = vsel %vm475, %v2164, 0.0
    %2168 = vadd.xlane.f32.xlu0 %v2167
    %v2169 = vpop.xlane.xlu0 %2168
    %v2170 = vsel %vm475, %v2166, 0.0
    %2171 = vadd.xlane.f32.xlu0 %v2170
    %v2172 = vpop.xlane.xlu0 %2171
    %v2173 = vrcp.pop %v2169
    %v2174 = vrcp.pop %v2172
    %v2175 = vmul.f32 %v2164, %v2173
    %v2176 = vmul.f32 %v2166, %v2174
    %v2177 = vpack.c.bf16 %v2175, %v2175
    %v2178 = vpack.c.bf16 %v2176, %v2176
    %2179 = vrot.lane.b32.xlu0 %v1815, 56
    %v2180 = vpop.permute.xlu0 %2179
    %v2182 = vsel %vm475, %v2177, 0
    %v2185 = vsel %vm605, %v2180, 0
    %2187 = vmatprep.subr.bf16.mxu0 0
    %2188 = vmatpush1.bf16.msra.mxu0 %v2185
    %2189 = vmatprep.subr.bf16.mxu0 0
    %2190 = vmatpush1.bf16.msra.mxu0 0
    %2191 = vmatprep.subr.bf16.mxu0 0
    %2192 = vmatpush1.bf16.msra.mxu0 0
    %2193 = vmatprep.subr.bf16.mxu0 0
    %2194 = vmatpush1.bf16.msra.mxu0 0
    %2195 = vmatprep.subr.bf16.mxu0 0
    %2196 = vmatpush1.bf16.msra.mxu0 0
    %2197 = vmatprep.subr.bf16.mxu0 0
    %2198 = vmatpush1.bf16.msra.mxu0 0
    %2199 = vmatprep.subr.bf16.mxu0 0
    %2200 = vmatpush1.bf16.msra.mxu0 0
    %2201 = vmatprep.subr.bf16.mxu0 0
    %2202 = vmatpush1.bf16.msra.mxu0 0
    %2203 = vmatprep.subr.bf16.mxu0 0
    %2204 = vmatpush1.bf16.msra.mxu0 0
    %2205 = vmatprep.subr.bf16.mxu0 0
    %2206 = vmatpush1.bf16.msra.mxu0 0
    %2207 = vmatprep.subr.bf16.mxu0 0
    %2208 = vmatpush1.bf16.msra.mxu0 0
    %2209 = vmatprep.subr.bf16.mxu0 0
    %2210 = vmatpush1.bf16.msra.mxu0 0
    %2211 = vmatprep.subr.bf16.mxu0 0
    %2212 = vmatpush1.bf16.msra.mxu0 0
    %2213 = vmatprep.subr.bf16.mxu0 0
    %2214 = vmatpush1.bf16.msra.mxu0 0
    %2215 = vmatprep.subr.bf16.mxu0 0
    %2216 = vmatpush1.bf16.msra.mxu0 0
    %2217 = vmatprep.subr.bf16.mxu0 0
    %2218 = vmatpush1.bf16.msra.mxu0 0
    %2219 = vmatprep.mubr.bf16.mxu0 0
    %2220 = vmatmul.mubr.bf16.gmra.mrb[0].mxu0 %v2182
    %v2221 = vpop.f32.mrb[0].mxu0
    %v2222 = vadd.f32 0.0, %v2221
    %v2223 = vpop.f32.mrb[0].mxu0
    %v2224 = vpop.f32.mrb[0].mxu0
    %v2225 = vpop.f32.mrb[0].mxu0
    %2226 = vdwg.mxu0
    %2227 = vrot.lane.b32.xlu0 %v1816, 56
    %v2228 = vpop.permute.xlu0 %2227
    %v2230 = vsel %vm475, %v2178, 0
    %v2233 = vsel %vm605, %v2228, 0
    %2235 = vmatprep.subr.bf16.mxu0 0
    %2236 = vmatpush1.bf16.msra.mxu0 %v2233
    %2237 = vmatprep.subr.bf16.mxu0 0
    %2238 = vmatpush1.bf16.msra.mxu0 0
    %2239 = vmatprep.subr.bf16.mxu0 0
    %2240 = vmatpush1.bf16.msra.mxu0 0
    %2241 = vmatprep.subr.bf16.mxu0 0
    %2242 = vmatpush1.bf16.msra.mxu0 0
    %2243 = vmatprep.subr.bf16.mxu0 0
    %2244 = vmatpush1.bf16.msra.mxu0 0
    %2245 = vmatprep.subr.bf16.mxu0 0
    %2246 = vmatpush1.bf16.msra.mxu0 0
    %2247 = vmatprep.subr.bf16.mxu0 0
    %2248 = vmatpush1.bf16.msra.mxu0 0
    %2249 = vmatprep.subr.bf16.mxu0 0
    %2250 = vmatpush1.bf16.msra.mxu0 0
    %2251 = vmatprep.subr.bf16.mxu0 0
    %2252 = vmatpush1.bf16.msra.mxu0 0
    %2253 = vmatprep.subr.bf16.mxu0 0
    %2254 = vmatpush1.bf16.msra.mxu0 0
    %2255 = vmatprep.subr.bf16.mxu0 0
    %2256 = vmatpush1.bf16.msra.mxu0 0
    %2257 = vmatprep.subr.bf16.mxu0 0
    %2258 = vmatpush1.bf16.msra.mxu0 0
    %2259 = vmatprep.subr.bf16.mxu0 0
    %2260 = vmatpush1.bf16.msra.mxu0 0
    %2261 = vmatprep.subr.bf16.mxu0 0
    %2262 = vmatpush1.bf16.msra.mxu0 0
    %2263 = vmatprep.subr.bf16.mxu0 0
    %2264 = vmatpush1.bf16.msra.mxu0 0
    %2265 = vmatprep.subr.bf16.mxu0 0
    %2266 = vmatpush1.bf16.msra.mxu0 0
    %2267 = vmatprep.mubr.bf16.mxu0 0
    %2268 = vmatmul.mubr.bf16.gmra.mrb[0].mxu0 %v2230
    %v2269 = vpop.f32.mrb[0].mxu0
    %v2270 = vadd.f32 0.0, %v2269
    %v2271 = vpop.f32.mrb[0].mxu0
    %v2272 = vpop.f32.mrb[0].mxu0
    %v2273 = vpop.f32.mrb[0].mxu0
    %2274 = vdwg.mxu0
    %s2275 = sld [smem:[#allocation2 + $0xc]]
    %s2276 = sld [smem:[#allocation2 + $0xd]]
    %v2277 = vstv %s2275
    %v2278 = vmul.f32 %v164, %v2277
    %v2279 = vmul.f32 %v165, %v2277
    %2280 = vrot.lane.b32.xlu0 %v1815, 112
    %v2281 = vpop.permute.xlu0 %2280
    %2282 = vrot.lane.b32.xlu0 %v1815, 80
    %v2283 = vpop.permute.xlu0 %2282
    %v2285 = vsel %vm475, %v2281, 0
    %v2288 = vsel %vm475, %v2283, 0
    %2290 = vmatprep.subr.bf16.mxu0 0
    %2291 = vmatpush1.bf16.xpose.msra.mxu0 %v2288
    %2292 = vmatprep.subr.bf16.mxu0 0
    %2293 = vmatpush1.bf16.xpose.msra.mxu0 0
    %2294 = vmatprep.subr.bf16.mxu0 0
    %2295 = vmatpush1.bf16.xpose.msra.mxu0 0
    %2296 = vmatprep.subr.bf16.mxu0 0
    %2297 = vmatpush1.bf16.xpose.msra.mxu0 0
    %2298 = vmatprep.subr.bf16.mxu0 0
    %2299 = vmatpush1.bf16.xpose.msra.mxu0 0
    %2300 = vmatprep.subr.bf16.mxu0 0
    %2301 = vmatpush1.bf16.xpose.msra.mxu0 0
    %2302 = vmatprep.subr.bf16.mxu0 0
    %2303 = vmatpush1.bf16.xpose.msra.mxu0 0
    %2304 = vmatprep.subr.bf16.mxu0 0
    %2305 = vmatpush1.bf16.xpose.msra.mxu0 0
    %2306 = vmatprep.subr.bf16.mxu0 0
    %2307 = vmatpush1.bf16.xpose.msra.mxu0 0
    %2308 = vmatprep.subr.bf16.mxu0 0
    %2309 = vmatpush1.bf16.xpose.msra.mxu0 0
    %2310 = vmatprep.subr.bf16.mxu0 0
    %2311 = vmatpush1.bf16.xpose.msra.mxu0 0
    %2312 = vmatprep.subr.bf16.mxu0 0
    %2313 = vmatpush1.bf16.xpose.msra.mxu0 0
    %2314 = vmatprep.subr.bf16.mxu0 0
    %2315 = vmatpush1.bf16.xpose.msra.mxu0 0
    %2316 = vmatprep.subr.bf16.mxu0 0
    %2317 = vmatpush1.bf16.xpose.msra.mxu0 0
    %2318 = vmatprep.subr.bf16.mxu0 0
    %2319 = vmatpush1.bf16.xpose.msra.mxu0 0
    %2320 = vmatprep.subr.bf16.mxu0 0
    %2321 = vmatpush1.bf16.xpose.msra.mxu0 0
    %2322 = vmatprep.mubr.bf16.mxu0 0
    %2323 = vmatmul.mubr.bf16.gmra.mrb[0].mxu0 %v2285
    %v2324 = vpop.f32.mrb[0].mxu0
    %v2325 = vadd.f32 %v2278, %v2324
    %v2326 = vpop.f32.mrb[0].mxu0
    %v2327 = vpop.f32.mrb[0].mxu0
    %v2328 = vpop.f32.mrb[0].mxu0
    %2329 = vdwg.mxu0
    %2330 = vrot.lane.b32.xlu0 %v1816, 112
    %v2331 = vpop.permute.xlu0 %2330
    %2332 = vrot.lane.b32.xlu0 %v1816, 80
    %v2333 = vpop.permute.xlu0 %2332
    %v2335 = vsel %vm475, %v2331, 0
    %v2338 = vsel %vm475, %v2333, 0
    %2340 = vmatprep.subr.bf16.mxu0 0
    %2341 = vmatpush1.bf16.xpose.msra.mxu0 %v2338
    %2342 = vmatprep.subr.bf16.mxu0 0
    %2343 = vmatpush1.bf16.xpose.msra.mxu0 0
    %2344 = vmatprep.subr.bf16.mxu0 0
    %2345 = vmatpush1.bf16.xpose.msra.mxu0 0
    %2346 = vmatprep.subr.bf16.mxu0 0
    %2347 = vmatpush1.bf16.xpose.msra.mxu0 0
    %2348 = vmatprep.subr.bf16.mxu0 0
    %2349 = vmatpush1.bf16.xpose.msra.mxu0 0
    %2350 = vmatprep.subr.bf16.mxu0 0
    %2351 = vmatpush1.bf16.xpose.msra.mxu0 0
    %2352 = vmatprep.subr.bf16.mxu0 0
    %2353 = vmatpush1.bf16.xpose.msra.mxu0 0
    %2354 = vmatprep.subr.bf16.mxu0 0
    %2355 = vmatpush1.bf16.xpose.msra.mxu0 0
    %2356 = vmatprep.subr.bf16.mxu0 0
    %2357 = vmatpush1.bf16.xpose.msra.mxu0 0
    %2358 = vmatprep.subr.bf16.mxu0 0
    %2359 = vmatpush1.bf16.xpose.msra.mxu0 0
    %2360 = vmatprep.subr.bf16.mxu0 0
    %2361 = vmatpush1.bf16.xpose.msra.mxu0 0
    %2362 = vmatprep.subr.bf16.mxu0 0
    %2363 = vmatpush1.bf16.xpose.msra.mxu0 0
    %2364 = vmatprep.subr.bf16.mxu0 0
    %2365 = vmatpush1.bf16.xpose.msra.mxu0 0
    %2366 = vmatprep.subr.bf16.mxu0 0
    %2367 = vmatpush1.bf16.xpose.msra.mxu0 0
    %2368 = vmatprep.subr.bf16.mxu0 0
    %2369 = vmatpush1.bf16.xpose.msra.mxu0 0
    %2370 = vmatprep.subr.bf16.mxu0 0
    %2371 = vmatpush1.bf16.xpose.msra.mxu0 0
    %2372 = vmatprep.mubr.bf16.mxu0 0
    %2373 = vmatmul.mubr.bf16.gmra.mrb[0].mxu0 %v2335
    %v2374 = vpop.f32.mrb[0].mxu0
    %v2375 = vadd.f32 %v2279, %v2374
    %v2376 = vpop.f32.mrb[0].mxu0
    %v2377 = vpop.f32.mrb[0].mxu0
    %v2378 = vpop.f32.mrb[0].mxu0
    %2379 = vdwg.mxu0
    %v2380 = vstv %s2276
    %v2381 = vmul.f32 %v348, %v2380
    %v2382 = vmul.f32 %v355, %v2380
    %v2383 = vsub.f32 %v2325, %v2381
    %v2384 = vsub.f32 %v2375, %v2382
    %v2385 = vsel %vm475, %v2383, -inf
    %2386 = vmax.xlane.f32.xlu0 %v2385
    %v2387 = vpop.xlane.xlu0 %2386
    %v2388 = vsel %vm475, %v2384, -inf
    %2389 = vmax.xlane.f32.xlu0 %v2388
    %v2390 = vpop.xlane.xlu0 %2389
    %v2391 = vsub.f32 %v2383, %v2387
    %v2392 = vsub.f32 %v2384, %v2390
    %v2393 = vmul.f32 %v2391, 1.442695
    %v2394 = vpow.pop %v2393
    %v2395 = vmul.f32 %v2392, 1.442695
    %v2396 = vpow.pop %v2395
    %v2397 = vsel %vm475, %v2394, 0.0
    %2398 = vadd.xlane.f32.xlu0 %v2397
    %v2399 = vpop.xlane.xlu0 %2398
    %v2400 = vsel %vm475, %v2396, 0.0
    %2401 = vadd.xlane.f32.xlu0 %v2400
    %v2402 = vpop.xlane.xlu0 %2401
    %v2403 = vrcp.pop %v2399
    %v2404 = vrcp.pop %v2402
    %v2405 = vmul.f32 %v2394, %v2403
    %v2406 = vmul.f32 %v2396, %v2404
    %v2407 = vpack.c.bf16 %v2405, %v2405
    %v2408 = vpack.c.bf16 %v2406, %v2406
    %2409 = vrot.lane.b32.xlu0 %v1815, 48
    %v2410 = vpop.permute.xlu0 %2409
    %v2412 = vsel %vm475, %v2407, 0
    %v2415 = vsel %vm605, %v2410, 0
    %2417 = vmatprep.subr.bf16.mxu0 0
    %2418 = vmatpush1.bf16.msra.mxu0 %v2415
    %2419 = vmatprep.subr.bf16.mxu0 0
    %2420 = vmatpush1.bf16.msra.mxu0 0
    %2421 = vmatprep.subr.bf16.mxu0 0
    %2422 = vmatpush1.bf16.msra.mxu0 0
    %2423 = vmatprep.subr.bf16.mxu0 0
    %2424 = vmatpush1.bf16.msra.mxu0 0
    %2425 = vmatprep.subr.bf16.mxu0 0
    %2426 = vmatpush1.bf16.msra.mxu0 0
    %2427 = vmatprep.subr.bf16.mxu0 0
    %2428 = vmatpush1.bf16.msra.mxu0 0
    %2429 = vmatprep.subr.bf16.mxu0 0
    %2430 = vmatpush1.bf16.msra.mxu0 0
    %2431 = vmatprep.subr.bf16.mxu0 0
    %2432 = vmatpush1.bf16.msra.mxu0 0
    %2433 = vmatprep.subr.bf16.mxu0 0
    %2434 = vmatpush1.bf16.msra.mxu0 0
    %2435 = vmatprep.subr.bf16.mxu0 0
    %2436 = vmatpush1.bf16.msra.mxu0 0
    %2437 = vmatprep.subr.bf16.mxu0 0
    %2438 = vmatpush1.bf16.msra.mxu0 0
    %2439 = vmatprep.subr.bf16.mxu0 0
    %2440 = vmatpush1.bf16.msra.mxu0 0
    %2441 = vmatprep.subr.bf16.mxu0 0
    %2442 = vmatpush1.bf16.msra.mxu0 0
    %2443 = vmatprep.subr.bf16.mxu0 0
    %2444 = vmatpush1.bf16.msra.mxu0 0
    %2445 = vmatprep.subr.bf16.mxu0 0
    %2446 = vmatpush1.bf16.msra.mxu0 0
    %2447 = vmatprep.subr.bf16.mxu0 0
    %2448 = vmatpush1.bf16.msra.mxu0 0
    %2449 = vmatprep.mubr.bf16.mxu0 0
    %2450 = vmatmul.mubr.bf16.gmra.mrb[0].mxu0 %v2412
    %v2451 = vpop.f32.mrb[0].mxu0
    %v2452 = vadd.f32 0.0, %v2451
    %v2453 = vpop.f32.mrb[0].mxu0
    %v2454 = vpop.f32.mrb[0].mxu0
    %v2455 = vpop.f32.mrb[0].mxu0
    %2456 = vdwg.mxu0
    %2457 = vrot.lane.b32.xlu0 %v1816, 48
    %v2458 = vpop.permute.xlu0 %2457
    %v2460 = vsel %vm475, %v2408, 0
    %v2463 = vsel %vm605, %v2458, 0
    %2465 = vmatprep.subr.bf16.mxu0 0
    %2466 = vmatpush1.bf16.msra.mxu0 %v2463
    %2467 = vmatprep.subr.bf16.mxu0 0
    %2468 = vmatpush1.bf16.msra.mxu0 0
    %2469 = vmatprep.subr.bf16.mxu0 0
    %2470 = vmatpush1.bf16.msra.mxu0 0
    %2471 = vmatprep.subr.bf16.mxu0 0
    %2472 = vmatpush1.bf16.msra.mxu0 0
    %2473 = vmatprep.subr.bf16.mxu0 0
    %2474 = vmatpush1.bf16.msra.mxu0 0
    %2475 = vmatprep.subr.bf16.mxu0 0
    %2476 = vmatpush1.bf16.msra.mxu0 0
    %2477 = vmatprep.subr.bf16.mxu0 0
    %2478 = vmatpush1.bf16.msra.mxu0 0
    %2479 = vmatprep.subr.bf16.mxu0 0
    %2480 = vmatpush1.bf16.msra.mxu0 0
    %2481 = vmatprep.subr.bf16.mxu0 0
    %2482 = vmatpush1.bf16.msra.mxu0 0
    %2483 = vmatprep.subr.bf16.mxu0 0
    %2484 = vmatpush1.bf16.msra.mxu0 0
    %2485 = vmatprep.subr.bf16.mxu0 0
    %2486 = vmatpush1.bf16.msra.mxu0 0
    %2487 = vmatprep.subr.bf16.mxu0 0
    %2488 = vmatpush1.bf16.msra.mxu0 0
    %2489 = vmatprep.subr.bf16.mxu0 0
    %2490 = vmatpush1.bf16.msra.mxu0 0
    %2491 = vmatprep.subr.bf16.mxu0 0
    %2492 = vmatpush1.bf16.msra.mxu0 0
    %2493 = vmatprep.subr.bf16.mxu0 0
    %2494 = vmatpush1.bf16.msra.mxu0 0
    %2495 = vmatprep.subr.bf16.mxu0 0
    %2496 = vmatpush1.bf16.msra.mxu0 0
    %2497 = vmatprep.mubr.bf16.mxu0 0
    %2498 = vmatmul.mubr.bf16.gmra.mrb[0].mxu0 %v2460
    %v2499 = vpop.f32.mrb[0].mxu0
    %v2500 = vadd.f32 0.0, %v2499
    %v2501 = vpop.f32.mrb[0].mxu0
    %v2502 = vpop.f32.mrb[0].mxu0
    %v2503 = vpop.f32.mrb[0].mxu0
    %2504 = vdwg.mxu0
    %s2505 = sld [smem:[#allocation2 + $0xe]]
    %s2506 = sld [smem:[#allocation2 + $0xf]]
    %v2507 = vstv %s2505
    %v2508 = vmul.f32 %v164, %v2507
    %v2509 = vmul.f32 %v165, %v2507
    %2510 = vrot.lane.b32.xlu0 %v1815, 104
    %v2511 = vpop.permute.xlu0 %2510
    %2512 = vrot.lane.b32.xlu0 %v1815, 72
    %v2513 = vpop.permute.xlu0 %2512
    %v2515 = vsel %vm475, %v2511, 0
    %v2518 = vsel %vm475, %v2513, 0
    %2520 = vmatprep.subr.bf16.mxu0 0
    %2521 = vmatpush1.bf16.xpose.msra.mxu0 %v2518
    %2522 = vmatprep.subr.bf16.mxu0 0
    %2523 = vmatpush1.bf16.xpose.msra.mxu0 0
    %2524 = vmatprep.subr.bf16.mxu0 0
    %2525 = vmatpush1.bf16.xpose.msra.mxu0 0
    %2526 = vmatprep.subr.bf16.mxu0 0
    %2527 = vmatpush1.bf16.xpose.msra.mxu0 0
    %2528 = vmatprep.subr.bf16.mxu0 0
    %2529 = vmatpush1.bf16.xpose.msra.mxu0 0
    %2530 = vmatprep.subr.bf16.mxu0 0
    %2531 = vmatpush1.bf16.xpose.msra.mxu0 0
    %2532 = vmatprep.subr.bf16.mxu0 0
    %2533 = vmatpush1.bf16.xpose.msra.mxu0 0
    %2534 = vmatprep.subr.bf16.mxu0 0
    %2535 = vmatpush1.bf16.xpose.msra.mxu0 0
    %2536 = vmatprep.subr.bf16.mxu0 0
    %2537 = vmatpush1.bf16.xpose.msra.mxu0 0
    %2538 = vmatprep.subr.bf16.mxu0 0
    %2539 = vmatpush1.bf16.xpose.msra.mxu0 0
    %2540 = vmatprep.subr.bf16.mxu0 0
    %2541 = vmatpush1.bf16.xpose.msra.mxu0 0
    %2542 = vmatprep.subr.bf16.mxu0 0
    %2543 = vmatpush1.bf16.xpose.msra.mxu0 0
    %2544 = vmatprep.subr.bf16.mxu0 0
    %2545 = vmatpush1.bf16.xpose.msra.mxu0 0
    %2546 = vmatprep.subr.bf16.mxu0 0
    %2547 = vmatpush1.bf16.xpose.msra.mxu0 0
    %2548 = vmatprep.subr.bf16.mxu0 0
    %2549 = vmatpush1.bf16.xpose.msra.mxu0 0
    %2550 = vmatprep.subr.bf16.mxu0 0
    %2551 = vmatpush1.bf16.xpose.msra.mxu0 0
    %2552 = vmatprep.mubr.bf16.mxu0 0
    %2553 = vmatmul.mubr.bf16.gmra.mrb[0].mxu0 %v2515
    %v2554 = vpop.f32.mrb[0].mxu0
    %v2555 = vadd.f32 %v2508, %v2554
    %v2556 = vpop.f32.mrb[0].mxu0
    %v2557 = vpop.f32.mrb[0].mxu0
    %v2558 = vpop.f32.mrb[0].mxu0
    %2559 = vdwg.mxu0
    %2560 = vrot.lane.b32.xlu0 %v1816, 104
    %v2561 = vpop.permute.xlu0 %2560
    %2562 = vrot.lane.b32.xlu0 %v1816, 72
    %v2563 = vpop.permute.xlu0 %2562
    %v2565 = vsel %vm475, %v2561, 0
    %v2568 = vsel %vm475, %v2563, 0
    %2570 = vmatprep.subr.bf16.mxu0 0
    %2571 = vmatpush1.bf16.xpose.msra.mxu0 %v2568
    %2572 = vmatprep.subr.bf16.mxu0 0
    %2573 = vmatpush1.bf16.xpose.msra.mxu0 0
    %2574 = vmatprep.subr.bf16.mxu0 0
    %2575 = vmatpush1.bf16.xpose.msra.mxu0 0
    %2576 = vmatprep.subr.bf16.mxu0 0
    %2577 = vmatpush1.bf16.xpose.msra.mxu0 0
    %2578 = vmatprep.subr.bf16.mxu0 0
    %2579 = vmatpush1.bf16.xpose.msra.mxu0 0
    %2580 = vmatprep.subr.bf16.mxu0 0
    %2581 = vmatpush1.bf16.xpose.msra.mxu0 0
    %2582 = vmatprep.subr.bf16.mxu0 0
    %2583 = vmatpush1.bf16.xpose.msra.mxu0 0
    %2584 = vmatprep.subr.bf16.mxu0 0
    %2585 = vmatpush1.bf16.xpose.msra.mxu0 0
    %2586 = vmatprep.subr.bf16.mxu0 0
    %2587 = vmatpush1.bf16.xpose.msra.mxu0 0
    %2588 = vmatprep.subr.bf16.mxu0 0
    %2589 = vmatpush1.bf16.xpose.msra.mxu0 0
    %2590 = vmatprep.subr.bf16.mxu0 0
    %2591 = vmatpush1.bf16.xpose.msra.mxu0 0
    %2592 = vmatprep.subr.bf16.mxu0 0
    %2593 = vmatpush1.bf16.xpose.msra.mxu0 0
    %2594 = vmatprep.subr.bf16.mxu0 0
    %2595 = vmatpush1.bf16.xpose.msra.mxu0 0
    %2596 = vmatprep.subr.bf16.mxu0 0
    %2597 = vmatpush1.bf16.xpose.msra.mxu0 0
    %2598 = vmatprep.subr.bf16.mxu0 0
    %2599 = vmatpush1.bf16.xpose.msra.mxu0 0
    %2600 = vmatprep.subr.bf16.mxu0 0
    %2601 = vmatpush1.bf16.xpose.msra.mxu0 0
    %2602 = vmatprep.mubr.bf16.mxu0 0
    %2603 = vmatmul.mubr.bf16.gmra.mrb[0].mxu0 %v2565
    %v2604 = vpop.f32.mrb[0].mxu0
    %v2605 = vadd.f32 %v2509, %v2604
    %v2606 = vpop.f32.mrb[0].mxu0
    %v2607 = vpop.f32.mrb[0].mxu0
    %v2608 = vpop.f32.mrb[0].mxu0
    %2609 = vdwg.mxu0
    %v2610 = vstv %s2506
    %v2611 = vmul.f32 %v348, %v2610
    %v2612 = vmul.f32 %v355, %v2610
    %v2613 = vsub.f32 %v2555, %v2611
    %v2614 = vsub.f32 %v2605, %v2612
    %v2615 = vsel %vm475, %v2613, -inf
    %2616 = vmax.xlane.f32.xlu0 %v2615
    %v2617 = vpop.xlane.xlu0 %2616
    %v2618 = vsel %vm475, %v2614, -inf
    %2619 = vmax.xlane.f32.xlu0 %v2618
    %v2620 = vpop.xlane.xlu0 %2619
    %v2621 = vsub.f32 %v2613, %v2617
    %v2622 = vsub.f32 %v2614, %v2620
    %v2623 = vmul.f32 %v2621, 1.442695
    %v2624 = vpow.pop %v2623
    %v2625 = vmul.f32 %v2622, 1.442695
    %v2626 = vpow.pop %v2625
    %v2627 = vsel %vm475, %v2624, 0.0
    %2628 = vadd.xlane.f32.xlu0 %v2627
    %v2629 = vpop.xlane.xlu0 %2628
    %v2630 = vsel %vm475, %v2626, 0.0
    %2631 = vadd.xlane.f32.xlu0 %v2630
    %v2632 = vpop.xlane.xlu0 %2631
    %v2633 = vrcp.pop %v2629
    %v2634 = vrcp.pop %v2632
    %v2635 = vmul.f32 %v2624, %v2633
    %v2636 = vmul.f32 %v2626, %v2634
    %v2637 = vpack.c.bf16 %v2635, %v2635
    %v2638 = vpack.c.bf16 %v2636, %v2636
    %2639 = vrot.lane.b32.xlu0 %v1815, 40
    %v2640 = vpop.permute.xlu0 %2639
    %v2642 = vsel %vm475, %v2637, 0
    %v2645 = vsel %vm605, %v2640, 0
    %2647 = vmatprep.subr.bf16.mxu0 0
    %2648 = vmatpush1.bf16.msra.mxu0 %v2645
    %2649 = vmatprep.subr.bf16.mxu0 0
    %2650 = vmatpush1.bf16.msra.mxu0 0
    %2651 = vmatprep.subr.bf16.mxu0 0
    %2652 = vmatpush1.bf16.msra.mxu0 0
    %2653 = vmatprep.subr.bf16.mxu0 0
    %2654 = vmatpush1.bf16.msra.mxu0 0
    %2655 = vmatprep.subr.bf16.mxu0 0
    %2656 = vmatpush1.bf16.msra.mxu0 0
    %2657 = vmatprep.subr.bf16.mxu0 0
    %2658 = vmatpush1.bf16.msra.mxu0 0
    %2659 = vmatprep.subr.bf16.mxu0 0
    %2660 = vmatpush1.bf16.msra.mxu0 0
    %2661 = vmatprep.subr.bf16.mxu0 0
    %2662 = vmatpush1.bf16.msra.mxu0 0
    %2663 = vmatprep.subr.bf16.mxu0 0
    %2664 = vmatpush1.bf16.msra.mxu0 0
    %2665 = vmatprep.subr.bf16.mxu0 0
    %2666 = vmatpush1.bf16.msra.mxu0 0
    %2667 = vmatprep.subr.bf16.mxu0 0
    %2668 = vmatpush1.bf16.msra.mxu0 0
    %2669 = vmatprep.subr.bf16.mxu0 0
    %2670 = vmatpush1.bf16.msra.mxu0 0
    %2671 = vmatprep.subr.bf16.mxu0 0
    %2672 = vmatpush1.bf16.msra.mxu0 0
    %2673 = vmatprep.subr.bf16.mxu0 0
    %2674 = vmatpush1.bf16.msra.mxu0 0
    %2675 = vmatprep.subr.bf16.mxu0 0
    %2676 = vmatpush1.bf16.msra.mxu0 0
    %2677 = vmatprep.subr.bf16.mxu0 0
    %2678 = vmatpush1.bf16.msra.mxu0 0
    %2679 = vmatprep.mubr.bf16.mxu0 0
    %2680 = vmatmul.mubr.bf16.gmra.mrb[0].mxu0 %v2642
    %v2681 = vpop.f32.mrb[0].mxu0
    %v2682 = vadd.f32 0.0, %v2681
    %v2683 = vpop.f32.mrb[0].mxu0
    %v2684 = vpop.f32.mrb[0].mxu0
    %v2685 = vpop.f32.mrb[0].mxu0
    %2686 = vdwg.mxu0
    %2687 = vrot.lane.b32.xlu0 %v1816, 40
    %v2688 = vpop.permute.xlu0 %2687
    %v2690 = vsel %vm475, %v2638, 0
    %v2693 = vsel %vm605, %v2688, 0
    %2695 = vmatprep.subr.bf16.mxu0 0
    %2696 = vmatpush1.bf16.msra.mxu0 %v2693
    %2697 = vmatprep.subr.bf16.mxu0 0
    %2698 = vmatpush1.bf16.msra.mxu0 0
    %2699 = vmatprep.subr.bf16.mxu0 0
    %2700 = vmatpush1.bf16.msra.mxu0 0
    %2701 = vmatprep.subr.bf16.mxu0 0
    %2702 = vmatpush1.bf16.msra.mxu0 0
    %2703 = vmatprep.subr.bf16.mxu0 0
    %2704 = vmatpush1.bf16.msra.mxu0 0
    %2705 = vmatprep.subr.bf16.mxu0 0
    %2706 = vmatpush1.bf16.msra.mxu0 0
    %2707 = vmatprep.subr.bf16.mxu0 0
    %2708 = vmatpush1.bf16.msra.mxu0 0
    %2709 = vmatprep.subr.bf16.mxu0 0
    %2710 = vmatpush1.bf16.msra.mxu0 0
    %2711 = vmatprep.subr.bf16.mxu0 0
    %2712 = vmatpush1.bf16.msra.mxu0 0
    %2713 = vmatprep.subr.bf16.mxu0 0
    %2714 = vmatpush1.bf16.msra.mxu0 0
    %2715 = vmatprep.subr.bf16.mxu0 0
    %2716 = vmatpush1.bf16.msra.mxu0 0
    %2717 = vmatprep.subr.bf16.mxu0 0
    %2718 = vmatpush1.bf16.msra.mxu0 0
    %2719 = vmatprep.subr.bf16.mxu0 0
    %2720 = vmatpush1.bf16.msra.mxu0 0
    %2721 = vmatprep.subr.bf16.mxu0 0
    %2722 = vmatpush1.bf16.msra.mxu0 0
    %2723 = vmatprep.subr.bf16.mxu0 0
    %2724 = vmatpush1.bf16.msra.mxu0 0
    %2725 = vmatprep.subr.bf16.mxu0 0
    %2726 = vmatpush1.bf16.msra.mxu0 0
    %2727 = vmatprep.mubr.bf16.mxu0 0
    %2728 = vmatmul.mubr.bf16.gmra.mrb[0].mxu0 %v2690
    %v2729 = vpop.f32.mrb[0].mxu0
    %v2730 = vadd.f32 0.0, %v2729
    %v2731 = vpop.f32.mrb[0].mxu0
    %v2732 = vpop.f32.mrb[0].mxu0
    %v2733 = vpop.f32.mrb[0].mxu0
    %2734 = vdwg.mxu0
    %2737 = vrot.lane.b32.xlu0 %v2222, 8
    %v2738 = vpop.permute.xlu0 %2737
    %2739 = vrot.lane.b32.xlu0 %v2270, 8
    %v2740 = vpop.permute.xlu0 %2739
    %2745 = vrot.lane.b32.xlu0 %v2452, 16
    %v2746 = vpop.permute.xlu0 %2745
    %2747 = vrot.lane.b32.xlu0 %v2500, 16
    %v2748 = vpop.permute.xlu0 %2747
    %2753 = vrot.lane.b32.xlu0 %v2682, 24
    %v2754 = vpop.permute.xlu0 %2753
    %2755 = vrot.lane.b32.xlu0 %v2730, 24
    %v2756 = vpop.permute.xlu0 %2755
    %v2759 = vsel %vm475, %v1992, %v2738
    %v2760 = vsel %vm475, %v2040, %v2740
    %v2761 = vsel %vm1413, %v2759, %v2746
    %v2762 = vsel %vm1413, %v2760, %v2748
    %v2763 = vsel %vm1416, %v2761, %v2754
    %v2764 = vsel %vm1416, %v2762, %v2756
    %v2765 = vpack.c.bf16 %v2764, %v2763
    %s2766 = scalar_lea.vmem %s10, 16
    %v2767 = vld [vmem:[%s2766] sm:$0xf]
    %v2768 = vld [vmem:[%s2766 + $0x4] sm:$0xf]
    %v2769 = vld [vmem:[%s2766 + $0x8] sm:$0xf]
    %v2770 = vld [vmem:[%s2766 + $0xc] sm:$0xf]
    %v2775 = vunpack.c.l.b16 %v2767
    %v2776 = vunpack.c.l.b16 %v2768
    %v2777 = vunpack.c.l.b16 %v2769
    %v2778 = vunpack.c.l.b16 %v2770
    %v2779 = vpack.c.b16 %v2776, %v2775
    %v2780 = vpack.c.b16 %v2778, %v2777
    %v2784 = vsel %vm357, %v2765, 0
    %2786 = vmatprep.subr.bf16.mxu0 0
    %2787 = vmatpush1.bf16.msra.mxu0 %v2779
    %2788 = vmatprep.subr.bf16.mxu0 0
    %2789 = vmatpush1.bf16.msra.mxu0 %v2780
    %2790 = vmatprep.subr.bf16.mxu0 0
    %2791 = vmatpush1.bf16.msra.mxu0 0
    %2792 = vmatprep.subr.bf16.mxu0 0
    %2793 = vmatpush1.bf16.msra.mxu0 0
    %2794 = vmatprep.subr.bf16.mxu0 0
    %2795 = vmatpush1.bf16.msra.mxu0 0
    %2796 = vmatprep.subr.bf16.mxu0 0
    %2797 = vmatpush1.bf16.msra.mxu0 0
    %2798 = vmatprep.subr.bf16.mxu0 0
    %2799 = vmatpush1.bf16.msra.mxu0 0
    %2800 = vmatprep.subr.bf16.mxu0 0
    %2801 = vmatpush1.bf16.msra.mxu0 0
    %2802 = vmatprep.subr.bf16.mxu0 0
    %2803 = vmatpush1.bf16.msra.mxu0 0
    %2804 = vmatprep.subr.bf16.mxu0 0
    %2805 = vmatpush1.bf16.msra.mxu0 0
    %2806 = vmatprep.subr.bf16.mxu0 0
    %2807 = vmatpush1.bf16.msra.mxu0 0
    %2808 = vmatprep.subr.bf16.mxu0 0
    %2809 = vmatpush1.bf16.msra.mxu0 0
    %2810 = vmatprep.subr.bf16.mxu0 0
    %2811 = vmatpush1.bf16.msra.mxu0 0
    %2812 = vmatprep.subr.bf16.mxu0 0
    %2813 = vmatpush1.bf16.msra.mxu0 0
    %2814 = vmatprep.subr.bf16.mxu0 0
    %2815 = vmatpush1.bf16.msra.mxu0 0
    %2816 = vmatprep.subr.bf16.mxu0 0
    %2817 = vmatpush1.bf16.msra.mxu0 0
    %2818 = vmatprep.mubr.bf16.mxu0 0
    %2819 = vmatmul.mubr.bf16.gmra.mrb[0].mxu0 %v2784
    %v2820 = vpop.f32.mrb[0].mxu0
    %v2821 = vadd.f32 0.0, %v2820
    %v2822 = vpop.f32.mrb[0].mxu0
    %v2823 = vpop.f32.mrb[0].mxu0
    %v2824 = vadd.f32 0.0, %v2823
    %v2825 = vpop.f32.mrb[0].mxu0
    %2826 = vdwg.mxu0
    %v2827 = vadd.f32 %v1703, %v2821
    %v2828 = vadd.f32 %v1704, %v2824
    %s2829 = scalar_lea.vmem %s11, 1
    %v2830 = vld [vmem:[%s2829] sm:$0x1]
    %v2832 = vlaneseq
    %v2833 = vshrl.u32 %v2832, 7
    %v2834 = vsub.s32 0, %v2833
    %v2835 = vrot.slane %v2830, %v2834
    %v2837 = vadd.f32 %v2827, %v2835
    %v2838 = vadd.f32 %v2828, %v2835
    %s2839 = scalar_lea.vmem %s13, 2
    %v2840 = vld [vmem:[%s2839] sm:$0x3]
    %v2841 = vsel %vm357, %v2837, 0.0
    %2842 = vadd.xlane.f32.xlu0 %v2841
    %v2843 = vpop.xlane.xlu0 %2842
    %v2844 = vsel %vm357, %v2838, 0.0
    %2845 = vadd.xlane.f32.xlu0 %v2844
    %v2846 = vpop.xlane.xlu0 %2845
    %v2847 = vmul.f32 %v2843, %v364
    %v2848 = vmul.f32 %v2846, %v364
    %v2849 = vsub.f32 %v2837, %v2847
    %v2850 = vsub.f32 %v2838, %v2848
    %v2851 = vmul.f32 %v2849, %v2849
    %v2852 = vmul.f32 %v2850, %v2850
    %v2853 = vsel %vm357, %v2851, 0.0
    %2854 = vadd.xlane.f32.xlu0 %v2853
    %v2855 = vpop.xlane.xlu0 %2854
    %v2856 = vsel %vm357, %v2852, 0.0
    %2857 = vadd.xlane.f32.xlu0 %v2856
    %v2858 = vpop.xlane.xlu0 %2857
    %v2859 = vmul.f32 %v2855, %v364
    %v2860 = vmul.f32 %v2858, %v364
    %v2861 = vadd.f32 %v2859, 1e-05
    %v2862 = vadd.f32 %v2860, 1e-05
    %v2863 = vrsqrt.pop %v2861
    %v2864 = vrsqrt.pop %v2862
    %v2865 = vmul.f32 %v2849, %v2863
    %v2866 = vmul.f32 %v2850, %v2864
    %v2867 = vlaneseq
    %v2868 = vshrl.u32 %v2867, 7
    %v2869 = vsub.s32 0, %v2868
    %v2870 = vrot.slane %v2840, %v2869
    %v2871 = vmul.f32 %v2865, %v2870
    %v2872 = vmul.f32 %v2866, %v2870
    %v2873 = vlaneseq
    %v2874 = vshrl.u32 %v2873, 7
    %v2875 = vsub.s32 1, %v2874
    %v2876 = vrot.slane %v2840, %v2875
    %v2877 = vadd.f32 %v2871, %v2876
    %v2878 = vadd.f32 %v2872, %v2876
    %v2879 = vpack.c.bf16 %v2878, %v2877
    %s2880 = scalar_lea.vmem %s14, 16
    %v2881 = vld [vmem:[%s2880] sm:$0xf]
    %v2882 = vld [vmem:[%s2880 + $0x4] sm:$0xf]
    %v2883 = vld [vmem:[%s2880 + $0x8] sm:$0xf]
    %v2884 = vld [vmem:[%s2880 + $0xc] sm:$0xf]
    %s2885 = scalar_lea.vmem %s15, 1
    %v2886 = vld [vmem:[%s2885] sm:$0x1]
    %v2888 = vlaneseq
    %v2889 = vshrl.u32 %v2888, 7
    %v2890 = vsub.s32 0, %v2889
    %v2891 = vrot.slane %v2886, %v2890
    %v2897 = vunpack.c.l.b16 %v2881
    %v2898 = vunpack.c.l.b16 %v2882
    %v2899 = vunpack.c.l.b16 %v2883
    %v2900 = vunpack.c.l.b16 %v2884
    %v2901 = vpack.c.b16 %v2898, %v2897
    %v2902 = vpack.c.b16 %v2900, %v2899
    %v2906 = vsel %vm357, %v2879, 0
    %2908 = vmatprep.subr.bf16.mxu0 0
    %2909 = vmatpush1.bf16.msra.mxu0 %v2901
    %2910 = vmatprep.subr.bf16.mxu0 0
    %2911 = vmatpush1.bf16.msra.mxu0 %v2902
    %2912 = vmatprep.subr.bf16.mxu0 0
    %2913 = vmatpush1.bf16.msra.mxu0 0
    %2914 = vmatprep.subr.bf16.mxu0 0
    %2915 = vmatpush1.bf16.msra.mxu0 0
    %2916 = vmatprep.subr.bf16.mxu0 0
    %2917 = vmatpush1.bf16.msra.mxu0 0
    %2918 = vmatprep.subr.bf16.mxu0 0
    %2919 = vmatpush1.bf16.msra.mxu0 0
    %2920 = vmatprep.subr.bf16.mxu0 0
    %2921 = vmatpush1.bf16.msra.mxu0 0
    %2922 = vmatprep.subr.bf16.mxu0 0
    %2923 = vmatpush1.bf16.msra.mxu0 0
    %2924 = vmatprep.subr.bf16.mxu0 0
    %2925 = vmatpush1.bf16.msra.mxu0 0
    %2926 = vmatprep.subr.bf16.mxu0 0
    %2927 = vmatpush1.bf16.msra.mxu0 0
    %2928 = vmatprep.subr.bf16.mxu0 0
    %2929 = vmatpush1.bf16.msra.mxu0 0
    %2930 = vmatprep.subr.bf16.mxu0 0
    %2931 = vmatpush1.bf16.msra.mxu0 0
    %2932 = vmatprep.subr.bf16.mxu0 0
    %2933 = vmatpush1.bf16.msra.mxu0 0
    %2934 = vmatprep.subr.bf16.mxu0 0
    %2935 = vmatpush1.bf16.msra.mxu0 0
    %2936 = vmatprep.subr.bf16.mxu0 0
    %2937 = vmatpush1.bf16.msra.mxu0 0
    %2938 = vmatprep.subr.bf16.mxu0 0
    %2939 = vmatpush1.bf16.msra.mxu0 0
    %2940 = vmatprep.mubr.bf16.mxu0 0
    %2941 = vmatmul.mubr.bf16.gmra.mrb[0].mxu0 %v2906
    %v2942 = vpop.f32.mrb[0].mxu0
    %v2943 = vadd.f32 %v2891, %v2942
    %v2944 = vpop.f32.mrb[0].mxu0
    %v2945 = vpop.f32.mrb[0].mxu0
    %v2946 = vadd.f32 %v2891, %v2945
    %v2947 = vpop.f32.mrb[0].mxu0
    %2948 = vdwg.mxu0
    %v2949 = vmul.f32 %v2943, %v2943
    %v2950 = vmul.f32 %v2946, %v2946
    %v2951 = vmul.f32 %v2943, %v2949
    %v2952 = vmul.f32 %v2946, %v2950
    %v2953 = vmul.f32 %v2951, 0.044715
    %v2954 = vmul.f32 %v2952, 0.044715
    %v2955 = vadd.f32 %v2943, %v2953
    %v2956 = vadd.f32 %v2946, %v2954
    %v2957 = vmul.f32 %v2955, 0.7978846
    %v2958 = vmul.f32 %v2956, 0.7978846
    %v2959 = vtanh.pop %v2957
    %v2960 = vtanh.pop %v2958
    %v2961 = vadd.f32 %v2959, 1.0
    %v2962 = vadd.f32 %v2960, 1.0
    %v2963 = vmul.f32 %v2961, 0.5
    %v2964 = vmul.f32 %v2962, 0.5
    %v2965 = vmul.f32 %v2943, %v2963
    %v2966 = vmul.f32 %v2946, %v2964
    %v2967 = vpack.c.bf16 %v2966, %v2965
    %s2968 = scalar_lea.vmem %s16, 32
    %v2969 = vld [vmem:[%s2968] sm:$0xf]
    %v2970 = vld [vmem:[%s2968 + $0x4] sm:$0xf]
    %v2971 = vld [vmem:[%s2968 + $0x8] sm:$0xf]
    %v2972 = vld [vmem:[%s2968 + $0xc] sm:$0xf]
    %v2973 = vld [vmem:[%s2968 + $0x10] sm:$0xf]
    %v2974 = vld [vmem:[%s2968 + $0x14] sm:$0xf]
    %v2975 = vld [vmem:[%s2968 + $0x18] sm:$0xf]
    %v2976 = vld [vmem:[%s2968 + $0x1c] sm:$0xf]
    %v2985 = vunpack.c.l.b16 %v2969
    %v2986 = vunpack.c.l.b16 %v2970
    %v2987 = vunpack.c.l.b16 %v2971
    %v2988 = vunpack.c.l.b16 %v2972
    %v2989 = vunpack.c.l.b16 %v2973
    %v2990 = vunpack.c.l.b16 %v2974
    %v2991 = vunpack.c.l.b16 %v2975
    %v2992 = vunpack.c.l.b16 %v2976
    %v2993 = vpack.c.b16 %v2986, %v2985
    %v2994 = vpack.c.b16 %v2988, %v2987
    %v2995 = vpack.c.b16 %v2990, %v2989
    %v2996 = vpack.c.b16 %v2992, %v2991
    %v3002 = vsel %vm1649, %v2967, 0
    %3004 = vmatprep.subr.bf16.mxu0 0
    %3005 = vmatpush1.bf16.msra.mxu0 %v2993
    %3006 = vmatprep.subr.bf16.mxu0 0
    %3007 = vmatpush1.bf16.msra.mxu0 %v2994
    %3008 = vmatprep.subr.bf16.mxu0 0
    %3009 = vmatpush1.bf16.msra.mxu0 %v2995
    %3010 = vmatprep.subr.bf16.mxu0 0
    %3011 = vmatpush1.bf16.msra.mxu0 %v2996
    %3012 = vmatprep.subr.bf16.mxu0 0
    %3013 = vmatpush1.bf16.msra.mxu0 0
    %3014 = vmatprep.subr.bf16.mxu0 0
    %3015 = vmatpush1.bf16.msra.mxu0 0
    %3016 = vmatprep.subr.bf16.mxu0 0
    %3017 = vmatpush1.bf16.msra.mxu0 0
    %3018 = vmatprep.subr.bf16.mxu0 0
    %3019 = vmatpush1.bf16.msra.mxu0 0
    %3020 = vmatprep.subr.bf16.mxu0 0
    %3021 = vmatpush1.bf16.msra.mxu0 0
    %3022 = vmatprep.subr.bf16.mxu0 0
    %3023 = vmatpush1.bf16.msra.mxu0 0
    %3024 = vmatprep.subr.bf16.mxu0 0
    %3025 = vmatpush1.bf16.msra.mxu0 0
    %3026 = vmatprep.subr.bf16.mxu0 0
    %3027 = vmatpush1.bf16.msra.mxu0 0
    %3028 = vmatprep.subr.bf16.mxu0 0
    %3029 = vmatpush1.bf16.msra.mxu0 0
    %3030 = vmatprep.subr.bf16.mxu0 0
    %3031 = vmatpush1.bf16.msra.mxu0 0
    %3032 = vmatprep.subr.bf16.mxu0 0
    %3033 = vmatpush1.bf16.msra.mxu0 0
    %3034 = vmatprep.subr.bf16.mxu0 0
    %3035 = vmatpush1.bf16.msra.mxu0 0
    %3036 = vmatprep.mubr.bf16.mxu0 0
    %3037 = vmatmul.mubr.bf16.gmra.mrb[0].mxu0 %v3002
    %v3038 = vpop.f32.mrb[0].mxu0
    %v3039 = vadd.f32 0.0, %v3038
    %v3040 = vpop.f32.mrb[0].mxu0
    %v3041 = vpop.f32.mrb[0].mxu0
    %v3042 = vadd.f32 0.0, %v3041
    %v3043 = vpop.f32.mrb[0].mxu0
    %3044 = vdwg.mxu0
    %v3045 = vadd.f32 %v2837, %v3039
    %v3046 = vadd.f32 %v2838, %v3042
    %s3047 = scalar_lea.vmem %s17, 1
    %v3048 = vld [vmem:[%s3047] sm:$0x1]
    %v3050 = vlaneseq
    %v3051 = vshrl.u32 %v3050, 7
    %v3052 = vsub.s32 0, %v3051
    %v3053 = vrot.slane %v3048, %v3052
    %v3055 = vadd.f32 %v3045, %v3053
    %v3056 = vadd.f32 %v3046, %v3053
    %v3057 = vld [vmem:[%s18] sm:$0x3]
    %v3058 = vsel %vm357, %v3055, 0.0
    %3059 = vadd.xlane.f32.xlu0 %v3058
    %v3060 = vpop.xlane.xlu0 %3059
    %v3061 = vsel %vm357, %v3056, 0.0
    %3062 = vadd.xlane.f32.xlu0 %v3061
    %v3063 = vpop.xlane.xlu0 %3062
    %v3064 = vmul.f32 %v3060, %v364
    %v3065 = vmul.f32 %v3063, %v364
    %v3066 = vsub.f32 %v3055, %v3064
    %v3067 = vsub.f32 %v3056, %v3065
    %v3068 = vmul.f32 %v3066, %v3066
    %v3069 = vmul.f32 %v3067, %v3067
    %v3070 = vsel %vm357, %v3068, 0.0
    %3071 = vadd.xlane.f32.xlu0 %v3070
    %v3072 = vpop.xlane.xlu0 %3071
    %v3073 = vsel %vm357, %v3069, 0.0
    %3074 = vadd.xlane.f32.xlu0 %v3073
    %v3075 = vpop.xlane.xlu0 %3074
    %v3076 = vmul.f32 %v3072, %v364
    %v3077 = vmul.f32 %v3075, %v364
    %v3078 = vadd.f32 %v3076, 1e-05
    %v3079 = vadd.f32 %v3077, 1e-05
    %v3080 = vrsqrt.pop %v3078
    %v3081 = vrsqrt.pop %v3079
    %v3082 = vmul.f32 %v3066, %v3080
    %v3083 = vmul.f32 %v3067, %v3081
    %v3084 = vlaneseq
    %v3085 = vshrl.u32 %v3084, 7
    %v3086 = vsub.s32 0, %v3085
    %v3087 = vrot.slane %v3057, %v3086
    %v3088 = vmul.f32 %v3082, %v3087
    %v3089 = vmul.f32 %v3083, %v3087
    %v3090 = vlaneseq
    %v3091 = vshrl.u32 %v3090, 7
    %v3092 = vsub.s32 1, %v3091
    %v3093 = vrot.slane %v3057, %v3092
    %v3094 = vadd.f32 %v3088, %v3093
    %v3095 = vadd.f32 %v3089, %v3093
    %v3096 = vpack.c.bf16 %v3095, %v3094
    %v3097 = vld [vmem:[%s19] sm:$0xf]
    %v3098 = vld [vmem:[%s19 + $0x4] sm:$0xf]
    %v3099 = vld [vmem:[%s19 + $0x8] sm:$0xf]
    %v3100 = vld [vmem:[%s19 + $0xc] sm:$0xf]
    %v3101 = vld [vmem:[%s20] sm:$0x1]
    %v3103 = vlaneseq
    %v3104 = vshrl.u32 %v3103, 7
    %v3105 = vsub.s32 0, %v3104
    %v3106 = vrot.slane %v3101, %v3105
    %v3112 = vunpack.c.l.b16 %v3097
    %v3113 = vunpack.c.l.b16 %v3098
    %v3114 = vunpack.c.l.b16 %v3099
    %v3115 = vunpack.c.l.b16 %v3100
    %v3116 = vpack.c.b16 %v3113, %v3112
    %v3117 = vpack.c.b16 %v3115, %v3114
    %v3121 = vsel %vm357, %v3096, 0
    %3123 = vmatprep.subr.bf16.mxu0 0
    %3124 = vmatpush1.bf16.msra.mxu0 %v3116
    %3125 = vmatprep.subr.bf16.mxu0 0
    %3126 = vmatpush1.bf16.msra.mxu0 %v3117
    %3127 = vmatprep.subr.bf16.mxu0 0
    %3128 = vmatpush1.bf16.msra.mxu0 0
    %3129 = vmatprep.subr.bf16.mxu0 0
    %3130 = vmatpush1.bf16.msra.mxu0 0
    %3131 = vmatprep.subr.bf16.mxu0 0
    %3132 = vmatpush1.bf16.msra.mxu0 0
    %3133 = vmatprep.subr.bf16.mxu0 0
    %3134 = vmatpush1.bf16.msra.mxu0 0
    %3135 = vmatprep.subr.bf16.mxu0 0
    %3136 = vmatpush1.bf16.msra.mxu0 0
    %3137 = vmatprep.subr.bf16.mxu0 0
    %3138 = vmatpush1.bf16.msra.mxu0 0
    %3139 = vmatprep.subr.bf16.mxu0 0
    %3140 = vmatpush1.bf16.msra.mxu0 0
    %3141 = vmatprep.subr.bf16.mxu0 0
    %3142 = vmatpush1.bf16.msra.mxu0 0
    %3143 = vmatprep.subr.bf16.mxu0 0
    %3144 = vmatpush1.bf16.msra.mxu0 0
    %3145 = vmatprep.subr.bf16.mxu0 0
    %3146 = vmatpush1.bf16.msra.mxu0 0
    %3147 = vmatprep.subr.bf16.mxu0 0
    %3148 = vmatpush1.bf16.msra.mxu0 0
    %3149 = vmatprep.subr.bf16.mxu0 0
    %3150 = vmatpush1.bf16.msra.mxu0 0
    %3151 = vmatprep.subr.bf16.mxu0 0
    %3152 = vmatpush1.bf16.msra.mxu0 0
    %3153 = vmatprep.subr.bf16.mxu0 0
    %3154 = vmatpush1.bf16.msra.mxu0 0
    %3155 = vmatprep.mubr.bf16.mxu0 0
    %3156 = vmatmul.mubr.bf16.gmra.mrb[0].mxu0 %v3121
    %v3157 = vpop.f32.mrb[0].mxu0
    %v3158 = vadd.f32 %v3106, %v3157
    %v3159 = vpop.f32.mrb[0].mxu0
    %v3160 = vpop.f32.mrb[0].mxu0
    %v3161 = vadd.f32 %v3106, %v3160
    %v3162 = vpop.f32.mrb[0].mxu0
    %3163 = vdwg.mxu0
    %3164 = vst [vmem:[#allocation5] sm:$0xff] %v3158
    %3165 = vst [vmem:[#allocation5 + $0x8] sm:$0xff] %v3161
    %v3166 = vlaneseq
    %v3167 = vand.u32 %v3166, 127
    %vm3168 = vcmp.lt.s32.totalorder %v3167, 21
    %v3169 = vsel %vm3168, %v3158, -1e+30
    %v3170 = vsel %vm3168, %v3161, -1e+30
    %3171 = vmax.xlane.f32.xlu0 %v3169
    %v3172 = vpop.xlane.xlu0 %3171
    %3173 = vmax.xlane.f32.xlu0 %v3170
    %v3174 = vpop.xlane.xlu0 %3173
    %v3175 = vsub.f32 %v3169, %v3172
    %v3176 = vsub.f32 %v3170, %v3174
    %v3177 = vmul.f32 %v3175, 1.442695
    %v3178 = vpow.pop %v3177
    %v3179 = vmul.f32 %v3176, 1.442695
    %v3180 = vpow.pop %v3179
    %3181 = vadd.xlane.f32.xlu0 %v3178
    %v3182 = vpop.xlane.xlu0 %3181
    %3183 = vadd.xlane.f32.xlu0 %v3180
    %v3184 = vpop.xlane.xlu0 %3183
    %v3185 = vlog2.pop %v3182
    %v3186 = vmul.f32 %v3185, 0.6931472
    %v3187 = vlog2.pop %v3184
    %v3188 = vmul.f32 %v3187, 0.6931472
    %v3189 = vadd.f32 %v3186, %v3172
    %v3190 = vadd.f32 %v3188, %v3174
    %v3191 = vld [vmem:[%s4] sm:$0xff]
    %v3192 = vld [vmem:[%s4 + $0x8] sm:$0xff]
    %3193 = vset.pattern.permute.xlu0 0
    %3194 = vperm.xlu0 %3193, %v3191
    %v3195 = vpop.permute.xlu0 %3194
    %3196 = vset.pattern.permute.xlu0 0
    %3197 = vperm.xlu0 %3196, %v3192
    %v3198 = vpop.permute.xlu0 %3197
    %vm3199 = vcmp.eq.s32.totalorder %v3167, %v3195
    %vm3200 = vcmp.eq.s32.totalorder %v3167, %v3198
    %v3201 = vsel %vm3199, 1, 0
    %v3202 = vsel %vm3200, 1, 0
    %v3203 = vcvt.s32.f32 %v3201
    %v3204 = vcvt.s32.f32 %v3202
    %v3205 = vmul.f32 %v3158, %v3203
    %v3206 = vmul.f32 %v3161, %v3204
    %3207 = vadd.xlane.f32.xlu0 %v3205
    %v3208 = vpop.xlane.xlu0 %3207
    %3209 = vadd.xlane.f32.xlu0 %v3206
    %v3210 = vpop.xlane.xlu0 %3209
    %v3211 = vsub.f32 %v3189, %v3208
    %v3212 = vsub.f32 %v3190, %v3210
    %v3213 = vld [vmem:[%s5] sm:$0xff]
    %v3214 = vld [vmem:[%s5 + $0x8] sm:$0xff]
    %v3215 = vmul.f32 %v3211, %v3213
    %v3216 = vmul.f32 %v3212, %v3214
    %vm3217 = vcmask 7168
    %v3218 = vsel %vm3217, %v3215, 0.0
    %v3219 = vsel %vm3217, %v3216, 0.0
    %v3220 = vadd.f32 %v3218, %v3219
    %v3221 = vrot.slane %v3220, 4
    %v3222 = vadd.f32 %v3220, %v3221
    %v3223 = vrot.slane %v3222, 2
    %v3224 = vadd.f32 %v3222, %v3223
    %v3225 = vrot.slane %v3224, 1
    %v3226 = vadd.f32 %v3224, %v3225
    %vm3227 = vcmask 0
    %3228 = vst.msk [vmem:[#allocation6] sm:$0x1] %vm3227, %v3226
    // Predicated region
    $region94: #{atom_transformer_mlm_forward.1} parent=1 // pred_check
      _
    $region95: #{atom_transformer_mlm_forward.1} parent=1 // pred_check_branch
      %3230 = sbr.rel (0) target = $region97
    $region96: #{atom_transformer_mlm_forward.1} parent=1 // pred_region
      %s3232 = ssub.s32 256, 256
      %3233 = vsyncadd [#allocation3], %s3232
      %s3234 = sshll.u32 [#allocation5], 4
      %s3235 = int_to_ptr.vmem [resolvable:$true] %s3234
      %3240 = dma.vmem_to_hbm [thread:$0]  %s3235, 256, %s22, [#allocation3], 128, 128, 8
    $region97: #{atom_transformer_mlm_forward.1} parent=1 // pred_fallthru
      _
    // Predicated region
    $region98: #{atom_transformer_mlm_forward.1} parent=1 // pred_check
      _
    $region99: #{atom_transformer_mlm_forward.1} parent=1 // pred_check_branch
      %3242 = sbr.rel (0) target = $region101
    $region100: #{atom_transformer_mlm_forward.1} parent=1 // pred_region
      %s3244 = ssub.s32 16, 16
      %3245 = vsyncadd [#allocation7], %s3244
      %s3247 = sshll.u32 [#allocation6], 4
      %s3248 = int_to_ptr.vmem [resolvable:$true] %s3247
      %3250 = dma.vmem_to_hbm [thread:$0]  %s3248, 16, %s23, [#allocation7]
    $region101: #{atom_transformer_mlm_forward.1} parent=1 // pred_fallthru
      _
    // Predicated region
    $region102: #{atom_transformer_mlm_forward.1} parent=1 // pred_check
      _
    $region103: #{atom_transformer_mlm_forward.1} parent=1 // pred_check_branch
      %3252 = sbr.rel (0) target = $region105
    $region104: #{atom_transformer_mlm_forward.1} parent=1 // pred_region
      %3253 = dma.done [#allocation3], 256
    $region105: #{atom_transformer_mlm_forward.1} parent=1 // pred_fallthru
      _
    // Predicated region
    $region106: #{atom_transformer_mlm_forward.1} parent=1 // pred_check
      _
    $region107: #{atom_transformer_mlm_forward.1} parent=1 // pred_check_branch
      %3255 = sbr.rel (0) target = $region109
    $region108: #{atom_transformer_mlm_forward.1} parent=1 // pred_region
      %3256 = dma.done [#allocation7], 16
    $region109: #{atom_transformer_mlm_forward.1} parent=1 // pred_fallthru
      _
    %3257 = vsyncpa [#allocation3], 1
    %3258 = vsyncpa [#allocation7], 1
    %3259 = vsyncpa [#allocation4], 1

</llo_original>
